<compile_context>
chip_gen: v6e
topology: v6e:2x2x1
jax: 0.10.0
libtpu: 0.0.40
codegen_flags: <defaults>
</compile_context>

<pallas_src>
import functools

import jax
import jax.numpy as jnp
import numpy as np
from jax.experimental import pallas as pl
from jax.experimental.pallas import tpu as pltpu


def _block_kernel(x_ref,
                  gn_g_ref, gn_b_ref, gmat_ref,
                  wq_ref, bq_ref, wk_ref, bk_ref, wv_ref, bv_ref,
                  wo_ref, bo_ref, ln_g_ref, ln_b_ref,
                  wp_ref, bp_ref, wf_ref, bf_ref,
                  o_ref, *, num_heads, head_dim, eps):
    f32 = jnp.float32
    bf16 = jnp.bfloat16
    bblk, C, N = x_ref.shape
    d = head_dim
    C4 = wf_ref.shape[1]                       # 4 * C

    gn_g, gn_b = gn_g_ref[...], gn_b_ref[...]  # (C, 1) f32
    gmat = gmat_ref[...]                       # (C, C) group-averaging matrix, f32
    wq, bq = wq_ref[...], bq_ref[...]          # bf16 (hid, C), f32 (hid, 1) (pre-scaled)
    wk, bk = wk_ref[...], bk_ref[...]
    wv, bv = wv_ref[...], bv_ref[...]
    bo = bo_ref[...]                           # (C, 1) f32
    ln_g, ln_b = ln_g_ref[...], ln_b_ref[...]  # (C, 1) f32
    wp, bp = wp_ref[...], bp_ref[...]          # bf16 (8C, C), f32 (8C, 1)
    wf, bfin = wf_ref[...], bf_ref[...]        # bf16 (C, 4C), f32 (C, 1)

    # static loop over the samples packed into this grid step (batch blocking)
    for bb in range(bblk):
        x = x_ref[bb]                          # (C, N) f32, channel-major

        # ---- GroupNorm: single-pass stats in f32, group reduce via one matmul ----
        sx = jnp.sum(x, axis=1, keepdims=True)                 # (C, 1)
        sxx = jnp.sum(x * x, axis=1, keepdims=True)            # (C, 1)
        mean_c = jnp.dot(gmat, sx, preferred_element_type=f32)   # (C, 1) per-group mean
        ex2_c = jnp.dot(gmat, sxx, preferred_element_type=f32)   # (C, 1) per-group E[x^2]
        inv_c = jax.lax.rsqrt(ex2_c - mean_c * mean_c + eps)
        xn = (x - mean_c) * (inv_c * gn_g) + gn_b               # (C, N) f32
        xn_b = xn.astype(bf16)

        # ---- q / k / v projections (1x1 conv == GEMM); scale folded into wq/wk ----
        q = jnp.dot(wq, xn_b, preferred_element_type=f32) + bq  # (hid, N) f32
        k = jnp.dot(wk, xn_b, preferred_element_type=f32) + bk
        v = jnp.dot(wv, xn_b, preferred_element_type=f32) + bv

        # ---- attention: per-head, tile-aligned row slices, to_out accumulated ----
        y1 = x + bo                                              # residual + to_out bias
        for h in range(num_heads):                               # static tiny loop
            r0, r1 = h * d, (h + 1) * d                          # multiples of 8
            qh = q[r0:r1, :].astype(bf16)                        # (d, N)
            kh = k[r0:r1, :].astype(bf16)
            vh = v[r0:r1, :].astype(bf16)
            # s[i, j] = sum_d qh[d, i] * kh[d, j]
            s = jax.lax.dot_general(qh, kh, (((0,), (0,)), ((), ())),
                                    preferred_element_type=f32)  # (N, N) f32
            s = s - jnp.max(s, axis=-1, keepdims=True)
            p = jnp.exp(s)
            l = jnp.sum(p, axis=-1, keepdims=True)
            p = (p * pl.reciprocal(l, approx=True)).astype(bf16)
            # oh[d, i] = sum_j p[i, j] * vh[d, j]
            oh = jax.lax.dot_general(vh, p, (((1,), (1,)), ((), ())),
                                     preferred_element_type=f32)  # (d, N) f32
            y1 = y1 + jnp.dot(wo_ref[h], oh.astype(bf16),
                              preferred_element_type=f32)         # (C, N)

        # ---- GEGLU: per-token LayerNorm over channels + GLU with gelu gate ----
        mu = jnp.mean(y1, axis=0, keepdims=True)                 # (1, N)
        dv = y1 - mu
        var = jnp.mean(dv * dv, axis=0, keepdims=True)           # (1, N)
        z = dv * jax.lax.rsqrt(var + eps) * ln_g + ln_b          # (C, N)
        pj = jnp.dot(wp, z.astype(bf16), preferred_element_type=f32) + bp  # (8C, N)
        a, gate = pj[:C4, :], pj[C4:, :]                         # aligned row slices
        # tanh-approx GELU (EUP) per the perf review; erf-exact differs by ~1e-3
        hff = a * jax.nn.gelu(gate, approximate=True)            # (4C, N)

        # ---- final 1x1 conv (4C -> C) + residual with y1 ----
        o = jnp.dot(wf, hff.astype(bf16), preferred_element_type=f32) + bfin
        o_ref[bb] = o + y1


def basic_transformer_block(x_nchw, params, *, num_heads, ch_per_head,
                            num_groups, batch_block=1):
    """x_nchw: (B, C, H, W) float32. Returns (B, C, H, W) float32."""
    B, C, H, W = x_nchw.shape
    N = H * W
    d = ch_per_head
    assert C % num_groups == 0 and B % batch_block == 0
    scale = float(ch_per_head) ** (-0.25)
    eps = 1e-5
    f32, bf16 = jnp.float32, jnp.bfloat16
    col = lambda a: jnp.asarray(a, f32).reshape(-1, 1)

    # group-averaging matrix: gmat[i, j] = 1/(Cg*N) if channel j in group(i)
    gid = np.repeat(np.arange(num_groups), C // num_groups)
    gmat = jnp.asarray((gid[:, None] == gid[None, :]).astype(np.float32)
                       / float((C // num_groups) * N))

    # pre-split to_out weight per head: (num_heads, C, d), bf16
    wo = params["wo"]
    wo_heads = jnp.stack([wo[:, h * d:(h + 1) * d] for h in range(num_heads)],
                         axis=0).astype(bf16)

    param_list = [
        col(params["gn_gamma"]), col(params["gn_beta"]), gmat,
        (params["wq"] * scale).astype(bf16), col(params["bq"] * scale),
        (params["wk"] * scale).astype(bf16), col(params["bk"] * scale),
        params["wv"].astype(bf16), col(params["bv"]),
        wo_heads, col(params["bo"]),
        col(params["ln_gamma"]), col(params["ln_beta"]),
        params["wp"].astype(bf16), col(params["bp"]),
        params["wf"].astype(bf16), col(params["bf"]),
    ]

    # free reshape (merges trailing spatial dims) -> channel-major (B, C, N)
    x_bcn = x_nchw.reshape(B, C, N)

    in_specs = [pl.BlockSpec((batch_block, C, N), lambda b: (b, 0, 0))]
    for p in param_list:
        in_specs.append(pl.BlockSpec(p.shape, lambda b, nd=p.ndim: (0,) * nd))

    kernel = functools.partial(_block_kernel, num_heads=num_heads,
                               head_dim=d, eps=eps)

    out_bcn = pl.pallas_call(
        kernel,
        grid=(B // batch_block,),
        in_specs=in_specs,
        out_specs=pl.BlockSpec((batch_block, C, N), lambda b: (b, 0, 0)),
        out_shape=jax.ShapeDtypeStruct((B, C, N), jnp.float32),
        compiler_params=pltpu.CompilerParams(
            dimension_semantics=("parallel",),      # megacore over batch on v7x
            vmem_limit_bytes=64 * 1024 * 1024),
    )(x_bcn, *param_list)

    return out_bcn.reshape(B, C, H, W)


def reference_block(x_nchw, params, *, num_heads, ch_per_head, num_groups):
    """Pure-JAX mirror of the PyTorch forward with the SAME precision policy as
    the kernel (bf16 GEMM operands, f32 accumulation / norm statistics), so the
    comparison tolerance stays tight.  The only un-mirrored approximations are
    pl.reciprocal(approx=True) and minor accumulation-order differences."""
    B, C, H, W = x_nchw.shape
    N = H * W
    d = ch_per_head
    hid = num_heads * d
    scale = float(d) ** (-0.25)
    eps = 1e-5
    f32, bf16 = jnp.float32, jnp.bfloat16

    x = x_nchw.reshape(B, C, N)
    # GroupNorm
    xg = x.reshape(B, num_groups, C // num_groups, N)
    mean = jnp.mean(xg, axis=(2, 3), keepdims=True)
    var = jnp.mean((xg - mean) ** 2, axis=(2, 3), keepdims=True)
    xn = ((xg - mean) * jax.lax.rsqrt(var + eps)).reshape(B, C, N)
    xn = xn * params["gn_gamma"].reshape(1, C, 1) + params["gn_beta"].reshape(1, C, 1)
    xn_b = xn.astype(bf16)

    def conv1x1(w, b, zin):
        return (jnp.einsum("oc,bcn->bon", w.astype(bf16), zin,
                           preferred_element_type=f32) + b.reshape(1, -1, 1))

    q = conv1x1(params["wq"] * scale, params["bq"] * scale, xn_b)
    k = conv1x1(params["wk"] * scale, params["bk"] * scale, xn_b)
    v = conv1x1(params["wv"], params["bv"], xn_b)

    qh = q.reshape(B, num_heads, d, N).astype(bf16)
    kh = k.reshape(B, num_heads, d, N).astype(bf16)
    vh = v.reshape(B, num_heads, d, N).astype(bf16)
    s = jnp.einsum("bhdi,bhdj->bhij", qh, kh, preferred_element_type=f32)
    s = s - jnp.max(s, axis=-1, keepdims=True)
    p = jnp.exp(s)
    p = (p / jnp.sum(p, axis=-1, keepdims=True)).astype(bf16)
    att = jnp.einsum("bhij,bhdj->bhdi", p, vh,
                     preferred_element_type=f32).reshape(B, hid, N)
    y1 = x + conv1x1(params["wo"], params["bo"], att.astype(bf16))

    # GEGLU
    mu = jnp.mean(y1, axis=1, keepdims=True)
    dv = y1 - mu
    var = jnp.mean(dv * dv, axis=1, keepdims=True)
    z = (dv * jax.lax.rsqrt(var + eps) * params["ln_gamma"].reshape(1, C, 1)
         + params["ln_beta"].reshape(1, C, 1))
    pj = conv1x1(params["wp"], params["bp"], z.astype(bf16))
    C4 = 4 * C
    a, gate = pj[:, :C4, :], pj[:, C4:, :]
    hff = a * jax.nn.gelu(gate, approximate=True)
    o = conv1x1(params["wf"], params["bf"], hff.astype(bf16))
    return (o + y1).reshape(B, C, H, W)


def make_params(key, C, num_heads, ch_per_head):
    """Raw module parameters, f32, PyTorch (out, in) orientation."""
    hid = num_heads * ch_per_head
    C4 = 4 * C
    ks = jax.random.split(key, 9)

    def w(k, fan_in, shape):
        return jax.random.normal(k, shape, jnp.float32) / np.sqrt(fan_in)

    return {
        "gn_gamma": jnp.ones((C,), jnp.float32),
        "gn_beta": jnp.zeros((C,), jnp.float32),
        "wq": w(ks[0], C, (hid, C)), "bq": w(ks[1], C, (hid,)),
        "wk": w(ks[2], C, (hid, C)), "bk": w(ks[3], C, (hid,)),
        "wv": w(ks[4], C, (hid, C)), "bv": w(ks[5], C, (hid,)),
        # to_out is zero_module() in PyTorch; random weight here (see NOTE above)
        "wo": w(ks[6], hid, (C, hid)), "bo": jnp.zeros((C,), jnp.float32),
        "ln_gamma": jnp.ones((C,), jnp.float32),
        "ln_beta": jnp.zeros((C,), jnp.float32),
        "wp": w(ks[7], C, (2 * C4, C)), "bp": jnp.zeros((2 * C4,), jnp.float32),
        "wf": w(ks[8], C4, (C, C4)), "bf": jnp.zeros((C,), jnp.float32),
    }


if __name__ == "__main__":
    # Small config: B=2, in_channels=32, 16x16 spatial (N=256 tokens on the lane
    # axis), 2 heads x 16 ch/head, GroupNorm with 4 groups.
    B, C, H, W = 2, 32, 16, 16
    num_heads, ch_per_head, num_groups = 2, 16, 4

    key = jax.random.PRNGKey(0)
    kx, kp = jax.random.split(key)
    x = jax.random.normal(kx, (B, C, H, W), jnp.float32)
    params = make_params(kp, C, num_heads, ch_per_head)

    # batch_block=1 keeps the parallel batch grid (both v7x TCs busy at B=2);
    # on single-TC chips (v5e/v6e) batch_block=B amortizes per-step overhead.
    out = basic_transformer_block(
        x, params, num_heads=num_heads, ch_per_head=ch_per_head,
        num_groups=num_groups, batch_block=1)
    out = jax.block_until_ready(out)

    ref = reference_block(
        x, params, num_heads=num_heads, ch_per_head=ch_per_head,
        num_groups=num_groups)
    ref = jax.block_until_ready(ref)

    assert out.shape == (B, C, H, W)
    # tolerance covers the EUP approximate reciprocal in the softmax and f32
    # accumulation-order differences; everything else is bit-mirrored.
    np.testing.assert_allclose(np.asarray(out), np.asarray(ref),
                               rtol=1e-2, atol=1e-2)
    print("KERNEL_OK")
</pallas_src>

<mosaic_0001>
module attributes {stable_mosaic.version = 11 : i64} {
  func.func @_block_kernel(%arg0: i32, %arg1: memref<1x32x256xf32, #tpu.memory_space<vmem>>, %arg2: memref<32x1xf32, #tpu.memory_space<vmem>>, %arg3: memref<32x1xf32, #tpu.memory_space<vmem>>, %arg4: memref<32x32xf32, #tpu.memory_space<vmem>>, %arg5: memref<32x32xbf16, #tpu.memory_space<vmem>>, %arg6: memref<32x1xf32, #tpu.memory_space<vmem>>, %arg7: memref<32x32xbf16, #tpu.memory_space<vmem>>, %arg8: memref<32x1xf32, #tpu.memory_space<vmem>>, %arg9: memref<32x32xbf16, #tpu.memory_space<vmem>>, %arg10: memref<32x1xf32, #tpu.memory_space<vmem>>, %arg11: memref<2x32x16xbf16, #tpu.memory_space<vmem>>, %arg12: memref<32x1xf32, #tpu.memory_space<vmem>>, %arg13: memref<32x1xf32, #tpu.memory_space<vmem>>, %arg14: memref<32x1xf32, #tpu.memory_space<vmem>>, %arg15: memref<256x32xbf16, #tpu.memory_space<vmem>>, %arg16: memref<256x1xf32, #tpu.memory_space<vmem>>, %arg17: memref<32x128xbf16, #tpu.memory_space<vmem>>, %arg18: memref<32x1xf32, #tpu.memory_space<vmem>>, %arg19: memref<1x32x256xf32, #tpu.memory_space<vmem>>) attributes {dimension_semantics = [#tpu.dimension_semantics<parallel>], iteration_bounds = array<i64: 2>, scalar_prefetch = 0 : i64, scratch_operands = 0 : i64, tpu.core_type = #tpu.core_type<tc>, window_params = [{transform_indices = @transform_0, window_bounds = array<i64: 1, 32, 256>}, {pipeline_mode = #tpu.pipeline_mode<synchronous>, transform_indices = @transform_1, window_bounds = array<i64: 32, 1>}, {pipeline_mode = #tpu.pipeline_mode<synchronous>, transform_indices = @transform_2, window_bounds = array<i64: 32, 1>}, {pipeline_mode = #tpu.pipeline_mode<synchronous>, transform_indices = @transform_3, window_bounds = array<i64: 32, 32>}, {pipeline_mode = #tpu.pipeline_mode<synchronous>, transform_indices = @transform_4, window_bounds = array<i64: 32, 32>}, {pipeline_mode = #tpu.pipeline_mode<synchronous>, transform_indices = @transform_5, window_bounds = array<i64: 32, 1>}, {pipeline_mode = #tpu.pipeline_mode<synchronous>, transform_indices = @transform_6, window_bounds = array<i64: 32, 32>}, {pipeline_mode = #tpu.pipeline_mode<synchronous>, transform_indices = @transform_7, window_bounds = array<i64: 32, 1>}, {pipeline_mode = #tpu.pipeline_mode<synchronous>, transform_indices = @transform_8, window_bounds = array<i64: 32, 32>}, {pipeline_mode = #tpu.pipeline_mode<synchronous>, transform_indices = @transform_9, window_bounds = array<i64: 32, 1>}, {pipeline_mode = #tpu.pipeline_mode<synchronous>, transform_indices = @transform_10, window_bounds = array<i64: 2, 32, 16>}, {pipeline_mode = #tpu.pipeline_mode<synchronous>, transform_indices = @transform_11, window_bounds = array<i64: 32, 1>}, {pipeline_mode = #tpu.pipeline_mode<synchronous>, transform_indices = @transform_12, window_bounds = array<i64: 32, 1>}, {pipeline_mode = #tpu.pipeline_mode<synchronous>, transform_indices = @transform_13, window_bounds = array<i64: 32, 1>}, {pipeline_mode = #tpu.pipeline_mode<synchronous>, transform_indices = @transform_14, window_bounds = array<i64: 256, 32>}, {pipeline_mode = #tpu.pipeline_mode<synchronous>, transform_indices = @transform_15, window_bounds = array<i64: 256, 1>}, {pipeline_mode = #tpu.pipeline_mode<synchronous>, transform_indices = @transform_16, window_bounds = array<i64: 32, 128>}, {pipeline_mode = #tpu.pipeline_mode<synchronous>, transform_indices = @transform_17, window_bounds = array<i64: 32, 1>}, {transform_indices = @transform_18, window_bounds = array<i64: 1, 32, 256>}]} {
    %c0 = arith.constant 0 : index
    %c0_0 = arith.constant 0 : index
    %0 = vector.load %arg2[%c0, %c0_0] : memref<32x1xf32, #tpu.memory_space<vmem>>, vector<32x1xf32>
    %c0_1 = arith.constant 0 : index
    %c0_2 = arith.constant 0 : index
    %1 = vector.load %arg3[%c0_1, %c0_2] : memref<32x1xf32, #tpu.memory_space<vmem>>, vector<32x1xf32>
    %c0_3 = arith.constant 0 : index
    %c0_4 = arith.constant 0 : index
    %2 = vector.load %arg4[%c0_3, %c0_4] : memref<32x32xf32, #tpu.memory_space<vmem>>, vector<32x32xf32>
    %c0_5 = arith.constant 0 : index
    %c0_6 = arith.constant 0 : index
    %3 = vector.load %arg5[%c0_5, %c0_6] : memref<32x32xbf16, #tpu.memory_space<vmem>>, vector<32x32xbf16>
    %c0_7 = arith.constant 0 : index
    %c0_8 = arith.constant 0 : index
    %4 = vector.load %arg6[%c0_7, %c0_8] : memref<32x1xf32, #tpu.memory_space<vmem>>, vector<32x1xf32>
    %c0_9 = arith.constant 0 : index
    %c0_10 = arith.constant 0 : index
    %5 = vector.load %arg7[%c0_9, %c0_10] : memref<32x32xbf16, #tpu.memory_space<vmem>>, vector<32x32xbf16>
    %c0_11 = arith.constant 0 : index
    %c0_12 = arith.constant 0 : index
    %6 = vector.load %arg8[%c0_11, %c0_12] : memref<32x1xf32, #tpu.memory_space<vmem>>, vector<32x1xf32>
    %c0_13 = arith.constant 0 : index
    %c0_14 = arith.constant 0 : index
    %7 = vector.load %arg9[%c0_13, %c0_14] : memref<32x32xbf16, #tpu.memory_space<vmem>>, vector<32x32xbf16>
    %c0_15 = arith.constant 0 : index
    %c0_16 = arith.constant 0 : index
    %8 = vector.load %arg10[%c0_15, %c0_16] : memref<32x1xf32, #tpu.memory_space<vmem>>, vector<32x1xf32>
    %c0_17 = arith.constant 0 : index
    %c0_18 = arith.constant 0 : index
    %9 = vector.load %arg12[%c0_17, %c0_18] : memref<32x1xf32, #tpu.memory_space<vmem>>, vector<32x1xf32>
    %c0_19 = arith.constant 0 : index
    %c0_20 = arith.constant 0 : index
    %10 = vector.load %arg13[%c0_19, %c0_20] : memref<32x1xf32, #tpu.memory_space<vmem>>, vector<32x1xf32>
    %c0_21 = arith.constant 0 : index
    %c0_22 = arith.constant 0 : index
    %11 = vector.load %arg14[%c0_21, %c0_22] : memref<32x1xf32, #tpu.memory_space<vmem>>, vector<32x1xf32>
    %c0_23 = arith.constant 0 : index
    %c0_24 = arith.constant 0 : index
    %12 = vector.load %arg15[%c0_23, %c0_24] : memref<256x32xbf16, #tpu.memory_space<vmem>>, vector<256x32xbf16>
    %c0_25 = arith.constant 0 : index
    %c0_26 = arith.constant 0 : index
    %13 = vector.load %arg16[%c0_25, %c0_26] : memref<256x1xf32, #tpu.memory_space<vmem>>, vector<256x1xf32>
    %c0_27 = arith.constant 0 : index
    %c0_28 = arith.constant 0 : index
    %14 = vector.load %arg17[%c0_27, %c0_28] : memref<32x128xbf16, #tpu.memory_space<vmem>>, vector<32x128xbf16>
    %c0_29 = arith.constant 0 : index
    %c0_30 = arith.constant 0 : index
    %15 = vector.load %arg18[%c0_29, %c0_30] : memref<32x1xf32, #tpu.memory_space<vmem>>, vector<32x1xf32>
    %c0_31 = arith.constant 0 : index
    %c0_32 = arith.constant 0 : index
    %c0_33 = arith.constant 0 : index
    %16 = vector.load %arg1[%c0_31, %c0_32, %c0_33] : memref<1x32x256xf32, #tpu.memory_space<vmem>>, vector<1x32x256xf32>
    %17 = vector.shape_cast %16 : vector<1x32x256xf32> to vector<32x256xf32>
    %cst = arith.constant dense<0.000000e+00> : vector<32xf32>
    %18 = vector.multi_reduction <add>, %17, %cst [1] : vector<32x256xf32> to vector<32xf32>
    %19 = vector.shape_cast %18 : vector<32xf32> to vector<32x1xf32>
    %20 = arith.mulf %17, %17 : vector<32x256xf32>
    %cst_34 = arith.constant dense<0.000000e+00> : vector<32xf32>
    %21 = vector.multi_reduction <add>, %20, %cst_34 [1] : vector<32x256xf32> to vector<32xf32>
    %22 = vector.shape_cast %21 : vector<32xf32> to vector<32x1xf32>
    %cst_35 = arith.constant dense<0.000000e+00> : vector<32x1xf32>
    %23 = tpu.matmul %2, %19, %cst_35 {dimension_numbers = #tpu.dot_dimension_numbers<[1], [0], [0], [1], [0, 0, 1, 1], [], []>} : vector<32x32xf32>, vector<32x1xf32>, vector<32x1xf32> -> vector<32x1xf32>
    %cst_36 = arith.constant dense<0.000000e+00> : vector<32x1xf32>
    %24 = tpu.matmul %2, %22, %cst_36 {dimension_numbers = #tpu.dot_dimension_numbers<[1], [0], [0], [1], [0, 0, 1, 1], [], []>} : vector<32x32xf32>, vector<32x1xf32>, vector<32x1xf32> -> vector<32x1xf32>
    %25 = arith.mulf %23, %23 : vector<32x1xf32>
    %26 = arith.subf %24, %25 : vector<32x1xf32>
    %cst_37 = arith.constant 9.99999974E-6 : f32
    %27 = vector.broadcast %cst_37 : f32 to vector<32x1xf32>
    %28 = arith.addf %26, %27 : vector<32x1xf32>
    %29 = math.rsqrt %28 : vector<32x1xf32>
    %30 = vector.broadcast %23 : vector<32x1xf32> to vector<32x256xf32>
    %31 = arith.subf %17, %30 : vector<32x256xf32>
    %32 = arith.mulf %29, %0 : vector<32x1xf32>
    %33 = vector.broadcast %32 : vector<32x1xf32> to vector<32x256xf32>
    %34 = arith.mulf %31, %33 : vector<32x256xf32>
    %35 = vector.broadcast %1 : vector<32x1xf32> to vector<32x256xf32>
    %36 = arith.addf %34, %35 : vector<32x256xf32>
    %37 = arith.truncf %36 : vector<32x256xf32> to vector<32x256xbf16>
    %cst_38 = arith.constant dense<0.000000e+00> : vector<32x256xf32>
    %38 = tpu.matmul %3, %37, %cst_38 {dimension_numbers = #tpu.dot_dimension_numbers<[1], [0], [0], [1], [0, 0, 1, 1], [], []>} : vector<32x32xbf16>, vector<32x256xbf16>, vector<32x256xf32> -> vector<32x256xf32>
    %39 = vector.broadcast %4 : vector<32x1xf32> to vector<32x256xf32>
    %40 = arith.addf %38, %39 : vector<32x256xf32>
    %cst_39 = arith.constant dense<0.000000e+00> : vector<32x256xf32>
    %41 = tpu.matmul %5, %37, %cst_39 {dimension_numbers = #tpu.dot_dimension_numbers<[1], [0], [0], [1], [0, 0, 1, 1], [], []>} : vector<32x32xbf16>, vector<32x256xbf16>, vector<32x256xf32> -> vector<32x256xf32>
    %42 = vector.broadcast %6 : vector<32x1xf32> to vector<32x256xf32>
    %43 = arith.addf %41, %42 : vector<32x256xf32>
    %cst_40 = arith.constant dense<0.000000e+00> : vector<32x256xf32>
    %44 = tpu.matmul %7, %37, %cst_40 {dimension_numbers = #tpu.dot_dimension_numbers<[1], [0], [0], [1], [0, 0, 1, 1], [], []>} : vector<32x32xbf16>, vector<32x256xbf16>, vector<32x256xf32> -> vector<32x256xf32>
    %45 = vector.broadcast %8 : vector<32x1xf32> to vector<32x256xf32>
    %46 = arith.addf %44, %45 : vector<32x256xf32>
    %47 = vector.broadcast %9 : vector<32x1xf32> to vector<32x256xf32>
    %48 = arith.addf %17, %47 : vector<32x256xf32>
    %49 = vector.extract_strided_slice %40 {offsets = [0, 0], sizes = [16, 256], strides = [1, 1]} : vector<32x256xf32> to vector<16x256xf32>
    %50 = arith.truncf %49 : vector<16x256xf32> to vector<16x256xbf16>
    %51 = vector.extract_strided_slice %43 {offsets = [0, 0], sizes = [16, 256], strides = [1, 1]} : vector<32x256xf32> to vector<16x256xf32>
    %52 = arith.truncf %51 : vector<16x256xf32> to vector<16x256xbf16>
    %53 = vector.extract_strided_slice %46 {offsets = [0, 0], sizes = [16, 256], strides = [1, 1]} : vector<32x256xf32> to vector<16x256xf32>
    %54 = arith.truncf %53 : vector<16x256xf32> to vector<16x256xbf16>
    %cst_41 = arith.constant dense<0.000000e+00> : vector<256x256xf32>
    %55 = tpu.matmul %50, %52, %cst_41 {dimension_numbers = #tpu.dot_dimension_numbers<[0], [0], [1], [1], [0, 1, 1, 1], [], []>} : vector<16x256xbf16>, vector<16x256xbf16>, vector<256x256xf32> -> vector<256x256xf32>
    %cst_42 = arith.constant dense<0xFF800000> : vector<256xf32>
    %56 = vector.multi_reduction <maximumf>, %55, %cst_42 [1] : vector<256x256xf32> to vector<256xf32>
    %57 = vector.shape_cast %56 : vector<256xf32> to vector<256x1xf32>
    %58 = vector.broadcast %57 : vector<256x1xf32> to vector<256x256xf32>
    %59 = arith.subf %55, %58 : vector<256x256xf32>
    %60 = math.exp %59 : vector<256x256xf32>
    %cst_43 = arith.constant dense<0.000000e+00> : vector<256xf32>
    %61 = vector.multi_reduction <add>, %60, %cst_43 [1] : vector<256x256xf32> to vector<256xf32>
    %62 = vector.shape_cast %61 : vector<256xf32> to vector<256x1xf32>
    %63 = tpu.reciprocal %62 {approx = true} : vector<256x1xf32> -> vector<256x1xf32>
    %64 = vector.broadcast %63 : vector<256x1xf32> to vector<256x256xf32>
    %65 = arith.mulf %60, %64 : vector<256x256xf32>
    %66 = arith.truncf %65 : vector<256x256xf32> to vector<256x256xbf16>
    %cst_44 = arith.constant dense<0.000000e+00> : vector<16x256xf32>
    %67 = tpu.matmul %54, %66, %cst_44 {dimension_numbers = #tpu.dot_dimension_numbers<[1], [1], [0], [0], [0, 0, 1, 0], [], []>} : vector<16x256xbf16>, vector<256x256xbf16>, vector<16x256xf32> -> vector<16x256xf32>
    %c0_45 = arith.constant 0 : index
    %c0_46 = arith.constant 0 : index
    %c0_47 = arith.constant 0 : index
    %68 = vector.load %arg11[%c0_45, %c0_46, %c0_47] : memref<2x32x16xbf16, #tpu.memory_space<vmem>>, vector<1x32x16xbf16>
    %69 = vector.shape_cast %68 : vector<1x32x16xbf16> to vector<32x16xbf16>
    %70 = arith.truncf %67 : vector<16x256xf32> to vector<16x256xbf16>
    %cst_48 = arith.constant dense<0.000000e+00> : vector<32x256xf32>
    %71 = tpu.matmul %69, %70, %cst_48 {dimension_numbers = #tpu.dot_dimension_numbers<[1], [0], [0], [1], [0, 0, 1, 1], [], []>} : vector<32x16xbf16>, vector<16x256xbf16>, vector<32x256xf32> -> vector<32x256xf32>
    %72 = arith.addf %48, %71 : vector<32x256xf32>
    %73 = vector.extract_strided_slice %40 {offsets = [16, 0], sizes = [16, 256], strides = [1, 1]} : vector<32x256xf32> to vector<16x256xf32>
    %74 = arith.truncf %73 : vector<16x256xf32> to vector<16x256xbf16>
    %75 = vector.extract_strided_slice %43 {offsets = [16, 0], sizes = [16, 256], strides = [1, 1]} : vector<32x256xf32> to vector<16x256xf32>
    %76 = arith.truncf %75 : vector<16x256xf32> to vector<16x256xbf16>
    %77 = vector.extract_strided_slice %46 {offsets = [16, 0], sizes = [16, 256], strides = [1, 1]} : vector<32x256xf32> to vector<16x256xf32>
    %78 = arith.truncf %77 : vector<16x256xf32> to vector<16x256xbf16>
    %cst_49 = arith.constant dense<0.000000e+00> : vector<256x256xf32>
    %79 = tpu.matmul %74, %76, %cst_49 {dimension_numbers = #tpu.dot_dimension_numbers<[0], [0], [1], [1], [0, 1, 1, 1], [], []>} : vector<16x256xbf16>, vector<16x256xbf16>, vector<256x256xf32> -> vector<256x256xf32>
    %cst_50 = arith.constant dense<0xFF800000> : vector<256xf32>
    %80 = vector.multi_reduction <maximumf>, %79, %cst_50 [1] : vector<256x256xf32> to vector<256xf32>
    %81 = vector.shape_cast %80 : vector<256xf32> to vector<256x1xf32>
    %82 = vector.broadcast %81 : vector<256x1xf32> to vector<256x256xf32>
    %83 = arith.subf %79, %82 : vector<256x256xf32>
    %84 = math.exp %83 : vector<256x256xf32>
    %cst_51 = arith.constant dense<0.000000e+00> : vector<256xf32>
    %85 = vector.multi_reduction <add>, %84, %cst_51 [1] : vector<256x256xf32> to vector<256xf32>
    %86 = vector.shape_cast %85 : vector<256xf32> to vector<256x1xf32>
    %87 = tpu.reciprocal %86 {approx = true} : vector<256x1xf32> -> vector<256x1xf32>
    %88 = vector.broadcast %87 : vector<256x1xf32> to vector<256x256xf32>
    %89 = arith.mulf %84, %88 : vector<256x256xf32>
    %90 = arith.truncf %89 : vector<256x256xf32> to vector<256x256xbf16>
    %cst_52 = arith.constant dense<0.000000e+00> : vector<16x256xf32>
    %91 = tpu.matmul %78, %90, %cst_52 {dimension_numbers = #tpu.dot_dimension_numbers<[1], [1], [0], [0], [0, 0, 1, 0], [], []>} : vector<16x256xbf16>, vector<256x256xbf16>, vector<16x256xf32> -> vector<16x256xf32>
    %c1 = arith.constant 1 : index
    %c0_53 = arith.constant 0 : index
    %c0_54 = arith.constant 0 : index
    %92 = vector.load %arg11[%c1, %c0_53, %c0_54] : memref<2x32x16xbf16, #tpu.memory_space<vmem>>, vector<1x32x16xbf16>
    %93 = vector.shape_cast %92 : vector<1x32x16xbf16> to vector<32x16xbf16>
    %94 = arith.truncf %91 : vector<16x256xf32> to vector<16x256xbf16>
    %cst_55 = arith.constant dense<0.000000e+00> : vector<32x256xf32>
    %95 = tpu.matmul %93, %94, %cst_55 {dimension_numbers = #tpu.dot_dimension_numbers<[1], [0], [0], [1], [0, 0, 1, 1], [], []>} : vector<32x16xbf16>, vector<16x256xbf16>, vector<32x256xf32> -> vector<32x256xf32>
    %96 = arith.addf %72, %95 : vector<32x256xf32>
    %cst_56 = arith.constant dense<0.000000e+00> : vector<256xf32>
    %97 = vector.multi_reduction <add>, %96, %cst_56 [0] : vector<32x256xf32> to vector<256xf32>
    %98 = vector.shape_cast %97 : vector<256xf32> to vector<1x256xf32>
    %cst_57 = arith.constant 3.200000e+01 : f32
    %99 = vector.broadcast %cst_57 : f32 to vector<1x256xf32>
    %100 = arith.divf %98, %99 : vector<1x256xf32>
    %101 = vector.broadcast %100 : vector<1x256xf32> to vector<32x256xf32>
    %102 = arith.subf %96, %101 : vector<32x256xf32>
    %103 = arith.mulf %102, %102 : vector<32x256xf32>
    %cst_58 = arith.constant dense<0.000000e+00> : vector<256xf32>
    %104 = vector.multi_reduction <add>, %103, %cst_58 [0] : vector<32x256xf32> to vector<256xf32>
    %105 = vector.shape_cast %104 : vector<256xf32> to vector<1x256xf32>
    %cst_59 = arith.constant 3.200000e+01 : f32
    %106 = vector.broadcast %cst_59 : f32 to vector<1x256xf32>
    %107 = arith.divf %105, %106 : vector<1x256xf32>
    %cst_60 = arith.constant 9.99999974E-6 : f32
    %108 = vector.broadcast %cst_60 : f32 to vector<1x256xf32>
    %109 = arith.addf %107, %108 : vector<1x256xf32>
    %110 = math.rsqrt %109 : vector<1x256xf32>
    %111 = vector.broadcast %110 : vector<1x256xf32> to vector<32x256xf32>
    %112 = arith.mulf %102, %111 : vector<32x256xf32>
    %113 = vector.broadcast %10 : vector<32x1xf32> to vector<32x256xf32>
    %114 = arith.mulf %112, %113 : vector<32x256xf32>
    %115 = vector.broadcast %11 : vector<32x1xf32> to vector<32x256xf32>
    %116 = arith.addf %114, %115 : vector<32x256xf32>
    %117 = arith.truncf %116 : vector<32x256xf32> to vector<32x256xbf16>
    %cst_61 = arith.constant dense<0.000000e+00> : vector<256x256xf32>
    %118 = tpu.matmul %12, %117, %cst_61 {dimension_numbers = #tpu.dot_dimension_numbers<[1], [0], [0], [1], [0, 0, 1, 1], [], []>} : vector<256x32xbf16>, vector<32x256xbf16>, vector<256x256xf32> -> vector<256x256xf32>
    %119 = vector.broadcast %13 : vector<256x1xf32> to vector<256x256xf32>
    %120 = arith.addf %118, %119 : vector<256x256xf32>
    %121 = vector.extract_strided_slice %120 {offsets = [0, 0], sizes = [128, 256], strides = [1, 1]} : vector<256x256xf32> to vector<128x256xf32>
    %122 = vector.extract_strided_slice %120 {offsets = [128, 0], sizes = [128, 256], strides = [1, 1]} : vector<256x256xf32> to vector<128x256xf32>
    %123 = arith.mulf %122, %122 : vector<128x256xf32>
    %124 = arith.mulf %122, %123 : vector<128x256xf32>
    %cst_62 = arith.constant 4.471500e-02 : f32
    %125 = vector.broadcast %cst_62 : f32 to vector<128x256xf32>
    %126 = arith.mulf %125, %124 : vector<128x256xf32>
    %127 = arith.addf %122, %126 : vector<128x256xf32>
    %cst_63 = arith.constant 0.797884583 : f32
    %128 = vector.broadcast %cst_63 : f32 to vector<128x256xf32>
    %129 = arith.mulf %128, %127 : vector<128x256xf32>
    %130 = math.tanh %129 : vector<128x256xf32>
    %cst_64 = arith.constant 1.000000e+00 : f32
    %131 = vector.broadcast %cst_64 : f32 to vector<128x256xf32>
    %132 = arith.addf %131, %130 : vector<128x256xf32>
    %cst_65 = arith.constant 5.000000e-01 : f32
    %133 = vector.broadcast %cst_65 : f32 to vector<128x256xf32>
    %134 = arith.mulf %133, %132 : vector<128x256xf32>
    %135 = arith.mulf %122, %134 : vector<128x256xf32>
    %136 = arith.mulf %121, %135 : vector<128x256xf32>
    %137 = arith.truncf %136 : vector<128x256xf32> to vector<128x256xbf16>
    %cst_66 = arith.constant dense<0.000000e+00> : vector<32x256xf32>
    %138 = tpu.matmul %14, %137, %cst_66 {dimension_numbers = #tpu.dot_dimension_numbers<[1], [0], [0], [1], [0, 0, 1, 1], [], []>} : vector<32x128xbf16>, vector<128x256xbf16>, vector<32x256xf32> -> vector<32x256xf32>
    %139 = vector.broadcast %15 : vector<32x1xf32> to vector<32x256xf32>
    %140 = arith.addf %138, %139 : vector<32x256xf32>
    %141 = arith.addf %140, %96 : vector<32x256xf32>
    %c0_67 = arith.constant 0 : index
    %c0_68 = arith.constant 0 : index
    %c0_69 = arith.constant 0 : index
    %142 = vector.load %arg19[%c0_67, %c0_68, %c0_69] : memref<1x32x256xf32, #tpu.memory_space<vmem>>, vector<1x32x256xf32>
    %143 = vector.shape_cast %142 : vector<1x32x256xf32> to vector<32x256xf32>
    %144 = vector.shape_cast %141 : vector<32x256xf32> to vector<1x32x256xf32>
    tpu.vector_store %arg19[%c0_67, %c0_68, %c0_69], %144 {strides = array<i32>} : memref<1x32x256xf32, #tpu.memory_space<vmem>>, vector<1x32x256xf32>,
    return
  }
  func.func @transform_0(%arg0: i32) -> (i32, i32, i32) {
    %c0_i32 = arith.constant 0 : i32
    %c0_i32_0 = arith.constant 0 : i32
    %c0_i32_1 = arith.constant 0 : i32
    return %arg0, %c0_i32, %c0_i32_0 : i32, i32, i32
  }
  func.func @transform_1(%arg0: i32) -> (i32, i32) {
    %c0_i32 = arith.constant 0 : i32
    %c0_i32_0 = arith.constant 0 : i32
    %c0_i32_1 = arith.constant 0 : i32
    return %c0_i32, %c0_i32_0 : i32, i32
  }
  func.func @transform_2(%arg0: i32) -> (i32, i32) {
    %c0_i32 = arith.constant 0 : i32
    %c0_i32_0 = arith.constant 0 : i32
    %c0_i32_1 = arith.constant 0 : i32
    return %c0_i32, %c0_i32_0 : i32, i32
  }
  func.func @transform_3(%arg0: i32) -> (i32, i32) {
    %c0_i32 = arith.constant 0 : i32
    %c0_i32_0 = arith.constant 0 : i32
    %c0_i32_1 = arith.constant 0 : i32
    return %c0_i32, %c0_i32_0 : i32, i32
  }
  func.func @transform_4(%arg0: i32) -> (i32, i32) {
    %c0_i32 = arith.constant 0 : i32
    %c0_i32_0 = arith.constant 0 : i32
    %c0_i32_1 = arith.constant 0 : i32
    return %c0_i32, %c0_i32_0 : i32, i32
  }
  func.func @transform_5(%arg0: i32) -> (i32, i32) {
    %c0_i32 = arith.constant 0 : i32
    %c0_i32_0 = arith.constant 0 : i32
    %c0_i32_1 = arith.constant 0 : i32
    return %c0_i32, %c0_i32_0 : i32, i32
  }
  func.func @transform_6(%arg0: i32) -> (i32, i32) {
    %c0_i32 = arith.constant 0 : i32
    %c0_i32_0 = arith.constant 0 : i32
    %c0_i32_1 = arith.constant 0 : i32
    return %c0_i32, %c0_i32_0 : i32, i32
  }
  func.func @transform_7(%arg0: i32) -> (i32, i32) {
    %c0_i32 = arith.constant 0 : i32
    %c0_i32_0 = arith.constant 0 : i32
    %c0_i32_1 = arith.constant 0 : i32
    return %c0_i32, %c0_i32_0 : i32, i32
  }
  func.func @transform_8(%arg0: i32) -> (i32, i32) {
    %c0_i32 = arith.constant 0 : i32
    %c0_i32_0 = arith.constant 0 : i32
    %c0_i32_1 = arith.constant 0 : i32
    return %c0_i32, %c0_i32_0 : i32, i32
  }
  func.func @transform_9(%arg0: i32) -> (i32, i32) {
    %c0_i32 = arith.constant 0 : i32
    %c0_i32_0 = arith.constant 0 : i32
    %c0_i32_1 = arith.constant 0 : i32
    return %c0_i32, %c0_i32_0 : i32, i32
  }
  func.func @transform_10(%arg0: i32) -> (i32, i32, i32) {
    %c0_i32 = arith.constant 0 : i32
    %c0_i32_0 = arith.constant 0 : i32
    %c0_i32_1 = arith.constant 0 : i32
    %c0_i32_2 = arith.constant 0 : i32
    return %c0_i32, %c0_i32_0, %c0_i32_1 : i32, i32, i32
  }
  func.func @transform_11(%arg0: i32) -> (i32, i32) {
    %c0_i32 = arith.constant 0 : i32
    %c0_i32_0 = arith.constant 0 : i32
    %c0_i32_1 = arith.constant 0 : i32
    return %c0_i32, %c0_i32_0 : i32, i32
  }
  func.func @transform_12(%arg0: i32) -> (i32, i32) {
    %c0_i32 = arith.constant 0 : i32
    %c0_i32_0 = arith.constant 0 : i32
    %c0_i32_1 = arith.constant 0 : i32
    return %c0_i32, %c0_i32_0 : i32, i32
  }
  func.func @transform_13(%arg0: i32) -> (i32, i32) {
    %c0_i32 = arith.constant 0 : i32
    %c0_i32_0 = arith.constant 0 : i32
    %c0_i32_1 = arith.constant 0 : i32
    return %c0_i32, %c0_i32_0 : i32, i32
  }
  func.func @transform_14(%arg0: i32) -> (i32, i32) {
    %c0_i32 = arith.constant 0 : i32
    %c0_i32_0 = arith.constant 0 : i32
    %c0_i32_1 = arith.constant 0 : i32
    return %c0_i32, %c0_i32_0 : i32, i32
  }
  func.func @transform_15(%arg0: i32) -> (i32, i32) {
    %c0_i32 = arith.constant 0 : i32
    %c0_i32_0 = arith.constant 0 : i32
    %c0_i32_1 = arith.constant 0 : i32
    return %c0_i32, %c0_i32_0 : i32, i32
  }
  func.func @transform_16(%arg0: i32) -> (i32, i32) {
    %c0_i32 = arith.constant 0 : i32
    %c0_i32_0 = arith.constant 0 : i32
    %c0_i32_1 = arith.constant 0 : i32
    return %c0_i32, %c0_i32_0 : i32, i32
  }
  func.func @transform_17(%arg0: i32) -> (i32, i32) {
    %c0_i32 = arith.constant 0 : i32
    %c0_i32_0 = arith.constant 0 : i32
    %c0_i32_1 = arith.constant 0 : i32
    return %c0_i32, %c0_i32_0 : i32, i32
  }
  func.func @transform_18(%arg0: i32) -> (i32, i32, i32) {
    %c0_i32 = arith.constant 0 : i32
    %c0_i32_0 = arith.constant 0 : i32
    %c0_i32_1 = arith.constant 0 : i32
    return %arg0, %c0_i32, %c0_i32_0 : i32, i32, i32
  }
}

</mosaic_0001>

<llo_original>
// kernel: tpu_custom_call.1
$region0: #{tpu_custom_call.1}
  #allocation0 [shape = 'u32[]', space=smem, size = 0x4, offset = 0x4, fixed_abs, tag = 'smem constant byte address 0x4 - core index']
  #allocation1 [shape = 'u32[144,128]{1,0:T(1,128)}', space=vmem, size = 0x12000, scoped, tag = 'internal scratch']
  %s0 = inlined_call_operand.vmem [shape: f32[2,32,256], index: 0, kind: input, shape index: {}]
  %s1 = inlined_call_operand.vmem [shape: f32[32,1], index: 1, kind: input, shape index: {}]
  %s2 = inlined_call_operand.vmem [shape: f32[32,1], index: 2, kind: input, shape index: {}]
  %s3 = inlined_call_operand.vmem [shape: f32[32,32], index: 3, kind: input, shape index: {}]
  %s4 = inlined_call_operand.vmem [shape: bf16[32,32], index: 4, kind: input, shape index: {}]
  %s5 = inlined_call_operand.vmem [shape: f32[32,1], index: 5, kind: input, shape index: {}]
  %s6 = inlined_call_operand.vmem [shape: bf16[32,32], index: 6, kind: input, shape index: {}]
  %s7 = inlined_call_operand.vmem [shape: f32[32,1], index: 7, kind: input, shape index: {}]
  %s8 = inlined_call_operand.vmem [shape: bf16[32,32], index: 8, kind: input, shape index: {}]
  %s9 = inlined_call_operand.vmem [shape: f32[32,1], index: 9, kind: input, shape index: {}]
  %s10 = inlined_call_operand.vmem [shape: bf16[2,32,16], index: 10, kind: input, shape index: {}]
  %s11 = inlined_call_operand.vmem [shape: f32[32,1], index: 11, kind: input, shape index: {}]
  %s12 = inlined_call_operand.vmem [shape: f32[32,1], index: 12, kind: input, shape index: {}]
  %s13 = inlined_call_operand.vmem [shape: f32[32,1], index: 13, kind: input, shape index: {}]
  %s14 = inlined_call_operand.vmem [shape: bf16[256,32], index: 14, kind: input, shape index: {}]
  %s15 = inlined_call_operand.vmem [shape: f32[256,1], index: 15, kind: input, shape index: {}]
  %s16 = inlined_call_operand.vmem [shape: bf16[32,128], index: 16, kind: input, shape index: {}]
  %s17 = inlined_call_operand.vmem [shape: f32[32,1], index: 17, kind: input, shape index: {}]
  %s18 = inlined_call_operand.hbm [shape: f32[2,32,256], index: 18, kind: output, shape index: {}]
  %s19 = sld [smem:[#allocation0]]
  $region105: #{tpu_custom_call.1} parent=0
    _
  %s21 = ssub.s32 1, %s19
  %s22 = scalar_select 0, %s21, %s19
  $region1: #{tpu_custom_call.1} parent=0
    #allocation2 [shape = 'u8[65536]{0}', space=vmem, size = 0x10000, scoped, tag = 'output window, operand 0']
    #allocation3 [shape = 's32[2]{0}', space=sflag, size = 0x8, scoped, tag = 'scoped memory for tpu_custom_call.1']
    %23 = vsyncpa [#allocation3], 0
    %s24 = scalar_lea.sflag [#allocation3], 1
    %25 = vsyncpa %s24, 0
    loop: start=0, step=1, limit=4
    $region2: #{tpu_custom_call.1} parent=1 // loop_pre_header
      _
    $region3: #{tpu_custom_call.1} parent=1 // loop_header
      %s27 = sphi 0, %s31
      %p28 = scmp.ge.s32.totalorder %s27, 4
      %s37 = sphi 0, %s39
      %s40 = sphi 0, %s37
      %s41 = sphi 0, %s40
      %s57 = sphi 0, %s41
      %s61 = sphi 0, %s61
      %s63 = sphi 0, %s61
      %s64 = sphi 0, %s63
      %s78 = sphi 0, %s64
      %s82 = sphi 0, %s82
      %s84 = sphi 0, %s82
      %s85 = sphi 0, %s84
      %s99 = sphi 0, %s85
      %s103 = sphi 0, %s103
      %s105 = sphi 0, %s103
      %s106 = sphi 0, %s105
      %s120 = sphi 0, %s106
      %s124 = sphi 0, %s124
      %s126 = sphi 0, %s124
      %s127 = sphi 0, %s126
      %s141 = sphi 0, %s127
      %s145 = sphi 0, %s145
      %s147 = sphi 0, %s145
      %s148 = sphi 0, %s147
      %s162 = sphi 0, %s148
      %s166 = sphi 0, %s166
      %s168 = sphi 0, %s166
      %s169 = sphi 0, %s168
      %s183 = sphi 0, %s169
      %s187 = sphi 0, %s187
      %s189 = sphi 0, %s187
      %s190 = sphi 0, %s189
      %s204 = sphi 0, %s190
      %s208 = sphi 0, %s208
      %s210 = sphi 0, %s208
      %s211 = sphi 0, %s210
      %s225 = sphi 0, %s211
      %s229 = sphi 0, %s229
      %s231 = sphi 0, %s229
      %s232 = sphi 0, %s231
      %s246 = sphi 0, %s232
      %s250 = sphi 0, %s250
      %s252 = sphi 0, %s250
      %s253 = sphi 0, %s252
      %s267 = sphi 0, %s253
      %s271 = sphi 0, %s271
      %s273 = sphi 0, %s271
      %s274 = sphi 0, %s273
      %s288 = sphi 0, %s274
      %s292 = sphi 0, %s292
      %s294 = sphi 0, %s292
      %s295 = sphi 0, %s294
      %s309 = sphi 0, %s295
      %s313 = sphi 0, %s313
      %s315 = sphi 0, %s313
      %s316 = sphi 0, %s315
      %s330 = sphi 0, %s316
      %s334 = sphi 0, %s334
      %s336 = sphi 0, %s334
      %s337 = sphi 0, %s336
      %s351 = sphi 0, %s337
      %s355 = sphi 0, %s355
      %s357 = sphi 0, %s355
      %s358 = sphi 0, %s357
      %s372 = sphi 0, %s358
      %s376 = sphi 0, %s376
      %s378 = sphi 0, %s376
      %s379 = sphi 0, %s378
      %s393 = sphi 0, %s379
      %s397 = sphi 0, %s397
      %s399 = sphi 0, %s397
      %s400 = sphi 0, %s399
      %s414 = sphi 0, %s400
      %s420 = sphi 0, %s422
      %s423 = sphi 0, %s420
      %s424 = sphi 0, %s423
      %s440 = sphi 0, %s424
    $region4: #{tpu_custom_call.1} parent=1 // loop_header_branch
      %30 = sbr.rel (%p28) target = $region8
    $region5: #{tpu_custom_call.1} parent=1 // loop_body
      %s32 = ssub.s32 %s27, 1
      %s33 = ssub.s32 %s27, 2
      %s34 = sadd.s32 %s27, 1
      %s35 = ssub.s32 %s27, %s34
      %p36 = scmp.eq.s32.totalorder %s35, 0
      %s38 = sadd.s32 %s37, 1
      %s39 = scalar_select %p36, %s37, %s38
      %p42 = pneg %p36
      %p43 = scmp.eq.s32.totalorder %s27, 1
      %p44 = por %p42, %p43
      %p45 = scmp.ne.s32.totalorder %s37, %s40
      %p46 = scmp.eq.s32.totalorder %s27, 0
      %p47 = por %p45, %p46
      %p48 = scmp.ne.s32.totalorder %s37, %s40
      %p49 = scmp.eq.s32.totalorder %s32, 1
      %p50 = por %p48, %p49
      %p51 = scmp.ne.s32.totalorder %s40, %s41
      %p52 = scmp.eq.s32.totalorder %s32, 0
      %p53 = por %p51, %p52
      %p54 = scmp.ne.s32.totalorder %s40, %s41
      %p55 = scmp.eq.s32.totalorder %s33, 1
      %p56 = por %p54, %p55
      %p58 = scmp.ne.s32.totalorder %s41, %s57
      %p59 = scmp.eq.s32.totalorder %s33, 0
      %p60 = por %p58, %p59
      %s62 = sadd.s32 %s61, 1
      %p65 = scmp.eq.s32.totalorder %s27, 1
      %p66 = scmp.ne.s32.totalorder %s61, %s63
      %p67 = scmp.eq.s32.totalorder %s27, 0
      %p68 = por %p66, %p67
      %p69 = scmp.ne.s32.totalorder %s61, %s63
      %p70 = scmp.eq.s32.totalorder %s32, 1
      %p71 = por %p69, %p70
      %p72 = scmp.ne.s32.totalorder %s63, %s64
      %p73 = scmp.eq.s32.totalorder %s32, 0
      %p74 = por %p72, %p73
      %p75 = scmp.ne.s32.totalorder %s63, %s64
      %p76 = scmp.eq.s32.totalorder %s33, 1
      %p77 = por %p75, %p76
      %p79 = scmp.ne.s32.totalorder %s64, %s78
      %p80 = scmp.eq.s32.totalorder %s33, 0
      %p81 = por %p79, %p80
      %s83 = sadd.s32 %s82, 1
      %p86 = scmp.eq.s32.totalorder %s27, 1
      %p87 = scmp.ne.s32.totalorder %s82, %s84
      %p88 = scmp.eq.s32.totalorder %s27, 0
      %p89 = por %p87, %p88
      %p90 = scmp.ne.s32.totalorder %s82, %s84
      %p91 = scmp.eq.s32.totalorder %s32, 1
      %p92 = por %p90, %p91
      %p93 = scmp.ne.s32.totalorder %s84, %s85
      %p94 = scmp.eq.s32.totalorder %s32, 0
      %p95 = por %p93, %p94
      %p96 = scmp.ne.s32.totalorder %s84, %s85
      %p97 = scmp.eq.s32.totalorder %s33, 1
      %p98 = por %p96, %p97
      %p100 = scmp.ne.s32.totalorder %s85, %s99
      %p101 = scmp.eq.s32.totalorder %s33, 0
      %p102 = por %p100, %p101
      %s104 = sadd.s32 %s103, 1
      %p107 = scmp.eq.s32.totalorder %s27, 1
      %p108 = scmp.ne.s32.totalorder %s103, %s105
      %p109 = scmp.eq.s32.totalorder %s27, 0
      %p110 = por %p108, %p109
      %p111 = scmp.ne.s32.totalorder %s103, %s105
      %p112 = scmp.eq.s32.totalorder %s32, 1
      %p113 = por %p111, %p112
      %p114 = scmp.ne.s32.totalorder %s105, %s106
      %p115 = scmp.eq.s32.totalorder %s32, 0
      %p116 = por %p114, %p115
      %p117 = scmp.ne.s32.totalorder %s105, %s106
      %p118 = scmp.eq.s32.totalorder %s33, 1
      %p119 = por %p117, %p118
      %p121 = scmp.ne.s32.totalorder %s106, %s120
      %p122 = scmp.eq.s32.totalorder %s33, 0
      %p123 = por %p121, %p122
      %s125 = sadd.s32 %s124, 1
      %p128 = scmp.eq.s32.totalorder %s27, 1
      %p129 = scmp.ne.s32.totalorder %s124, %s126
      %p130 = scmp.eq.s32.totalorder %s27, 0
      %p131 = por %p129, %p130
      %p132 = scmp.ne.s32.totalorder %s124, %s126
      %p133 = scmp.eq.s32.totalorder %s32, 1
      %p134 = por %p132, %p133
      %p135 = scmp.ne.s32.totalorder %s126, %s127
      %p136 = scmp.eq.s32.totalorder %s32, 0
      %p137 = por %p135, %p136
      %p138 = scmp.ne.s32.totalorder %s126, %s127
      %p139 = scmp.eq.s32.totalorder %s33, 1
      %p140 = por %p138, %p139
      %p142 = scmp.ne.s32.totalorder %s127, %s141
      %p143 = scmp.eq.s32.totalorder %s33, 0
      %p144 = por %p142, %p143
      %s146 = sadd.s32 %s145, 1
      %p149 = scmp.eq.s32.totalorder %s27, 1
      %p150 = scmp.ne.s32.totalorder %s145, %s147
      %p151 = scmp.eq.s32.totalorder %s27, 0
      %p152 = por %p150, %p151
      %p153 = scmp.ne.s32.totalorder %s145, %s147
      %p154 = scmp.eq.s32.totalorder %s32, 1
      %p155 = por %p153, %p154
      %p156 = scmp.ne.s32.totalorder %s147, %s148
      %p157 = scmp.eq.s32.totalorder %s32, 0
      %p158 = por %p156, %p157
      %p159 = scmp.ne.s32.totalorder %s147, %s148
      %p160 = scmp.eq.s32.totalorder %s33, 1
      %p161 = por %p159, %p160
      %p163 = scmp.ne.s32.totalorder %s148, %s162
      %p164 = scmp.eq.s32.totalorder %s33, 0
      %p165 = por %p163, %p164
      %s167 = sadd.s32 %s166, 1
      %p170 = scmp.eq.s32.totalorder %s27, 1
      %p171 = scmp.ne.s32.totalorder %s166, %s168
      %p172 = scmp.eq.s32.totalorder %s27, 0
      %p173 = por %p171, %p172
      %p174 = scmp.ne.s32.totalorder %s166, %s168
      %p175 = scmp.eq.s32.totalorder %s32, 1
      %p176 = por %p174, %p175
      %p177 = scmp.ne.s32.totalorder %s168, %s169
      %p178 = scmp.eq.s32.totalorder %s32, 0
      %p179 = por %p177, %p178
      %p180 = scmp.ne.s32.totalorder %s168, %s169
      %p181 = scmp.eq.s32.totalorder %s33, 1
      %p182 = por %p180, %p181
      %p184 = scmp.ne.s32.totalorder %s169, %s183
      %p185 = scmp.eq.s32.totalorder %s33, 0
      %p186 = por %p184, %p185
      %s188 = sadd.s32 %s187, 1
      %p191 = scmp.eq.s32.totalorder %s27, 1
      %p192 = scmp.ne.s32.totalorder %s187, %s189
      %p193 = scmp.eq.s32.totalorder %s27, 0
      %p194 = por %p192, %p193
      %p195 = scmp.ne.s32.totalorder %s187, %s189
      %p196 = scmp.eq.s32.totalorder %s32, 1
      %p197 = por %p195, %p196
      %p198 = scmp.ne.s32.totalorder %s189, %s190
      %p199 = scmp.eq.s32.totalorder %s32, 0
      %p200 = por %p198, %p199
      %p201 = scmp.ne.s32.totalorder %s189, %s190
      %p202 = scmp.eq.s32.totalorder %s33, 1
      %p203 = por %p201, %p202
      %p205 = scmp.ne.s32.totalorder %s190, %s204
      %p206 = scmp.eq.s32.totalorder %s33, 0
      %p207 = por %p205, %p206
      %s209 = sadd.s32 %s208, 1
      %p212 = scmp.eq.s32.totalorder %s27, 1
      %p213 = scmp.ne.s32.totalorder %s208, %s210
      %p214 = scmp.eq.s32.totalorder %s27, 0
      %p215 = por %p213, %p214
      %p216 = scmp.ne.s32.totalorder %s208, %s210
      %p217 = scmp.eq.s32.totalorder %s32, 1
      %p218 = por %p216, %p217
      %p219 = scmp.ne.s32.totalorder %s210, %s211
      %p220 = scmp.eq.s32.totalorder %s32, 0
      %p221 = por %p219, %p220
      %p222 = scmp.ne.s32.totalorder %s210, %s211
      %p223 = scmp.eq.s32.totalorder %s33, 1
      %p224 = por %p222, %p223
      %p226 = scmp.ne.s32.totalorder %s211, %s225
      %p227 = scmp.eq.s32.totalorder %s33, 0
      %p228 = por %p226, %p227
      %s230 = sadd.s32 %s229, 1
      %p233 = scmp.eq.s32.totalorder %s27, 1
      %p234 = scmp.ne.s32.totalorder %s229, %s231
      %p235 = scmp.eq.s32.totalorder %s27, 0
      %p236 = por %p234, %p235
      %p237 = scmp.ne.s32.totalorder %s229, %s231
      %p238 = scmp.eq.s32.totalorder %s32, 1
      %p239 = por %p237, %p238
      %p240 = scmp.ne.s32.totalorder %s231, %s232
      %p241 = scmp.eq.s32.totalorder %s32, 0
      %p242 = por %p240, %p241
      %p243 = scmp.ne.s32.totalorder %s231, %s232
      %p244 = scmp.eq.s32.totalorder %s33, 1
      %p245 = por %p243, %p244
      %p247 = scmp.ne.s32.totalorder %s232, %s246
      %p248 = scmp.eq.s32.totalorder %s33, 0
      %p249 = por %p247, %p248
      %s251 = sadd.s32 %s250, 1
      %p254 = scmp.eq.s32.totalorder %s27, 1
      %p255 = scmp.ne.s32.totalorder %s250, %s252
      %p256 = scmp.eq.s32.totalorder %s27, 0
      %p257 = por %p255, %p256
      %p258 = scmp.ne.s32.totalorder %s250, %s252
      %p259 = scmp.eq.s32.totalorder %s32, 1
      %p260 = por %p258, %p259
      %p261 = scmp.ne.s32.totalorder %s252, %s253
      %p262 = scmp.eq.s32.totalorder %s32, 0
      %p263 = por %p261, %p262
      %p264 = scmp.ne.s32.totalorder %s252, %s253
      %p265 = scmp.eq.s32.totalorder %s33, 1
      %p266 = por %p264, %p265
      %p268 = scmp.ne.s32.totalorder %s253, %s267
      %p269 = scmp.eq.s32.totalorder %s33, 0
      %p270 = por %p268, %p269
      %s272 = sadd.s32 %s271, 1
      %p275 = scmp.eq.s32.totalorder %s27, 1
      %p276 = scmp.ne.s32.totalorder %s271, %s273
      %p277 = scmp.eq.s32.totalorder %s27, 0
      %p278 = por %p276, %p277
      %p279 = scmp.ne.s32.totalorder %s271, %s273
      %p280 = scmp.eq.s32.totalorder %s32, 1
      %p281 = por %p279, %p280
      %p282 = scmp.ne.s32.totalorder %s273, %s274
      %p283 = scmp.eq.s32.totalorder %s32, 0
      %p284 = por %p282, %p283
      %p285 = scmp.ne.s32.totalorder %s273, %s274
      %p286 = scmp.eq.s32.totalorder %s33, 1
      %p287 = por %p285, %p286
      %p289 = scmp.ne.s32.totalorder %s274, %s288
      %p290 = scmp.eq.s32.totalorder %s33, 0
      %p291 = por %p289, %p290
      %s293 = sadd.s32 %s292, 1
      %p296 = scmp.eq.s32.totalorder %s27, 1
      %p297 = scmp.ne.s32.totalorder %s292, %s294
      %p298 = scmp.eq.s32.totalorder %s27, 0
      %p299 = por %p297, %p298
      %p300 = scmp.ne.s32.totalorder %s292, %s294
      %p301 = scmp.eq.s32.totalorder %s32, 1
      %p302 = por %p300, %p301
      %p303 = scmp.ne.s32.totalorder %s294, %s295
      %p304 = scmp.eq.s32.totalorder %s32, 0
      %p305 = por %p303, %p304
      %p306 = scmp.ne.s32.totalorder %s294, %s295
      %p307 = scmp.eq.s32.totalorder %s33, 1
      %p308 = por %p306, %p307
      %p310 = scmp.ne.s32.totalorder %s295, %s309
      %p311 = scmp.eq.s32.totalorder %s33, 0
      %p312 = por %p310, %p311
      %s314 = sadd.s32 %s313, 1
      %p317 = scmp.eq.s32.totalorder %s27, 1
      %p318 = scmp.ne.s32.totalorder %s313, %s315
      %p319 = scmp.eq.s32.totalorder %s27, 0
      %p320 = por %p318, %p319
      %p321 = scmp.ne.s32.totalorder %s313, %s315
      %p322 = scmp.eq.s32.totalorder %s32, 1
      %p323 = por %p321, %p322
      %p324 = scmp.ne.s32.totalorder %s315, %s316
      %p325 = scmp.eq.s32.totalorder %s32, 0
      %p326 = por %p324, %p325
      %p327 = scmp.ne.s32.totalorder %s315, %s316
      %p328 = scmp.eq.s32.totalorder %s33, 1
      %p329 = por %p327, %p328
      %p331 = scmp.ne.s32.totalorder %s316, %s330
      %p332 = scmp.eq.s32.totalorder %s33, 0
      %p333 = por %p331, %p332
      %s335 = sadd.s32 %s334, 1
      %p338 = scmp.eq.s32.totalorder %s27, 1
      %p339 = scmp.ne.s32.totalorder %s334, %s336
      %p340 = scmp.eq.s32.totalorder %s27, 0
      %p341 = por %p339, %p340
      %p342 = scmp.ne.s32.totalorder %s334, %s336
      %p343 = scmp.eq.s32.totalorder %s32, 1
      %p344 = por %p342, %p343
      %p345 = scmp.ne.s32.totalorder %s336, %s337
      %p346 = scmp.eq.s32.totalorder %s32, 0
      %p347 = por %p345, %p346
      %p348 = scmp.ne.s32.totalorder %s336, %s337
      %p349 = scmp.eq.s32.totalorder %s33, 1
      %p350 = por %p348, %p349
      %p352 = scmp.ne.s32.totalorder %s337, %s351
      %p353 = scmp.eq.s32.totalorder %s33, 0
      %p354 = por %p352, %p353
      %s356 = sadd.s32 %s355, 1
      %p359 = scmp.eq.s32.totalorder %s27, 1
      %p360 = scmp.ne.s32.totalorder %s355, %s357
      %p361 = scmp.eq.s32.totalorder %s27, 0
      %p362 = por %p360, %p361
      %p363 = scmp.ne.s32.totalorder %s355, %s357
      %p364 = scmp.eq.s32.totalorder %s32, 1
      %p365 = por %p363, %p364
      %p366 = scmp.ne.s32.totalorder %s357, %s358
      %p367 = scmp.eq.s32.totalorder %s32, 0
      %p368 = por %p366, %p367
      %p369 = scmp.ne.s32.totalorder %s357, %s358
      %p370 = scmp.eq.s32.totalorder %s33, 1
      %p371 = por %p369, %p370
      %p373 = scmp.ne.s32.totalorder %s358, %s372
      %p374 = scmp.eq.s32.totalorder %s33, 0
      %p375 = por %p373, %p374
      %s377 = sadd.s32 %s376, 1
      %p380 = scmp.eq.s32.totalorder %s27, 1
      %p381 = scmp.ne.s32.totalorder %s376, %s378
      %p382 = scmp.eq.s32.totalorder %s27, 0
      %p383 = por %p381, %p382
      %p384 = scmp.ne.s32.totalorder %s376, %s378
      %p385 = scmp.eq.s32.totalorder %s32, 1
      %p386 = por %p384, %p385
      %p387 = scmp.ne.s32.totalorder %s378, %s379
      %p388 = scmp.eq.s32.totalorder %s32, 0
      %p389 = por %p387, %p388
      %p390 = scmp.ne.s32.totalorder %s378, %s379
      %p391 = scmp.eq.s32.totalorder %s33, 1
      %p392 = por %p390, %p391
      %p394 = scmp.ne.s32.totalorder %s379, %s393
      %p395 = scmp.eq.s32.totalorder %s33, 0
      %p396 = por %p394, %p395
      %s398 = sadd.s32 %s397, 1
      %p401 = scmp.eq.s32.totalorder %s27, 1
      %p402 = scmp.ne.s32.totalorder %s397, %s399
      %p403 = scmp.eq.s32.totalorder %s27, 0
      %p404 = por %p402, %p403
      %p405 = scmp.ne.s32.totalorder %s397, %s399
      %p406 = scmp.eq.s32.totalorder %s32, 1
      %p407 = por %p405, %p406
      %p408 = scmp.ne.s32.totalorder %s399, %s400
      %p409 = scmp.eq.s32.totalorder %s32, 0
      %p410 = por %p408, %p409
      %p411 = scmp.ne.s32.totalorder %s399, %s400
      %p412 = scmp.eq.s32.totalorder %s33, 1
      %p413 = por %p411, %p412
      %p415 = scmp.ne.s32.totalorder %s400, %s414
      %p416 = scmp.eq.s32.totalorder %s33, 0
      %p417 = por %p415, %p416
      %s418 = ssub.s32 %s27, %s34
      %p419 = scmp.eq.s32.totalorder %s418, 0
      %s421 = sadd.s32 %s420, 1
      %s422 = scalar_select %p419, %s420, %s421
      %p425 = pneg %p419
      %p426 = scmp.eq.s32.totalorder %s27, 1
      %p427 = por %p425, %p426
      %p428 = scmp.ne.s32.totalorder %s420, %s423
      %p429 = scmp.eq.s32.totalorder %s27, 0
      %p430 = por %p428, %p429
      %p431 = scmp.ne.s32.totalorder %s420, %s423
      %p432 = scmp.eq.s32.totalorder %s32, 1
      %p433 = por %p431, %p432
      %p434 = scmp.ne.s32.totalorder %s423, %s424
      %p435 = scmp.eq.s32.totalorder %s32, 0
      %p436 = por %p434, %p435
      %p437 = scmp.ne.s32.totalorder %s423, %s424
      %p438 = scmp.eq.s32.totalorder %s33, 1
      %p439 = por %p437, %p438
      %p441 = scmp.ne.s32.totalorder %s424, %s440
      %p442 = scmp.eq.s32.totalorder %s33, 0
      %p443 = por %p441, %p442
      %p444 = scmp.le.s32.totalorder 1, %s27
      %p445 = scmp.lt.s32.totalorder %s27, 3
      %p446 = pnand %p444, %p445
      %p447 = pneg %p446
      // Predicated region
      $region9: #{tpu_custom_call.1} parent=5 // pred_check
        _
      $region10: #{tpu_custom_call.1} parent=5 // pred_check_branch
        %449 = sbr.rel (%p446) target = $region12
      $region11: #{tpu_custom_call.1} parent=5 // pred_region
        %s450 = ssub.s32 %s27, 1
        // Predicated region
        $region13: #{tpu_custom_call.1} parent=11 // pred_check
          %p451 = pneg %p74
        $region14: #{tpu_custom_call.1} parent=11 // pred_check_branch
          %453 = sbr.rel (%p451) target = $region16
        $region15: #{tpu_custom_call.1} parent=11 // pred_region
          _
        $region16: #{tpu_custom_call.1} parent=11 // pred_fallthru
          _
        // Predicated region
        $region17: #{tpu_custom_call.1} parent=11 // pred_check
          %p454 = pneg %p95
        $region18: #{tpu_custom_call.1} parent=11 // pred_check_branch
          %456 = sbr.rel (%p454) target = $region20
        $region19: #{tpu_custom_call.1} parent=11 // pred_region
          _
        $region20: #{tpu_custom_call.1} parent=11 // pred_fallthru
          _
        // Predicated region
        $region21: #{tpu_custom_call.1} parent=11 // pred_check
          %p457 = pneg %p116
        $region22: #{tpu_custom_call.1} parent=11 // pred_check_branch
          %459 = sbr.rel (%p457) target = $region24
        $region23: #{tpu_custom_call.1} parent=11 // pred_region
          _
        $region24: #{tpu_custom_call.1} parent=11 // pred_fallthru
          _
        // Predicated region
        $region25: #{tpu_custom_call.1} parent=11 // pred_check
          %p460 = pneg %p137
        $region26: #{tpu_custom_call.1} parent=11 // pred_check_branch
          %462 = sbr.rel (%p460) target = $region28
        $region27: #{tpu_custom_call.1} parent=11 // pred_region
          _
        $region28: #{tpu_custom_call.1} parent=11 // pred_fallthru
          _
        // Predicated region
        $region29: #{tpu_custom_call.1} parent=11 // pred_check
          %p463 = pneg %p158
        $region30: #{tpu_custom_call.1} parent=11 // pred_check_branch
          %465 = sbr.rel (%p463) target = $region32
        $region31: #{tpu_custom_call.1} parent=11 // pred_region
          _
        $region32: #{tpu_custom_call.1} parent=11 // pred_fallthru
          _
        // Predicated region
        $region33: #{tpu_custom_call.1} parent=11 // pred_check
          %p466 = pneg %p179
        $region34: #{tpu_custom_call.1} parent=11 // pred_check_branch
          %468 = sbr.rel (%p466) target = $region36
        $region35: #{tpu_custom_call.1} parent=11 // pred_region
          _
        $region36: #{tpu_custom_call.1} parent=11 // pred_fallthru
          _
        // Predicated region
        $region37: #{tpu_custom_call.1} parent=11 // pred_check
          %p469 = pneg %p200
        $region38: #{tpu_custom_call.1} parent=11 // pred_check_branch
          %471 = sbr.rel (%p469) target = $region40
        $region39: #{tpu_custom_call.1} parent=11 // pred_region
          _
        $region40: #{tpu_custom_call.1} parent=11 // pred_fallthru
          _
        // Predicated region
        $region41: #{tpu_custom_call.1} parent=11 // pred_check
          %p472 = pneg %p221
        $region42: #{tpu_custom_call.1} parent=11 // pred_check_branch
          %474 = sbr.rel (%p472) target = $region44
        $region43: #{tpu_custom_call.1} parent=11 // pred_region
          _
        $region44: #{tpu_custom_call.1} parent=11 // pred_fallthru
          _
        // Predicated region
        $region45: #{tpu_custom_call.1} parent=11 // pred_check
          %p475 = pneg %p242
        $region46: #{tpu_custom_call.1} parent=11 // pred_check_branch
          %477 = sbr.rel (%p475) target = $region48
        $region47: #{tpu_custom_call.1} parent=11 // pred_region
          _
        $region48: #{tpu_custom_call.1} parent=11 // pred_fallthru
          _
        // Predicated region
        $region49: #{tpu_custom_call.1} parent=11 // pred_check
          %p478 = pneg %p263
        $region50: #{tpu_custom_call.1} parent=11 // pred_check_branch
          %480 = sbr.rel (%p478) target = $region52
        $region51: #{tpu_custom_call.1} parent=11 // pred_region
          _
        $region52: #{tpu_custom_call.1} parent=11 // pred_fallthru
          _
        // Predicated region
        $region53: #{tpu_custom_call.1} parent=11 // pred_check
          %p481 = pneg %p284
        $region54: #{tpu_custom_call.1} parent=11 // pred_check_branch
          %483 = sbr.rel (%p481) target = $region56
        $region55: #{tpu_custom_call.1} parent=11 // pred_region
          _
        $region56: #{tpu_custom_call.1} parent=11 // pred_fallthru
          _
        // Predicated region
        $region57: #{tpu_custom_call.1} parent=11 // pred_check
          %p484 = pneg %p305
        $region58: #{tpu_custom_call.1} parent=11 // pred_check_branch
          %486 = sbr.rel (%p484) target = $region60
        $region59: #{tpu_custom_call.1} parent=11 // pred_region
          _
        $region60: #{tpu_custom_call.1} parent=11 // pred_fallthru
          _
        // Predicated region
        $region61: #{tpu_custom_call.1} parent=11 // pred_check
          %p487 = pneg %p326
        $region62: #{tpu_custom_call.1} parent=11 // pred_check_branch
          %489 = sbr.rel (%p487) target = $region64
        $region63: #{tpu_custom_call.1} parent=11 // pred_region
          _
        $region64: #{tpu_custom_call.1} parent=11 // pred_fallthru
          _
        // Predicated region
        $region65: #{tpu_custom_call.1} parent=11 // pred_check
          %p490 = pneg %p347
        $region66: #{tpu_custom_call.1} parent=11 // pred_check_branch
          %492 = sbr.rel (%p490) target = $region68
        $region67: #{tpu_custom_call.1} parent=11 // pred_region
          _
        $region68: #{tpu_custom_call.1} parent=11 // pred_fallthru
          _
        // Predicated region
        $region69: #{tpu_custom_call.1} parent=11 // pred_check
          %p493 = pneg %p368
        $region70: #{tpu_custom_call.1} parent=11 // pred_check_branch
          %495 = sbr.rel (%p493) target = $region72
        $region71: #{tpu_custom_call.1} parent=11 // pred_region
          _
        $region72: #{tpu_custom_call.1} parent=11 // pred_fallthru
          _
        // Predicated region
        $region73: #{tpu_custom_call.1} parent=11 // pred_check
          %p496 = pneg %p389
        $region74: #{tpu_custom_call.1} parent=11 // pred_check_branch
          %498 = sbr.rel (%p496) target = $region76
        $region75: #{tpu_custom_call.1} parent=11 // pred_region
          _
        $region76: #{tpu_custom_call.1} parent=11 // pred_fallthru
          _
        // Predicated region
        $region77: #{tpu_custom_call.1} parent=11 // pred_check
          %p499 = pneg %p410
        $region78: #{tpu_custom_call.1} parent=11 // pred_check_branch
          %501 = sbr.rel (%p499) target = $region80
        $region79: #{tpu_custom_call.1} parent=11 // pred_region
          _
        $region80: #{tpu_custom_call.1} parent=11 // pred_fallthru
          _
      $region12: #{tpu_custom_call.1} parent=5 // pred_fallthru
        _
      %p502 = scmp.lt.s32.totalorder %s27, 2
      // Predicated region
      $region81: #{tpu_custom_call.1} parent=5 // pred_check
        %p503 = pneg %p502
      $region82: #{tpu_custom_call.1} parent=5 // pred_check_branch
        %505 = sbr.rel (%p503) target = $region84
      $region83: #{tpu_custom_call.1} parent=5 // pred_region
        // Predicated region
        $region85: #{tpu_custom_call.1} parent=83 // pred_check
          %p506 = pneg %p47
        $region86: #{tpu_custom_call.1} parent=83 // pred_check_branch
          %508 = sbr.rel (%p506) target = $region88
        $region87: #{tpu_custom_call.1} parent=83 // pred_region
          %p509 = scmp.lt.s32.totalorder %s27, 1
          %s510 = scalar_select %p509, %s27, 1
          %s511 = smul.addr %s510, 8
          %s512 = smul.addr %s511, 8
          %s513 = scalar_lea.vmem %s0, %s512
        $region88: #{tpu_custom_call.1} parent=83 // pred_fallthru
          _
      $region84: #{tpu_custom_call.1} parent=5 // pred_fallthru
        _
      %p514 = scmp.le.s32.totalorder 1, %s27
      %p515 = scmp.lt.s32.totalorder %s27, 3
      %p516 = pnand %p514, %p515
      %p517 = pneg %p516
      // Predicated region
      $region89: #{tpu_custom_call.1} parent=5 // pred_check
        _
      $region90: #{tpu_custom_call.1} parent=5 // pred_check_branch
        %519 = sbr.rel (%p516) target = $region92
      $region91: #{tpu_custom_call.1} parent=5 // pred_region
        %s520 = ssub.s32 %s27, 1
        %p521 = scmp.lt.s32.totalorder %s32, 1
        %s522 = scalar_select %p521, %s32, 1
        %s523 = smul.addr %s522, 8
        %s524 = smul.addr %s523, 8
        %s525 = scalar_lea.vmem %s0, %s524
        %p526 = pneg %p53
        %p527 = pneg %p50
        %p528 = pneg %p74
        %p529 = pneg %p71
        %p530 = pneg %p95
        %p531 = pneg %p92
        %p532 = pneg %p116
        %p533 = pneg %p113
        %p534 = pneg %p137
        %p535 = pneg %p134
        %p536 = pneg %p158
        %p537 = pneg %p155
        %p538 = pneg %p179
        %p539 = pneg %p176
        %p540 = pneg %p200
        %p541 = pneg %p197
        %p542 = pneg %p221
        %p543 = pneg %p218
        %p544 = pneg %p242
        %p545 = pneg %p239
        %p546 = pneg %p263
        %p547 = pneg %p260
        %p548 = pneg %p284
        %p549 = pneg %p281
        %p550 = pneg %p305
        %p551 = pneg %p302
        %p552 = pneg %p326
        %p553 = pneg %p323
        %p554 = pneg %p347
        %p555 = pneg %p344
        %p556 = pneg %p368
        %p557 = pneg %p365
        %p558 = pneg %p389
        %p559 = pneg %p386
        %p560 = pneg %p410
        %p561 = pneg %p407
        %p562 = pneg %p436
        %p563 = pneg %p433
        %s564 = sand.u32 %s423, 1
        %s565 = scalar_lea.sflag [#allocation3], %s564
        %s566 = sand.u32 %s423, 1
        %s567 = smul.addr %s566, 64
        %s568 = scalar_lea.vmem [#allocation2], %s567
        %p569 = scmp.lt.s32.totalorder %s32, 1
        %s570 = scalar_select %p569, %s32, 1
        %s571 = smul.addr %s570, 8
        %s572 = smul.addr %s571, 8
        %s573 = scalar_lea.vmem %s0, %s572
        %v575 = vld [vmem:[%s1] sm:$0xff]
        %v576 = vld [vmem:[%s1 + $0x8] sm:$0xff]
        %v577 = vld [vmem:[%s1 + $0x10] sm:$0xff]
        %v578 = vld [vmem:[%s1 + $0x18] sm:$0xff]
        %v579 = vld [vmem:[%s2] sm:$0xff]
        %v580 = vld [vmem:[%s2 + $0x8] sm:$0xff]
        %v581 = vld [vmem:[%s2 + $0x10] sm:$0xff]
        %v582 = vld [vmem:[%s2 + $0x18] sm:$0xff]
        %v583 = vld [vmem:[%s3] sm:$0xff]
        %v584 = vld [vmem:[%s3 + $0x8] sm:$0xff]
        %v585 = vld [vmem:[%s3 + $0x10] sm:$0xff]
        %v586 = vld [vmem:[%s3 + $0x18] sm:$0xff]
        %v587 = vld [vmem:[%s4] sm:$0xf]
        %v588 = vld [vmem:[%s4 + $0x4] sm:$0xf]
        %v589 = vld [vmem:[%s4 + $0x8] sm:$0xf]
        %v590 = vld [vmem:[%s4 + $0xc] sm:$0xf]
        %v591 = vld [vmem:[%s5] sm:$0xff]
        %v592 = vld [vmem:[%s5 + $0x8] sm:$0xff]
        %v593 = vld [vmem:[%s5 + $0x10] sm:$0xff]
        %v594 = vld [vmem:[%s5 + $0x18] sm:$0xff]
        %v595 = vld [vmem:[%s6] sm:$0xf]
        %v596 = vld [vmem:[%s6 + $0x4] sm:$0xf]
        %v597 = vld [vmem:[%s6 + $0x8] sm:$0xf]
        %v598 = vld [vmem:[%s6 + $0xc] sm:$0xf]
        %v599 = vld [vmem:[%s7] sm:$0xff]
        %v600 = vld [vmem:[%s7 + $0x8] sm:$0xff]
        %v601 = vld [vmem:[%s7 + $0x10] sm:$0xff]
        %v602 = vld [vmem:[%s7 + $0x18] sm:$0xff]
        %v603 = vld [vmem:[%s8] sm:$0xf]
        %v604 = vld [vmem:[%s8 + $0x4] sm:$0xf]
        %v605 = vld [vmem:[%s8 + $0x8] sm:$0xf]
        %v606 = vld [vmem:[%s8 + $0xc] sm:$0xf]
        %v607 = vld [vmem:[%s9] sm:$0xff]
        %v608 = vld [vmem:[%s9 + $0x8] sm:$0xff]
        %v609 = vld [vmem:[%s9 + $0x10] sm:$0xff]
        %v610 = vld [vmem:[%s9 + $0x18] sm:$0xff]
        %v611 = vld [vmem:[%s11] sm:$0xff]
        %v612 = vld [vmem:[%s11 + $0x8] sm:$0xff]
        %v613 = vld [vmem:[%s11 + $0x10] sm:$0xff]
        %v614 = vld [vmem:[%s11 + $0x18] sm:$0xff]
        %v615 = vld [vmem:[%s12] sm:$0xff]
        %v616 = vld [vmem:[%s12 + $0x8] sm:$0xff]
        %v617 = vld [vmem:[%s12 + $0x10] sm:$0xff]
        %v618 = vld [vmem:[%s12 + $0x18] sm:$0xff]
        %v619 = vld [vmem:[%s13] sm:$0xff]
        %v620 = vld [vmem:[%s13 + $0x8] sm:$0xff]
        %v621 = vld [vmem:[%s13 + $0x10] sm:$0xff]
        %v622 = vld [vmem:[%s13 + $0x18] sm:$0xff]
        %v623 = vld [vmem:[%s14] sm:$0xf]
        %v624 = vld [vmem:[%s14 + $0x4] sm:$0xf]
        %v625 = vld [vmem:[%s14 + $0x8] sm:$0xf]
        %v626 = vld [vmem:[%s14 + $0xc] sm:$0xf]
        %v627 = vld [vmem:[%s14 + $0x10] sm:$0xf]
        %v628 = vld [vmem:[%s14 + $0x14] sm:$0xf]
        %v629 = vld [vmem:[%s14 + $0x18] sm:$0xf]
        %v630 = vld [vmem:[%s14 + $0x1c] sm:$0xf]
        %v631 = vld [vmem:[%s14 + $0x20] sm:$0xf]
        %v632 = vld [vmem:[%s14 + $0x24] sm:$0xf]
        %v633 = vld [vmem:[%s14 + $0x28] sm:$0xf]
        %v634 = vld [vmem:[%s14 + $0x2c] sm:$0xf]
        %v635 = vld [vmem:[%s14 + $0x30] sm:$0xf]
        %v636 = vld [vmem:[%s14 + $0x34] sm:$0xf]
        %v637 = vld [vmem:[%s14 + $0x38] sm:$0xf]
        %v638 = vld [vmem:[%s14 + $0x3c] sm:$0xf]
        %v639 = vld [vmem:[%s14 + $0x40] sm:$0xf]
        %v640 = vld [vmem:[%s14 + $0x44] sm:$0xf]
        %v641 = vld [vmem:[%s14 + $0x48] sm:$0xf]
        %v642 = vld [vmem:[%s14 + $0x4c] sm:$0xf]
        %v643 = vld [vmem:[%s14 + $0x50] sm:$0xf]
        %v644 = vld [vmem:[%s14 + $0x54] sm:$0xf]
        %v645 = vld [vmem:[%s14 + $0x58] sm:$0xf]
        %v646 = vld [vmem:[%s14 + $0x5c] sm:$0xf]
        %v647 = vld [vmem:[%s14 + $0x60] sm:$0xf]
        %v648 = vld [vmem:[%s14 + $0x64] sm:$0xf]
        %v649 = vld [vmem:[%s14 + $0x68] sm:$0xf]
        %v650 = vld [vmem:[%s14 + $0x6c] sm:$0xf]
        %v651 = vld [vmem:[%s14 + $0x70] sm:$0xf]
        %v652 = vld [vmem:[%s14 + $0x74] sm:$0xf]
        %v653 = vld [vmem:[%s14 + $0x78] sm:$0xf]
        %v654 = vld [vmem:[%s14 + $0x7c] sm:$0xf]
        %v655 = vld [vmem:[%s15] sm:$0xff]
        %v656 = vld [vmem:[%s15 + $0x8] sm:$0xff]
        %v657 = vld [vmem:[%s15 + $0x10] sm:$0xff]
        %v658 = vld [vmem:[%s15 + $0x18] sm:$0xff]
        %v659 = vld [vmem:[%s15 + $0x20] sm:$0xff]
        %v660 = vld [vmem:[%s15 + $0x28] sm:$0xff]
        %v661 = vld [vmem:[%s15 + $0x30] sm:$0xff]
        %v662 = vld [vmem:[%s15 + $0x38] sm:$0xff]
        %v663 = vld [vmem:[%s15 + $0x40] sm:$0xff]
        %v664 = vld [vmem:[%s15 + $0x48] sm:$0xff]
        %v665 = vld [vmem:[%s15 + $0x50] sm:$0xff]
        %v666 = vld [vmem:[%s15 + $0x58] sm:$0xff]
        %v667 = vld [vmem:[%s15 + $0x60] sm:$0xff]
        %v668 = vld [vmem:[%s15 + $0x68] sm:$0xff]
        %v669 = vld [vmem:[%s15 + $0x70] sm:$0xff]
        %v670 = vld [vmem:[%s15 + $0x78] sm:$0xff]
        %v671 = vld [vmem:[%s15 + $0x80] sm:$0xff]
        %v672 = vld [vmem:[%s15 + $0x88] sm:$0xff]
        %v673 = vld [vmem:[%s15 + $0x90] sm:$0xff]
        %v674 = vld [vmem:[%s15 + $0x98] sm:$0xff]
        %v675 = vld [vmem:[%s15 + $0xa0] sm:$0xff]
        %v676 = vld [vmem:[%s15 + $0xa8] sm:$0xff]
        %v677 = vld [vmem:[%s15 + $0xb0] sm:$0xff]
        %v678 = vld [vmem:[%s15 + $0xb8] sm:$0xff]
        %v679 = vld [vmem:[%s15 + $0xc0] sm:$0xff]
        %v680 = vld [vmem:[%s15 + $0xc8] sm:$0xff]
        %v681 = vld [vmem:[%s15 + $0xd0] sm:$0xff]
        %v682 = vld [vmem:[%s15 + $0xd8] sm:$0xff]
        %v683 = vld [vmem:[%s15 + $0xe0] sm:$0xff]
        %v684 = vld [vmem:[%s15 + $0xe8] sm:$0xff]
        %v685 = vld [vmem:[%s15 + $0xf0] sm:$0xff]
        %v686 = vld [vmem:[%s15 + $0xf8] sm:$0xff]
        %v687 = vld [vmem:[%s16] sm:$0xf]
        %v688 = vld [vmem:[%s16 + $0x4] sm:$0xf]
        %v689 = vld [vmem:[%s16 + $0x8] sm:$0xf]
        %v690 = vld [vmem:[%s16 + $0xc] sm:$0xf]
        %v691 = vld [vmem:[%s17] sm:$0xff]
        %v692 = vld [vmem:[%s17 + $0x8] sm:$0xff]
        %v693 = vld [vmem:[%s17 + $0x10] sm:$0xff]
        %v694 = vld [vmem:[%s17 + $0x18] sm:$0xff]
        %v695 = vld [vmem:[%s573] sm:$0xff]
        %v696 = vld [vmem:[%s573 + $0x8] sm:$0xff]
        %v697 = vld [vmem:[%s573 + $0x10] sm:$0xff]
        %v698 = vld [vmem:[%s573 + $0x18] sm:$0xff]
        %v699 = vld [vmem:[%s573 + $0x20] sm:$0xff]
        %v700 = vld [vmem:[%s573 + $0x28] sm:$0xff]
        %v701 = vld [vmem:[%s573 + $0x30] sm:$0xff]
        %v702 = vld [vmem:[%s573 + $0x38] sm:$0xff]
        %v703 = vadd.f32 %v695, %v696
        %704 = vadd.xlane.f32.xlu0 %v703
        %v705 = vpop.xlane.xlu0 %704
        %v706 = vadd.f32 %v697, %v698
        %707 = vadd.xlane.f32.xlu0 %v706
        %v708 = vpop.xlane.xlu0 %707
        %v709 = vadd.f32 %v699, %v700
        %710 = vadd.xlane.f32.xlu0 %v709
        %v711 = vpop.xlane.xlu0 %710
        %v712 = vadd.f32 %v701, %v702
        %713 = vadd.xlane.f32.xlu0 %v712
        %v714 = vpop.xlane.xlu0 %713
        %v715 = vmul.f32 %v695, %v695
        %v716 = vmul.f32 %v696, %v696
        %v717 = vmul.f32 %v697, %v697
        %v718 = vmul.f32 %v698, %v698
        %v719 = vmul.f32 %v699, %v699
        %v720 = vmul.f32 %v700, %v700
        %v721 = vmul.f32 %v701, %v701
        %v722 = vmul.f32 %v702, %v702
        %v723 = vadd.f32 %v715, %v716
        %724 = vadd.xlane.f32.xlu0 %v723
        %v725 = vpop.xlane.xlu0 %724
        %v726 = vadd.f32 %v717, %v718
        %727 = vadd.xlane.f32.xlu0 %v726
        %v728 = vpop.xlane.xlu0 %727
        %v729 = vadd.f32 %v719, %v720
        %730 = vadd.xlane.f32.xlu0 %v729
        %v731 = vpop.xlane.xlu0 %730
        %v732 = vadd.f32 %v721, %v722
        %733 = vadd.xlane.f32.xlu0 %v732
        %v734 = vpop.xlane.xlu0 %733
        %vm735 = vcmask 261120
        %v737 = vsel %vm735, %v583, 0
        %v740 = vsel %vm735, %v584, 0
        %v743 = vsel %vm735, %v585, 0
        %v746 = vsel %vm735, %v586, 0
        %748 = vmatprep.subr.mxu0 0.0
        %749 = vmatpush1.msra.mxu0 0.0
        %750 = vmatprep.subr.mxu0 0.0
        %751 = vmatpush1.msra.mxu0 0.0
        %752 = vmatprep.subr.mxu0 0.0
        %753 = vmatpush1.msra.mxu0 0.0
        %754 = vmatprep.subr.mxu0 0.0
        %755 = vmatpush1.msra.mxu0 0.0
        %756 = vmatprep.subr.mxu0 0.0
        %757 = vmatpush1.msra.mxu0 0.0
        %758 = vmatprep.subr.mxu0 0.0
        %759 = vmatpush1.msra.mxu0 0.0
        %760 = vmatprep.subr.mxu0 0.0
        %761 = vmatpush1.msra.mxu0 0.0
        %762 = vmatprep.subr.mxu0 0.0
        %763 = vmatpush1.msra.mxu0 0.0
        %764 = vmatprep.subr.mxu0 0.0
        %765 = vmatpush1.msra.mxu0 0.0
        %766 = vmatprep.subr.mxu0 0.0
        %767 = vmatpush1.msra.mxu0 0.0
        %768 = vmatprep.subr.mxu0 0.0
        %769 = vmatpush1.msra.mxu0 0.0
        %770 = vmatprep.subr.mxu0 0.0
        %771 = vmatpush1.msra.mxu0 0.0
        %772 = vmatprep.subr.mxu0 0.0
        %773 = vmatpush1.msra.mxu0 %v714
        %774 = vmatprep.subr.mxu0 0.0
        %775 = vmatpush1.msra.mxu0 %v711
        %776 = vmatprep.subr.mxu0 0.0
        %777 = vmatpush1.msra.mxu0 %v708
        %778 = vmatprep.subr.mxu0 0.0
        %779 = vmatpush1.msra.mxu0 %v705
        %780 = vmatprep.subr.mxu0 0.0
        %781 = vmatpush2.msra.mxu0 0.0
        %782 = vmatprep.subr.mxu0 0.0
        %783 = vmatpush2.msra.mxu0 0.0
        %784 = vmatprep.subr.mxu0 0.0
        %785 = vmatpush2.msra.mxu0 0.0
        %786 = vmatprep.subr.mxu0 0.0
        %787 = vmatpush2.msra.mxu0 0.0
        %788 = vmatprep.subr.mxu0 0.0
        %789 = vmatpush2.msra.mxu0 0.0
        %790 = vmatprep.subr.mxu0 0.0
        %791 = vmatpush2.msra.mxu0 0.0
        %792 = vmatprep.subr.mxu0 0.0
        %793 = vmatpush2.msra.mxu0 0.0
        %794 = vmatprep.subr.mxu0 0.0
        %795 = vmatpush2.msra.mxu0 0.0
        %796 = vmatprep.subr.mxu0 0.0
        %797 = vmatpush2.msra.mxu0 0.0
        %798 = vmatprep.subr.mxu0 0.0
        %799 = vmatpush2.msra.mxu0 0.0
        %800 = vmatprep.subr.mxu0 0.0
        %801 = vmatpush2.msra.mxu0 0.0
        %802 = vmatprep.subr.mxu0 0.0
        %803 = vmatpush2.msra.mxu0 0.0
        %804 = vmatprep.subr.mxu0 0.0
        %805 = vmatpush2.msra.mxu0 0.0
        %806 = vmatprep.subr.mxu0 0.0
        %807 = vmatpush2.msra.mxu0 0.0
        %808 = vmatprep.subr.mxu0 0.0
        %809 = vmatpush2.msra.mxu0 0.0
        %810 = vmatprep.subr.mxu0 0.0
        %811 = vmatpush2.msra.mxu0 0.0
        %812 = vmatprep.mubr.f32.mxu0 0.0
        %813 = vmatmul.mubr.f32.gmra.mxu0 %v737
        %v814 = vpop.f32.mrf.mxu0
        %v815 = vadd.f32 0.0, %v814
        %v816 = vpop.f32.mrf.mxu0
        %817 = vmatprep.mubr.f32.mxu0 0.0
        %818 = vmatmul.mubr.f32.gmra.mxu0 %v740
        %v819 = vpop.f32.mrf.mxu0
        %v820 = vadd.f32 0.0, %v819
        %v821 = vpop.f32.mrf.mxu0
        %822 = vmatprep.mubr.f32.mxu0 0.0
        %823 = vmatmul.mubr.f32.gmra.mxu0 %v743
        %v824 = vpop.f32.mrf.mxu0
        %v825 = vadd.f32 0.0, %v824
        %v826 = vpop.f32.mrf.mxu0
        %827 = vmatprep.mubr.f32.mxu0 0.0
        %828 = vmatmul.mubr.f32.gmra.mxu0 %v746
        %v829 = vpop.f32.mrf.mxu0
        %v830 = vadd.f32 0.0, %v829
        %v831 = vpop.f32.mrf.mxu0
        %832 = vdwg.mxu0
        %833 = vmatprep.subr.mxu0 0.0
        %834 = vmatpush1.msra.mxu0 0.0
        %835 = vmatprep.subr.mxu0 0.0
        %836 = vmatpush1.msra.mxu0 0.0
        %837 = vmatprep.subr.mxu0 0.0
        %838 = vmatpush1.msra.mxu0 0.0
        %839 = vmatprep.subr.mxu0 0.0
        %840 = vmatpush1.msra.mxu0 0.0
        %841 = vmatprep.subr.mxu0 0.0
        %842 = vmatpush1.msra.mxu0 0.0
        %843 = vmatprep.subr.mxu0 0.0
        %844 = vmatpush1.msra.mxu0 0.0
        %845 = vmatprep.subr.mxu0 0.0
        %846 = vmatpush1.msra.mxu0 0.0
        %847 = vmatprep.subr.mxu0 0.0
        %848 = vmatpush1.msra.mxu0 0.0
        %849 = vmatprep.subr.mxu0 0.0
        %850 = vmatpush1.msra.mxu0 0.0
        %851 = vmatprep.subr.mxu0 0.0
        %852 = vmatpush1.msra.mxu0 0.0
        %853 = vmatprep.subr.mxu0 0.0
        %854 = vmatpush1.msra.mxu0 0.0
        %855 = vmatprep.subr.mxu0 0.0
        %856 = vmatpush1.msra.mxu0 0.0
        %857 = vmatprep.subr.mxu0 0.0
        %858 = vmatpush1.msra.mxu0 %v734
        %859 = vmatprep.subr.mxu0 0.0
        %860 = vmatpush1.msra.mxu0 %v731
        %861 = vmatprep.subr.mxu0 0.0
        %862 = vmatpush1.msra.mxu0 %v728
        %863 = vmatprep.subr.mxu0 0.0
        %864 = vmatpush1.msra.mxu0 %v725
        %865 = vmatprep.subr.mxu0 0.0
        %866 = vmatpush2.msra.mxu0 0.0
        %867 = vmatprep.subr.mxu0 0.0
        %868 = vmatpush2.msra.mxu0 0.0
        %869 = vmatprep.subr.mxu0 0.0
        %870 = vmatpush2.msra.mxu0 0.0
        %871 = vmatprep.subr.mxu0 0.0
        %872 = vmatpush2.msra.mxu0 0.0
        %873 = vmatprep.subr.mxu0 0.0
        %874 = vmatpush2.msra.mxu0 0.0
        %875 = vmatprep.subr.mxu0 0.0
        %876 = vmatpush2.msra.mxu0 0.0
        %877 = vmatprep.subr.mxu0 0.0
        %878 = vmatpush2.msra.mxu0 0.0
        %879 = vmatprep.subr.mxu0 0.0
        %880 = vmatpush2.msra.mxu0 0.0
        %881 = vmatprep.subr.mxu0 0.0
        %882 = vmatpush2.msra.mxu0 0.0
        %883 = vmatprep.subr.mxu0 0.0
        %884 = vmatpush2.msra.mxu0 0.0
        %885 = vmatprep.subr.mxu0 0.0
        %886 = vmatpush2.msra.mxu0 0.0
        %887 = vmatprep.subr.mxu0 0.0
        %888 = vmatpush2.msra.mxu0 0.0
        %889 = vmatprep.subr.mxu0 0.0
        %890 = vmatpush2.msra.mxu0 0.0
        %891 = vmatprep.subr.mxu0 0.0
        %892 = vmatpush2.msra.mxu0 0.0
        %893 = vmatprep.subr.mxu0 0.0
        %894 = vmatpush2.msra.mxu0 0.0
        %895 = vmatprep.subr.mxu0 0.0
        %896 = vmatpush2.msra.mxu0 0.0
        %897 = vmatprep.mubr.f32.mxu0 0.0
        %898 = vmatmul.mubr.f32.gmra.mxu0 %v737
        %v899 = vpop.f32.mrf.mxu0
        %v900 = vadd.f32 0.0, %v899
        %v901 = vpop.f32.mrf.mxu0
        %902 = vmatprep.mubr.f32.mxu0 0.0
        %903 = vmatmul.mubr.f32.gmra.mxu0 %v740
        %v904 = vpop.f32.mrf.mxu0
        %v905 = vadd.f32 0.0, %v904
        %v906 = vpop.f32.mrf.mxu0
        %907 = vmatprep.mubr.f32.mxu0 0.0
        %908 = vmatmul.mubr.f32.gmra.mxu0 %v743
        %v909 = vpop.f32.mrf.mxu0
        %v910 = vadd.f32 0.0, %v909
        %v911 = vpop.f32.mrf.mxu0
        %912 = vmatprep.mubr.f32.mxu0 0.0
        %913 = vmatmul.mubr.f32.gmra.mxu0 %v746
        %v914 = vpop.f32.mrf.mxu0
        %v915 = vadd.f32 0.0, %v914
        %v916 = vpop.f32.mrf.mxu0
        %917 = vdwg.mxu0
        %v918 = vmul.f32 %v815, %v815
        %v919 = vmul.f32 %v820, %v820
        %v920 = vmul.f32 %v825, %v825
        %v921 = vmul.f32 %v830, %v830
        %v922 = vsub.f32 %v900, %v918
        %v923 = vsub.f32 %v905, %v919
        %v924 = vsub.f32 %v910, %v920
        %v925 = vsub.f32 %v915, %v921
        %v926 = vadd.f32 %v922, 1e-05
        %v927 = vadd.f32 %v923, 1e-05
        %v928 = vadd.f32 %v924, 1e-05
        %v929 = vadd.f32 %v925, 1e-05
        %v930 = vrsqrt.pop %v926
        %v931 = vrsqrt.pop %v927
        %v932 = vrsqrt.pop %v928
        %v933 = vrsqrt.pop %v929
        %935 = vset.pattern.permute.xlu0 0
        %936 = vperm.xlu0 %935, %v815
        %v937 = vpop.permute.xlu0 %936
        %940 = vset.pattern.permute.xlu0 0
        %941 = vperm.xlu0 %940, %v820
        %v942 = vpop.permute.xlu0 %941
        %945 = vset.pattern.permute.xlu0 0
        %946 = vperm.xlu0 %945, %v825
        %v947 = vpop.permute.xlu0 %946
        %950 = vset.pattern.permute.xlu0 0
        %951 = vperm.xlu0 %950, %v830
        %v952 = vpop.permute.xlu0 %951
        %v954 = vsub.f32 %v695, %v937
        %v955 = vsub.f32 %v696, %v937
        %v956 = vsub.f32 %v697, %v942
        %v957 = vsub.f32 %v698, %v942
        %v958 = vsub.f32 %v699, %v947
        %v959 = vsub.f32 %v700, %v947
        %v960 = vsub.f32 %v701, %v952
        %v961 = vsub.f32 %v702, %v952
        %v962 = vmul.f32 %v930, %v575
        %v963 = vmul.f32 %v931, %v576
        %v964 = vmul.f32 %v932, %v577
        %v965 = vmul.f32 %v933, %v578
        %967 = vset.pattern.permute.xlu0 0
        %968 = vperm.xlu0 %967, %v962
        %v969 = vpop.permute.xlu0 %968
        %972 = vset.pattern.permute.xlu0 0
        %973 = vperm.xlu0 %972, %v963
        %v974 = vpop.permute.xlu0 %973
        %977 = vset.pattern.permute.xlu0 0
        %978 = vperm.xlu0 %977, %v964
        %v979 = vpop.permute.xlu0 %978
        %982 = vset.pattern.permute.xlu0 0
        %983 = vperm.xlu0 %982, %v965
        %v984 = vpop.permute.xlu0 %983
        %v986 = vmul.f32 %v954, %v969
        %v987 = vmul.f32 %v955, %v969
        %v988 = vmul.f32 %v956, %v974
        %v989 = vmul.f32 %v957, %v974
        %v990 = vmul.f32 %v958, %v979
        %v991 = vmul.f32 %v959, %v979
        %v992 = vmul.f32 %v960, %v984
        %v993 = vmul.f32 %v961, %v984
        %995 = vset.pattern.permute.xlu0 0
        %996 = vperm.xlu0 %995, %v579
        %v997 = vpop.permute.xlu0 %996
        %1000 = vset.pattern.permute.xlu0 0
        %1001 = vperm.xlu0 %1000, %v580
        %v1002 = vpop.permute.xlu0 %1001
        %1005 = vset.pattern.permute.xlu0 0
        %1006 = vperm.xlu0 %1005, %v581
        %v1007 = vpop.permute.xlu0 %1006
        %1010 = vset.pattern.permute.xlu0 0
        %1011 = vperm.xlu0 %1010, %v582
        %v1012 = vpop.permute.xlu0 %1011
        %v1014 = vadd.f32 %v986, %v997
        %v1015 = vadd.f32 %v987, %v997
        %v1016 = vadd.f32 %v988, %v1002
        %v1017 = vadd.f32 %v989, %v1002
        %v1018 = vadd.f32 %v990, %v1007
        %v1019 = vadd.f32 %v991, %v1007
        %v1020 = vadd.f32 %v992, %v1012
        %v1021 = vadd.f32 %v993, %v1012
        %v1022 = vpack.c.bf16 %v1016, %v1014
        %v1023 = vpack.c.bf16 %v1017, %v1015
        %v1024 = vpack.c.bf16 %v1020, %v1018
        %v1025 = vpack.c.bf16 %v1021, %v1019
        %1027 = vset.pattern.permute.xlu0 0
        %1028 = vperm.xlu0 %1027, %v591
        %v1029 = vpop.permute.xlu0 %1028
        %1032 = vset.pattern.permute.xlu0 0
        %1033 = vperm.xlu0 %1032, %v592
        %v1034 = vpop.permute.xlu0 %1033
        %1037 = vset.pattern.permute.xlu0 0
        %1038 = vperm.xlu0 %1037, %v593
        %v1039 = vpop.permute.xlu0 %1038
        %1042 = vset.pattern.permute.xlu0 0
        %1043 = vperm.xlu0 %1042, %v594
        %v1044 = vpop.permute.xlu0 %1043
        %v1050 = vunpack.c.l.b16 %v587
        %v1051 = vunpack.c.l.b16 %v588
        %v1052 = vunpack.c.l.b16 %v589
        %v1053 = vunpack.c.l.b16 %v590
        %v1054 = vpack.c.b16 %v1051, %v1050
        %v1055 = vpack.c.b16 %v1053, %v1052
        %v1057 = vsel %vm735, %v1054, 0
        %v1060 = vsel %vm735, %v1055, 0
        %1062 = vmatprep.subr.bf16.mxu0 0
        %1063 = vmatpush1.bf16.msra.mxu0 0
        %1064 = vmatprep.subr.bf16.mxu0 0
        %1065 = vmatpush1.bf16.msra.mxu0 0
        %1066 = vmatprep.subr.bf16.mxu0 0
        %1067 = vmatpush1.bf16.msra.mxu0 0
        %1068 = vmatprep.subr.bf16.mxu0 0
        %1069 = vmatpush1.bf16.msra.mxu0 0
        %1070 = vmatprep.subr.bf16.mxu0 0
        %1071 = vmatpush1.bf16.msra.mxu0 0
        %1072 = vmatprep.subr.bf16.mxu0 0
        %1073 = vmatpush1.bf16.msra.mxu0 0
        %1074 = vmatprep.subr.bf16.mxu0 %v1025
        %1075 = vmatpush1.bf16.msra.mxu0 %v1024
        %1076 = vmatprep.subr.bf16.mxu0 %v1023
        %1077 = vmatpush1.bf16.msra.mxu0 %v1022
        %1078 = vmatprep.subr.bf16.mxu0 0
        %1079 = vmatpush2.bf16.msra.mxu0 0
        %1080 = vmatprep.subr.bf16.mxu0 0
        %1081 = vmatpush2.bf16.msra.mxu0 0
        %1082 = vmatprep.subr.bf16.mxu0 0
        %1083 = vmatpush2.bf16.msra.mxu0 0
        %1084 = vmatprep.subr.bf16.mxu0 0
        %1085 = vmatpush2.bf16.msra.mxu0 0
        %1086 = vmatprep.subr.bf16.mxu0 0
        %1087 = vmatpush2.bf16.msra.mxu0 0
        %1088 = vmatprep.subr.bf16.mxu0 0
        %1089 = vmatpush2.bf16.msra.mxu0 0
        %1090 = vmatprep.subr.bf16.mxu0 0
        %1091 = vmatpush2.bf16.msra.mxu0 0
        %1092 = vmatprep.subr.bf16.mxu0 0
        %1093 = vmatpush2.bf16.msra.mxu0 0
        %1094 = vmatprep.mubr.bf16.mxu0 0
        %1095 = vmatmul.mubr.bf16.gmra.mxu0 %v1057
        %v1096 = vpop.f32.mrf.mxu0
        %v1097 = vadd.f32 %v1029, %v1096
        %v1098 = vpop.f32.mrf.mxu0
        %v1099 = vadd.f32 %v1029, %v1098
        %v1100 = vpop.f32.mrf.mxu0
        %v1101 = vadd.f32 %v1034, %v1100
        %v1102 = vpop.f32.mrf.mxu0
        %v1103 = vadd.f32 %v1034, %v1102
        %1104 = vmatprep.mubr.bf16.mxu0 0
        %1105 = vmatmul.mubr.bf16.gmra.mxu0 %v1060
        %v1106 = vpop.f32.mrf.mxu0
        %v1107 = vadd.f32 %v1039, %v1106
        %v1108 = vpop.f32.mrf.mxu0
        %v1109 = vadd.f32 %v1039, %v1108
        %v1110 = vpop.f32.mrf.mxu0
        %v1111 = vadd.f32 %v1044, %v1110
        %v1112 = vpop.f32.mrf.mxu0
        %v1113 = vadd.f32 %v1044, %v1112
        %1114 = vdwg.mxu0
        %1116 = vset.pattern.permute.xlu0 0
        %1117 = vperm.xlu0 %1116, %v599
        %v1118 = vpop.permute.xlu0 %1117
        %1121 = vset.pattern.permute.xlu0 0
        %1122 = vperm.xlu0 %1121, %v600
        %v1123 = vpop.permute.xlu0 %1122
        %1126 = vset.pattern.permute.xlu0 0
        %1127 = vperm.xlu0 %1126, %v601
        %v1128 = vpop.permute.xlu0 %1127
        %1131 = vset.pattern.permute.xlu0 0
        %1132 = vperm.xlu0 %1131, %v602
        %v1133 = vpop.permute.xlu0 %1132
        %v1139 = vunpack.c.l.b16 %v595
        %v1140 = vunpack.c.l.b16 %v596
        %v1141 = vunpack.c.l.b16 %v597
        %v1142 = vunpack.c.l.b16 %v598
        %v1143 = vpack.c.b16 %v1140, %v1139
        %v1144 = vpack.c.b16 %v1142, %v1141
        %v1146 = vsel %vm735, %v1143, 0
        %v1149 = vsel %vm735, %v1144, 0
        %1151 = vmatprep.subr.bf16.mxu0 0
        %1152 = vmatpush1.bf16.msra.mxu0 0
        %1153 = vmatprep.subr.bf16.mxu0 0
        %1154 = vmatpush1.bf16.msra.mxu0 0
        %1155 = vmatprep.subr.bf16.mxu0 0
        %1156 = vmatpush1.bf16.msra.mxu0 0
        %1157 = vmatprep.subr.bf16.mxu0 0
        %1158 = vmatpush1.bf16.msra.mxu0 0
        %1159 = vmatprep.subr.bf16.mxu0 0
        %1160 = vmatpush1.bf16.msra.mxu0 0
        %1161 = vmatprep.subr.bf16.mxu0 0
        %1162 = vmatpush1.bf16.msra.mxu0 0
        %1163 = vmatprep.subr.bf16.mxu0 %v1025
        %1164 = vmatpush1.bf16.msra.mxu0 %v1024
        %1165 = vmatprep.subr.bf16.mxu0 %v1023
        %1166 = vmatpush1.bf16.msra.mxu0 %v1022
        %1167 = vmatprep.subr.bf16.mxu0 0
        %1168 = vmatpush2.bf16.msra.mxu0 0
        %1169 = vmatprep.subr.bf16.mxu0 0
        %1170 = vmatpush2.bf16.msra.mxu0 0
        %1171 = vmatprep.subr.bf16.mxu0 0
        %1172 = vmatpush2.bf16.msra.mxu0 0
        %1173 = vmatprep.subr.bf16.mxu0 0
        %1174 = vmatpush2.bf16.msra.mxu0 0
        %1175 = vmatprep.subr.bf16.mxu0 0
        %1176 = vmatpush2.bf16.msra.mxu0 0
        %1177 = vmatprep.subr.bf16.mxu0 0
        %1178 = vmatpush2.bf16.msra.mxu0 0
        %1179 = vmatprep.subr.bf16.mxu0 0
        %1180 = vmatpush2.bf16.msra.mxu0 0
        %1181 = vmatprep.subr.bf16.mxu0 0
        %1182 = vmatpush2.bf16.msra.mxu0 0
        %1183 = vmatprep.mubr.bf16.mxu0 0
        %1184 = vmatmul.mubr.bf16.gmra.mxu0 %v1146
        %v1185 = vpop.f32.mrf.mxu0
        %v1186 = vadd.f32 %v1118, %v1185
        %v1187 = vpop.f32.mrf.mxu0
        %v1188 = vadd.f32 %v1118, %v1187
        %v1189 = vpop.f32.mrf.mxu0
        %v1190 = vadd.f32 %v1123, %v1189
        %v1191 = vpop.f32.mrf.mxu0
        %v1192 = vadd.f32 %v1123, %v1191
        %1193 = vmatprep.mubr.bf16.mxu0 0
        %1194 = vmatmul.mubr.bf16.gmra.mxu0 %v1149
        %v1195 = vpop.f32.mrf.mxu0
        %v1196 = vadd.f32 %v1128, %v1195
        %v1197 = vpop.f32.mrf.mxu0
        %v1198 = vadd.f32 %v1128, %v1197
        %v1199 = vpop.f32.mrf.mxu0
        %v1200 = vadd.f32 %v1133, %v1199
        %v1201 = vpop.f32.mrf.mxu0
        %v1202 = vadd.f32 %v1133, %v1201
        %1203 = vdwg.mxu0
        %1205 = vset.pattern.permute.xlu0 0
        %1206 = vperm.xlu0 %1205, %v607
        %v1207 = vpop.permute.xlu0 %1206
        %1210 = vset.pattern.permute.xlu0 0
        %1211 = vperm.xlu0 %1210, %v608
        %v1212 = vpop.permute.xlu0 %1211
        %1215 = vset.pattern.permute.xlu0 0
        %1216 = vperm.xlu0 %1215, %v609
        %v1217 = vpop.permute.xlu0 %1216
        %1220 = vset.pattern.permute.xlu0 0
        %1221 = vperm.xlu0 %1220, %v610
        %v1222 = vpop.permute.xlu0 %1221
        %v1228 = vunpack.c.l.b16 %v603
        %v1229 = vunpack.c.l.b16 %v604
        %v1230 = vunpack.c.l.b16 %v605
        %v1231 = vunpack.c.l.b16 %v606
        %v1232 = vpack.c.b16 %v1229, %v1228
        %v1233 = vpack.c.b16 %v1231, %v1230
        %v1235 = vsel %vm735, %v1232, 0
        %v1238 = vsel %vm735, %v1233, 0
        %1240 = vmatprep.subr.bf16.mxu0 0
        %1241 = vmatpush1.bf16.msra.mxu0 0
        %1242 = vmatprep.subr.bf16.mxu0 0
        %1243 = vmatpush1.bf16.msra.mxu0 0
        %1244 = vmatprep.subr.bf16.mxu0 0
        %1245 = vmatpush1.bf16.msra.mxu0 0
        %1246 = vmatprep.subr.bf16.mxu0 0
        %1247 = vmatpush1.bf16.msra.mxu0 0
        %1248 = vmatprep.subr.bf16.mxu0 0
        %1249 = vmatpush1.bf16.msra.mxu0 0
        %1250 = vmatprep.subr.bf16.mxu0 0
        %1251 = vmatpush1.bf16.msra.mxu0 0
        %1252 = vmatprep.subr.bf16.mxu0 %v1025
        %1253 = vmatpush1.bf16.msra.mxu0 %v1024
        %1254 = vmatprep.subr.bf16.mxu0 %v1023
        %1255 = vmatpush1.bf16.msra.mxu0 %v1022
        %1256 = vmatprep.subr.bf16.mxu0 0
        %1257 = vmatpush2.bf16.msra.mxu0 0
        %1258 = vmatprep.subr.bf16.mxu0 0
        %1259 = vmatpush2.bf16.msra.mxu0 0
        %1260 = vmatprep.subr.bf16.mxu0 0
        %1261 = vmatpush2.bf16.msra.mxu0 0
        %1262 = vmatprep.subr.bf16.mxu0 0
        %1263 = vmatpush2.bf16.msra.mxu0 0
        %1264 = vmatprep.subr.bf16.mxu0 0
        %1265 = vmatpush2.bf16.msra.mxu0 0
        %1266 = vmatprep.subr.bf16.mxu0 0
        %1267 = vmatpush2.bf16.msra.mxu0 0
        %1268 = vmatprep.subr.bf16.mxu0 0
        %1269 = vmatpush2.bf16.msra.mxu0 0
        %1270 = vmatprep.subr.bf16.mxu0 0
        %1271 = vmatpush2.bf16.msra.mxu0 0
        %1272 = vmatprep.mubr.bf16.mxu0 0
        %1273 = vmatmul.mubr.bf16.gmra.mxu0 %v1235
        %v1274 = vpop.f32.mrf.mxu0
        %v1275 = vadd.f32 %v1207, %v1274
        %v1276 = vpop.f32.mrf.mxu0
        %v1277 = vadd.f32 %v1207, %v1276
        %v1278 = vpop.f32.mrf.mxu0
        %v1279 = vadd.f32 %v1212, %v1278
        %v1280 = vpop.f32.mrf.mxu0
        %v1281 = vadd.f32 %v1212, %v1280
        %1282 = vmatprep.mubr.bf16.mxu0 0
        %1283 = vmatmul.mubr.bf16.gmra.mxu0 %v1238
        %v1284 = vpop.f32.mrf.mxu0
        %v1285 = vadd.f32 %v1217, %v1284
        %v1286 = vpop.f32.mrf.mxu0
        %v1287 = vadd.f32 %v1217, %v1286
        %v1288 = vpop.f32.mrf.mxu0
        %v1289 = vadd.f32 %v1222, %v1288
        %v1290 = vpop.f32.mrf.mxu0
        %v1291 = vadd.f32 %v1222, %v1290
        %1292 = vdwg.mxu0
        %1294 = vset.pattern.permute.xlu0 0
        %1295 = vperm.xlu0 %1294, %v611
        %v1296 = vpop.permute.xlu0 %1295
        %1299 = vset.pattern.permute.xlu0 0
        %1300 = vperm.xlu0 %1299, %v612
        %v1301 = vpop.permute.xlu0 %1300
        %1304 = vset.pattern.permute.xlu0 0
        %1305 = vperm.xlu0 %1304, %v613
        %v1306 = vpop.permute.xlu0 %1305
        %1309 = vset.pattern.permute.xlu0 0
        %1310 = vperm.xlu0 %1309, %v614
        %v1311 = vpop.permute.xlu0 %1310
        %v1313 = vadd.f32 %v695, %v1296
        %v1314 = vadd.f32 %v696, %v1296
        %v1315 = vadd.f32 %v697, %v1301
        %v1316 = vadd.f32 %v698, %v1301
        %v1317 = vadd.f32 %v699, %v1306
        %v1318 = vadd.f32 %v700, %v1306
        %v1319 = vadd.f32 %v701, %v1311
        %v1320 = vadd.f32 %v702, %v1311
        %v1321 = vpack.c.bf16 %v1101, %v1097
        %v1322 = vpack.c.bf16 %v1103, %v1099
        %v1323 = vpack.c.bf16 %v1190, %v1186
        %v1324 = vpack.c.bf16 %v1192, %v1188
        %v1325 = vpack.c.bf16 %v1279, %v1275
        %v1326 = vpack.c.bf16 %v1281, %v1277
        %1327 = vxpose.xlu0.c.b16.start [1/8] %v1321, 128
        %1328 = vxpose.xlu0.c.b16.cont [2/8] 0, 128
        %1329 = vxpose.xlu0.c.b16.cont [3/8] 0, 128
        %1330 = vxpose.xlu0.c.b16.cont [4/8] 0, 128
        %1331 = vxpose.xlu0.c.b16.cont [5/8] 0, 128
        %1332 = vxpose.xlu0.c.b16.cont [6/8] 0, 128
        %1333 = vxpose.xlu0.c.b16.cont [7/8] 0, 128
        %1334 = vxpose.xlu0.c.b16.end [8/8] 0, 128
        %v1335 = vpop.trf.xlu0
        %v1336 = vpop.trf.xlu0
        %v1337 = vpop.trf.xlu0
        %v1338 = vpop.trf.xlu0
        %v1339 = vpop.trf.xlu0
        %v1340 = vpop.trf.xlu0
        %v1341 = vpop.trf.xlu0
        %v1342 = vpop.trf.xlu0
        %1343 = vxpose.xlu0.c.b16.start [1/8] %v1322, 128
        %1344 = vxpose.xlu0.c.b16.cont [2/8] 0, 128
        %1345 = vxpose.xlu0.c.b16.cont [3/8] 0, 128
        %1346 = vxpose.xlu0.c.b16.cont [4/8] 0, 128
        %1347 = vxpose.xlu0.c.b16.cont [5/8] 0, 128
        %1348 = vxpose.xlu0.c.b16.cont [6/8] 0, 128
        %1349 = vxpose.xlu0.c.b16.cont [7/8] 0, 128
        %1350 = vxpose.xlu0.c.b16.end [8/8] 0, 128
        %v1351 = vpop.trf.xlu0
        %v1352 = vpop.trf.xlu0
        %v1353 = vpop.trf.xlu0
        %v1354 = vpop.trf.xlu0
        %v1355 = vpop.trf.xlu0
        %v1356 = vpop.trf.xlu0
        %v1357 = vpop.trf.xlu0
        %v1358 = vpop.trf.xlu0
        %vm1359 = vcmask 130048
        %v1361 = vsel %vm1359, %v1335, 0
        %v1364 = vsel %vm1359, %v1336, 0
        %v1367 = vsel %vm1359, %v1337, 0
        %v1370 = vsel %vm1359, %v1338, 0
        %v1373 = vsel %vm1359, %v1339, 0
        %v1376 = vsel %vm1359, %v1340, 0
        %v1379 = vsel %vm1359, %v1341, 0
        %v1382 = vsel %vm1359, %v1342, 0
        %v1385 = vsel %vm1359, %v1351, 0
        %v1388 = vsel %vm1359, %v1352, 0
        %v1391 = vsel %vm1359, %v1353, 0
        %v1394 = vsel %vm1359, %v1354, 0
        %v1397 = vsel %vm1359, %v1355, 0
        %v1400 = vsel %vm1359, %v1356, 0
        %v1403 = vsel %vm1359, %v1357, 0
        %v1406 = vsel %vm1359, %v1358, 0
        %1408 = vmatprep.subr.bf16.mxu0 0
        %1409 = vmatpush1.bf16.msra.mxu0 0
        %1410 = vmatprep.subr.bf16.mxu0 0
        %1411 = vmatpush1.bf16.msra.mxu0 0
        %1412 = vmatprep.subr.bf16.mxu0 0
        %1413 = vmatpush1.bf16.msra.mxu0 0
        %1414 = vmatprep.subr.bf16.mxu0 0
        %1415 = vmatpush1.bf16.msra.mxu0 0
        %1416 = vmatprep.subr.bf16.mxu0 0
        %1417 = vmatpush1.bf16.msra.mxu0 0
        %1418 = vmatprep.subr.bf16.mxu0 0
        %1419 = vmatpush1.bf16.msra.mxu0 0
        %1420 = vmatprep.subr.bf16.mxu0 0
        %1421 = vmatpush1.bf16.msra.mxu0 0
        %1422 = vmatprep.subr.bf16.mxu0 %v1324
        %1423 = vmatpush1.bf16.msra.mxu0 %v1323
        %1424 = vmatprep.subr.bf16.mxu0 0
        %1425 = vmatpush2.bf16.msra.mxu0 0
        %1426 = vmatprep.subr.bf16.mxu0 0
        %1427 = vmatpush2.bf16.msra.mxu0 0
        %1428 = vmatprep.subr.bf16.mxu0 0
        %1429 = vmatpush2.bf16.msra.mxu0 0
        %1430 = vmatprep.subr.bf16.mxu0 0
        %1431 = vmatpush2.bf16.msra.mxu0 0
        %1432 = vmatprep.subr.bf16.mxu0 0
        %1433 = vmatpush2.bf16.msra.mxu0 0
        %1434 = vmatprep.subr.bf16.mxu0 0
        %1435 = vmatpush2.bf16.msra.mxu0 0
        %1436 = vmatprep.subr.bf16.mxu0 0
        %1437 = vmatpush2.bf16.msra.mxu0 0
        %1438 = vmatprep.subr.bf16.mxu0 0
        %1439 = vmatpush2.bf16.msra.mxu0 0
        %1440 = vmatprep.mubr.bf16.mxu0 0
        %1441 = vmatmul.mubr.bf16.gmra.mxu0 %v1361
        %v1442 = vpop.f32.mrf.mxu0
        %v1443 = vadd.f32 0.0, %v1442
        %v1444 = vpop.f32.mrf.mxu0
        %v1445 = vadd.f32 0.0, %v1444
        %v1446 = vpop.f32.mrf.mxu0
        %v1447 = vadd.f32 0.0, %v1446
        %v1448 = vpop.f32.mrf.mxu0
        %v1449 = vadd.f32 0.0, %v1448
        %1450 = vmatprep.mubr.bf16.mxu0 0
        %1451 = vmatmul.mubr.bf16.gmra.mxu0 %v1364
        %v1452 = vpop.f32.mrf.mxu0
        %v1453 = vadd.f32 0.0, %v1452
        %v1454 = vpop.f32.mrf.mxu0
        %v1455 = vadd.f32 0.0, %v1454
        %v1456 = vpop.f32.mrf.mxu0
        %v1457 = vadd.f32 0.0, %v1456
        %v1458 = vpop.f32.mrf.mxu0
        %v1459 = vadd.f32 0.0, %v1458
        %1460 = vmatprep.mubr.bf16.mxu0 0
        %1461 = vmatmul.mubr.bf16.gmra.mxu0 %v1367
        %v1462 = vpop.f32.mrf.mxu0
        %v1463 = vadd.f32 0.0, %v1462
        %v1464 = vpop.f32.mrf.mxu0
        %v1465 = vadd.f32 0.0, %v1464
        %v1466 = vpop.f32.mrf.mxu0
        %v1467 = vadd.f32 0.0, %v1466
        %v1468 = vpop.f32.mrf.mxu0
        %v1469 = vadd.f32 0.0, %v1468
        %1470 = vmatprep.mubr.bf16.mxu0 0
        %1471 = vmatmul.mubr.bf16.gmra.mxu0 %v1370
        %v1472 = vpop.f32.mrf.mxu0
        %v1473 = vadd.f32 0.0, %v1472
        %v1474 = vpop.f32.mrf.mxu0
        %v1475 = vadd.f32 0.0, %v1474
        %v1476 = vpop.f32.mrf.mxu0
        %v1477 = vadd.f32 0.0, %v1476
        %v1478 = vpop.f32.mrf.mxu0
        %v1479 = vadd.f32 0.0, %v1478
        %1480 = vmatprep.mubr.bf16.mxu0 0
        %1481 = vmatmul.mubr.bf16.gmra.mxu0 %v1373
        %v1482 = vpop.f32.mrf.mxu0
        %v1483 = vadd.f32 0.0, %v1482
        %v1484 = vpop.f32.mrf.mxu0
        %v1485 = vadd.f32 0.0, %v1484
        %v1486 = vpop.f32.mrf.mxu0
        %v1487 = vadd.f32 0.0, %v1486
        %v1488 = vpop.f32.mrf.mxu0
        %v1489 = vadd.f32 0.0, %v1488
        %1490 = vmatprep.mubr.bf16.mxu0 0
        %1491 = vmatmul.mubr.bf16.gmra.mxu0 %v1376
        %v1492 = vpop.f32.mrf.mxu0
        %v1493 = vadd.f32 0.0, %v1492
        %v1494 = vpop.f32.mrf.mxu0
        %v1495 = vadd.f32 0.0, %v1494
        %v1496 = vpop.f32.mrf.mxu0
        %v1497 = vadd.f32 0.0, %v1496
        %v1498 = vpop.f32.mrf.mxu0
        %v1499 = vadd.f32 0.0, %v1498
        %1500 = vmatprep.mubr.bf16.mxu0 0
        %1501 = vmatmul.mubr.bf16.gmra.mxu0 %v1379
        %v1502 = vpop.f32.mrf.mxu0
        %v1503 = vadd.f32 0.0, %v1502
        %v1504 = vpop.f32.mrf.mxu0
        %v1505 = vadd.f32 0.0, %v1504
        %v1506 = vpop.f32.mrf.mxu0
        %v1507 = vadd.f32 0.0, %v1506
        %v1508 = vpop.f32.mrf.mxu0
        %v1509 = vadd.f32 0.0, %v1508
        %1510 = vmatprep.mubr.bf16.mxu0 0
        %1511 = vmatmul.mubr.bf16.gmra.mxu0 %v1382
        %v1512 = vpop.f32.mrf.mxu0
        %v1513 = vadd.f32 0.0, %v1512
        %v1514 = vpop.f32.mrf.mxu0
        %v1515 = vadd.f32 0.0, %v1514
        %v1516 = vpop.f32.mrf.mxu0
        %v1517 = vadd.f32 0.0, %v1516
        %v1518 = vpop.f32.mrf.mxu0
        %v1519 = vadd.f32 0.0, %v1518
        %1520 = vmatprep.mubr.bf16.mxu0 0
        %1521 = vmatmul.mubr.bf16.gmra.mxu0 %v1385
        %v1522 = vpop.f32.mrf.mxu0
        %v1523 = vadd.f32 0.0, %v1522
        %v1524 = vpop.f32.mrf.mxu0
        %v1525 = vadd.f32 0.0, %v1524
        %v1526 = vpop.f32.mrf.mxu0
        %v1527 = vadd.f32 0.0, %v1526
        %v1528 = vpop.f32.mrf.mxu0
        %v1529 = vadd.f32 0.0, %v1528
        %1530 = vmatprep.mubr.bf16.mxu0 0
        %1531 = vmatmul.mubr.bf16.gmra.mxu0 %v1388
        %v1532 = vpop.f32.mrf.mxu0
        %v1533 = vadd.f32 0.0, %v1532
        %v1534 = vpop.f32.mrf.mxu0
        %v1535 = vadd.f32 0.0, %v1534
        %v1536 = vpop.f32.mrf.mxu0
        %v1537 = vadd.f32 0.0, %v1536
        %v1538 = vpop.f32.mrf.mxu0
        %v1539 = vadd.f32 0.0, %v1538
        %1540 = vmatprep.mubr.bf16.mxu0 0
        %1541 = vmatmul.mubr.bf16.gmra.mxu0 %v1391
        %v1542 = vpop.f32.mrf.mxu0
        %v1543 = vadd.f32 0.0, %v1542
        %v1544 = vpop.f32.mrf.mxu0
        %v1545 = vadd.f32 0.0, %v1544
        %v1546 = vpop.f32.mrf.mxu0
        %v1547 = vadd.f32 0.0, %v1546
        %v1548 = vpop.f32.mrf.mxu0
        %v1549 = vadd.f32 0.0, %v1548
        %1550 = vmatprep.mubr.bf16.mxu0 0
        %1551 = vmatmul.mubr.bf16.gmra.mxu0 %v1394
        %v1552 = vpop.f32.mrf.mxu0
        %v1553 = vadd.f32 0.0, %v1552
        %v1554 = vpop.f32.mrf.mxu0
        %v1555 = vadd.f32 0.0, %v1554
        %v1556 = vpop.f32.mrf.mxu0
        %v1557 = vadd.f32 0.0, %v1556
        %v1558 = vpop.f32.mrf.mxu0
        %v1559 = vadd.f32 0.0, %v1558
        %1560 = vmatprep.mubr.bf16.mxu0 0
        %1561 = vmatmul.mubr.bf16.gmra.mxu0 %v1397
        %v1562 = vpop.f32.mrf.mxu0
        %v1563 = vadd.f32 0.0, %v1562
        %v1564 = vpop.f32.mrf.mxu0
        %v1565 = vadd.f32 0.0, %v1564
        %v1566 = vpop.f32.mrf.mxu0
        %v1567 = vadd.f32 0.0, %v1566
        %v1568 = vpop.f32.mrf.mxu0
        %v1569 = vadd.f32 0.0, %v1568
        %1570 = vmatprep.mubr.bf16.mxu0 0
        %1571 = vmatmul.mubr.bf16.gmra.mxu0 %v1400
        %v1572 = vpop.f32.mrf.mxu0
        %v1573 = vadd.f32 0.0, %v1572
        %v1574 = vpop.f32.mrf.mxu0
        %v1575 = vadd.f32 0.0, %v1574
        %v1576 = vpop.f32.mrf.mxu0
        %v1577 = vadd.f32 0.0, %v1576
        %v1578 = vpop.f32.mrf.mxu0
        %v1579 = vadd.f32 0.0, %v1578
        %1580 = vmatprep.mubr.bf16.mxu0 0
        %1581 = vmatmul.mubr.bf16.gmra.mxu0 %v1403
        %v1582 = vpop.f32.mrf.mxu0
        %v1583 = vadd.f32 0.0, %v1582
        %v1584 = vpop.f32.mrf.mxu0
        %v1585 = vadd.f32 0.0, %v1584
        %v1586 = vpop.f32.mrf.mxu0
        %v1587 = vadd.f32 0.0, %v1586
        %v1588 = vpop.f32.mrf.mxu0
        %v1589 = vadd.f32 0.0, %v1588
        %1590 = vmatprep.mubr.bf16.mxu0 0
        %1591 = vmatmul.mubr.bf16.gmra.mxu0 %v1406
        %v1592 = vpop.f32.mrf.mxu0
        %v1593 = vadd.f32 0.0, %v1592
        %v1594 = vpop.f32.mrf.mxu0
        %v1595 = vadd.f32 0.0, %v1594
        %v1596 = vpop.f32.mrf.mxu0
        %v1597 = vadd.f32 0.0, %v1596
        %v1598 = vpop.f32.mrf.mxu0
        %v1599 = vadd.f32 0.0, %v1598
        %1600 = vdwg.mxu0
        %v1601 = vmax.f32 %v1443, %v1445
        %1602 = vmax.xlane.f32.xlu0 %v1601
        %v1603 = vpop.xlane.xlu0 %1602
        %v1604 = vmax.f32 %v1447, %v1449
        %1605 = vmax.xlane.f32.xlu0 %v1604
        %v1606 = vpop.xlane.xlu0 %1605
        %v1607 = vmax.f32 %v1453, %v1455
        %1608 = vmax.xlane.f32.xlu0 %v1607
        %v1609 = vpop.xlane.xlu0 %1608
        %v1610 = vmax.f32 %v1457, %v1459
        %1611 = vmax.xlane.f32.xlu0 %v1610
        %v1612 = vpop.xlane.xlu0 %1611
        %v1613 = vmax.f32 %v1463, %v1465
        %1614 = vmax.xlane.f32.xlu0 %v1613
        %v1615 = vpop.xlane.xlu0 %1614
        %v1616 = vmax.f32 %v1467, %v1469
        %1617 = vmax.xlane.f32.xlu0 %v1616
        %v1618 = vpop.xlane.xlu0 %1617
        %v1619 = vmax.f32 %v1473, %v1475
        %1620 = vmax.xlane.f32.xlu0 %v1619
        %v1621 = vpop.xlane.xlu0 %1620
        %v1622 = vmax.f32 %v1477, %v1479
        %1623 = vmax.xlane.f32.xlu0 %v1622
        %v1624 = vpop.xlane.xlu0 %1623
        %v1625 = vmax.f32 %v1483, %v1485
        %1626 = vmax.xlane.f32.xlu0 %v1625
        %v1627 = vpop.xlane.xlu0 %1626
        %v1628 = vmax.f32 %v1487, %v1489
        %1629 = vmax.xlane.f32.xlu0 %v1628
        %v1630 = vpop.xlane.xlu0 %1629
        %v1631 = vmax.f32 %v1493, %v1495
        %1632 = vmax.xlane.f32.xlu0 %v1631
        %v1633 = vpop.xlane.xlu0 %1632
        %v1634 = vmax.f32 %v1497, %v1499
        %1635 = vmax.xlane.f32.xlu0 %v1634
        %v1636 = vpop.xlane.xlu0 %1635
        %v1637 = vmax.f32 %v1503, %v1505
        %1638 = vmax.xlane.f32.xlu0 %v1637
        %v1639 = vpop.xlane.xlu0 %1638
        %v1640 = vmax.f32 %v1507, %v1509
        %1641 = vmax.xlane.f32.xlu0 %v1640
        %v1642 = vpop.xlane.xlu0 %1641
        %v1643 = vmax.f32 %v1513, %v1515
        %1644 = vmax.xlane.f32.xlu0 %v1643
        %v1645 = vpop.xlane.xlu0 %1644
        %v1646 = vmax.f32 %v1517, %v1519
        %1647 = vmax.xlane.f32.xlu0 %v1646
        %v1648 = vpop.xlane.xlu0 %1647
        %v1649 = vmax.f32 %v1523, %v1525
        %1650 = vmax.xlane.f32.xlu0 %v1649
        %v1651 = vpop.xlane.xlu0 %1650
        %v1652 = vmax.f32 %v1527, %v1529
        %1653 = vmax.xlane.f32.xlu0 %v1652
        %v1654 = vpop.xlane.xlu0 %1653
        %v1655 = vmax.f32 %v1533, %v1535
        %1656 = vmax.xlane.f32.xlu0 %v1655
        %v1657 = vpop.xlane.xlu0 %1656
        %v1658 = vmax.f32 %v1537, %v1539
        %1659 = vmax.xlane.f32.xlu0 %v1658
        %v1660 = vpop.xlane.xlu0 %1659
        %v1661 = vmax.f32 %v1543, %v1545
        %1662 = vmax.xlane.f32.xlu0 %v1661
        %v1663 = vpop.xlane.xlu0 %1662
        %v1664 = vmax.f32 %v1547, %v1549
        %1665 = vmax.xlane.f32.xlu0 %v1664
        %v1666 = vpop.xlane.xlu0 %1665
        %v1667 = vmax.f32 %v1553, %v1555
        %1668 = vmax.xlane.f32.xlu0 %v1667
        %v1669 = vpop.xlane.xlu0 %1668
        %v1670 = vmax.f32 %v1557, %v1559
        %1671 = vmax.xlane.f32.xlu0 %v1670
        %v1672 = vpop.xlane.xlu0 %1671
        %v1673 = vmax.f32 %v1563, %v1565
        %1674 = vmax.xlane.f32.xlu0 %v1673
        %v1675 = vpop.xlane.xlu0 %1674
        %v1676 = vmax.f32 %v1567, %v1569
        %1677 = vmax.xlane.f32.xlu0 %v1676
        %v1678 = vpop.xlane.xlu0 %1677
        %v1679 = vmax.f32 %v1573, %v1575
        %1680 = vmax.xlane.f32.xlu0 %v1679
        %v1681 = vpop.xlane.xlu0 %1680
        %v1682 = vmax.f32 %v1577, %v1579
        %1683 = vmax.xlane.f32.xlu0 %v1682
        %v1684 = vpop.xlane.xlu0 %1683
        %v1685 = vmax.f32 %v1583, %v1585
        %1686 = vmax.xlane.f32.xlu0 %v1685
        %v1687 = vpop.xlane.xlu0 %1686
        %v1688 = vmax.f32 %v1587, %v1589
        %1689 = vmax.xlane.f32.xlu0 %v1688
        %v1690 = vpop.xlane.xlu0 %1689
        %v1691 = vmax.f32 %v1593, %v1595
        %1692 = vmax.xlane.f32.xlu0 %v1691
        %v1693 = vpop.xlane.xlu0 %1692
        %v1694 = vmax.f32 %v1597, %v1599
        %1695 = vmax.xlane.f32.xlu0 %v1694
        %v1696 = vpop.xlane.xlu0 %1695
        %v1697 = vsub.f32 %v1443, %v1603
        %v1698 = vsub.f32 %v1445, %v1603
        %v1699 = vsub.f32 %v1447, %v1606
        %v1700 = vsub.f32 %v1449, %v1606
        %v1701 = vsub.f32 %v1453, %v1609
        %v1702 = vsub.f32 %v1455, %v1609
        %v1703 = vsub.f32 %v1457, %v1612
        %v1704 = vsub.f32 %v1459, %v1612
        %v1705 = vsub.f32 %v1463, %v1615
        %v1706 = vsub.f32 %v1465, %v1615
        %v1707 = vsub.f32 %v1467, %v1618
        %v1708 = vsub.f32 %v1469, %v1618
        %v1709 = vsub.f32 %v1473, %v1621
        %v1710 = vsub.f32 %v1475, %v1621
        %v1711 = vsub.f32 %v1477, %v1624
        %v1712 = vsub.f32 %v1479, %v1624
        %v1713 = vsub.f32 %v1483, %v1627
        %v1714 = vsub.f32 %v1485, %v1627
        %v1715 = vsub.f32 %v1487, %v1630
        %v1716 = vsub.f32 %v1489, %v1630
        %v1717 = vsub.f32 %v1493, %v1633
        %v1718 = vsub.f32 %v1495, %v1633
        %v1719 = vsub.f32 %v1497, %v1636
        %v1720 = vsub.f32 %v1499, %v1636
        %v1721 = vsub.f32 %v1503, %v1639
        %v1722 = vsub.f32 %v1505, %v1639
        %v1723 = vsub.f32 %v1507, %v1642
        %v1724 = vsub.f32 %v1509, %v1642
        %v1725 = vsub.f32 %v1513, %v1645
        %v1726 = vsub.f32 %v1515, %v1645
        %v1727 = vsub.f32 %v1517, %v1648
        %v1728 = vsub.f32 %v1519, %v1648
        %v1729 = vsub.f32 %v1523, %v1651
        %v1730 = vsub.f32 %v1525, %v1651
        %v1731 = vsub.f32 %v1527, %v1654
        %v1732 = vsub.f32 %v1529, %v1654
        %v1733 = vsub.f32 %v1533, %v1657
        %v1734 = vsub.f32 %v1535, %v1657
        %v1735 = vsub.f32 %v1537, %v1660
        %v1736 = vsub.f32 %v1539, %v1660
        %v1737 = vsub.f32 %v1543, %v1663
        %v1738 = vsub.f32 %v1545, %v1663
        %v1739 = vsub.f32 %v1547, %v1666
        %v1740 = vsub.f32 %v1549, %v1666
        %v1741 = vsub.f32 %v1553, %v1669
        %v1742 = vsub.f32 %v1555, %v1669
        %v1743 = vsub.f32 %v1557, %v1672
        %v1744 = vsub.f32 %v1559, %v1672
        %v1745 = vsub.f32 %v1563, %v1675
        %v1746 = vsub.f32 %v1565, %v1675
        %v1747 = vsub.f32 %v1567, %v1678
        %v1748 = vsub.f32 %v1569, %v1678
        %v1749 = vsub.f32 %v1573, %v1681
        %v1750 = vsub.f32 %v1575, %v1681
        %v1751 = vsub.f32 %v1577, %v1684
        %v1752 = vsub.f32 %v1579, %v1684
        %v1753 = vsub.f32 %v1583, %v1687
        %v1754 = vsub.f32 %v1585, %v1687
        %v1755 = vsub.f32 %v1587, %v1690
        %v1756 = vsub.f32 %v1589, %v1690
        %v1757 = vsub.f32 %v1593, %v1693
        %v1758 = vsub.f32 %v1595, %v1693
        %v1759 = vsub.f32 %v1597, %v1696
        %v1760 = vsub.f32 %v1599, %v1696
        %v1761 = vmul.f32 %v1697, 1.442695
        %v1762 = vpow.pop %v1761
        %v1763 = vmul.f32 %v1698, 1.442695
        %v1764 = vpow.pop %v1763
        %v1765 = vmul.f32 %v1699, 1.442695
        %v1766 = vpow.pop %v1765
        %v1767 = vmul.f32 %v1700, 1.442695
        %v1768 = vpow.pop %v1767
        %v1769 = vmul.f32 %v1701, 1.442695
        %v1770 = vpow.pop %v1769
        %v1771 = vmul.f32 %v1702, 1.442695
        %v1772 = vpow.pop %v1771
        %v1773 = vmul.f32 %v1703, 1.442695
        %v1774 = vpow.pop %v1773
        %v1775 = vmul.f32 %v1704, 1.442695
        %v1776 = vpow.pop %v1775
        %v1777 = vmul.f32 %v1705, 1.442695
        %v1778 = vpow.pop %v1777
        %v1779 = vmul.f32 %v1706, 1.442695
        %v1780 = vpow.pop %v1779
        %v1781 = vmul.f32 %v1707, 1.442695
        %v1782 = vpow.pop %v1781
        %v1783 = vmul.f32 %v1708, 1.442695
        %v1784 = vpow.pop %v1783
        %v1785 = vmul.f32 %v1709, 1.442695
        %v1786 = vpow.pop %v1785
        %v1787 = vmul.f32 %v1710, 1.442695
        %v1788 = vpow.pop %v1787
        %v1789 = vmul.f32 %v1711, 1.442695
        %v1790 = vpow.pop %v1789
        %v1791 = vmul.f32 %v1712, 1.442695
        %v1792 = vpow.pop %v1791
        %v1793 = vmul.f32 %v1713, 1.442695
        %v1794 = vpow.pop %v1793
        %v1795 = vmul.f32 %v1714, 1.442695
        %v1796 = vpow.pop %v1795
        %v1797 = vmul.f32 %v1715, 1.442695
        %v1798 = vpow.pop %v1797
        %v1799 = vmul.f32 %v1716, 1.442695
        %v1800 = vpow.pop %v1799
        %v1801 = vmul.f32 %v1717, 1.442695
        %v1802 = vpow.pop %v1801
        %v1803 = vmul.f32 %v1718, 1.442695
        %v1804 = vpow.pop %v1803
        %v1805 = vmul.f32 %v1719, 1.442695
        %v1806 = vpow.pop %v1805
        %v1807 = vmul.f32 %v1720, 1.442695
        %v1808 = vpow.pop %v1807
        %v1809 = vmul.f32 %v1721, 1.442695
        %v1810 = vpow.pop %v1809
        %v1811 = vmul.f32 %v1722, 1.442695
        %v1812 = vpow.pop %v1811
        %v1813 = vmul.f32 %v1723, 1.442695
        %v1814 = vpow.pop %v1813
        %v1815 = vmul.f32 %v1724, 1.442695
        %v1816 = vpow.pop %v1815
        %v1817 = vmul.f32 %v1725, 1.442695
        %v1818 = vpow.pop %v1817
        %v1819 = vmul.f32 %v1726, 1.442695
        %v1820 = vpow.pop %v1819
        %v1821 = vmul.f32 %v1727, 1.442695
        %v1822 = vpow.pop %v1821
        %v1823 = vmul.f32 %v1728, 1.442695
        %v1824 = vpow.pop %v1823
        %v1825 = vmul.f32 %v1729, 1.442695
        %v1826 = vpow.pop %v1825
        %v1827 = vmul.f32 %v1730, 1.442695
        %v1828 = vpow.pop %v1827
        %v1829 = vmul.f32 %v1731, 1.442695
        %v1830 = vpow.pop %v1829
        %v1831 = vmul.f32 %v1732, 1.442695
        %v1832 = vpow.pop %v1831
        %v1833 = vmul.f32 %v1733, 1.442695
        %v1834 = vpow.pop %v1833
        %v1835 = vmul.f32 %v1734, 1.442695
        %v1836 = vpow.pop %v1835
        %v1837 = vmul.f32 %v1735, 1.442695
        %v1838 = vpow.pop %v1837
        %v1839 = vmul.f32 %v1736, 1.442695
        %v1840 = vpow.pop %v1839
        %v1841 = vmul.f32 %v1737, 1.442695
        %v1842 = vpow.pop %v1841
        %v1843 = vmul.f32 %v1738, 1.442695
        %v1844 = vpow.pop %v1843
        %v1845 = vmul.f32 %v1739, 1.442695
        %v1846 = vpow.pop %v1845
        %v1847 = vmul.f32 %v1740, 1.442695
        %v1848 = vpow.pop %v1847
        %v1849 = vmul.f32 %v1741, 1.442695
        %v1850 = vpow.pop %v1849
        %v1851 = vmul.f32 %v1742, 1.442695
        %v1852 = vpow.pop %v1851
        %v1853 = vmul.f32 %v1743, 1.442695
        %v1854 = vpow.pop %v1853
        %v1855 = vmul.f32 %v1744, 1.442695
        %v1856 = vpow.pop %v1855
        %v1857 = vmul.f32 %v1745, 1.442695
        %v1858 = vpow.pop %v1857
        %v1859 = vmul.f32 %v1746, 1.442695
        %v1860 = vpow.pop %v1859
        %v1861 = vmul.f32 %v1747, 1.442695
        %v1862 = vpow.pop %v1861
        %v1863 = vmul.f32 %v1748, 1.442695
        %v1864 = vpow.pop %v1863
        %v1865 = vmul.f32 %v1749, 1.442695
        %v1866 = vpow.pop %v1865
        %v1867 = vmul.f32 %v1750, 1.442695
        %v1868 = vpow.pop %v1867
        %v1869 = vmul.f32 %v1751, 1.442695
        %v1870 = vpow.pop %v1869
        %v1871 = vmul.f32 %v1752, 1.442695
        %v1872 = vpow.pop %v1871
        %v1873 = vmul.f32 %v1753, 1.442695
        %v1874 = vpow.pop %v1873
        %v1875 = vmul.f32 %v1754, 1.442695
        %v1876 = vpow.pop %v1875
        %v1877 = vmul.f32 %v1755, 1.442695
        %v1878 = vpow.pop %v1877
        %v1879 = vmul.f32 %v1756, 1.442695
        %v1880 = vpow.pop %v1879
        %v1881 = vmul.f32 %v1757, 1.442695
        %v1882 = vpow.pop %v1881
        %v1883 = vmul.f32 %v1758, 1.442695
        %v1884 = vpow.pop %v1883
        %v1885 = vmul.f32 %v1759, 1.442695
        %v1886 = vpow.pop %v1885
        %v1887 = vmul.f32 %v1760, 1.442695
        %v1888 = vpow.pop %v1887
        %v1889 = vadd.f32 %v1762, %v1764
        %1890 = vadd.xlane.f32.xlu0 %v1889
        %v1891 = vpop.xlane.xlu0 %1890
        %v1892 = vadd.f32 %v1766, %v1768
        %1893 = vadd.xlane.f32.xlu0 %v1892
        %v1894 = vpop.xlane.xlu0 %1893
        %v1895 = vadd.f32 %v1770, %v1772
        %1896 = vadd.xlane.f32.xlu0 %v1895
        %v1897 = vpop.xlane.xlu0 %1896
        %v1898 = vadd.f32 %v1774, %v1776
        %1899 = vadd.xlane.f32.xlu0 %v1898
        %v1900 = vpop.xlane.xlu0 %1899
        %v1901 = vadd.f32 %v1778, %v1780
        %1902 = vadd.xlane.f32.xlu0 %v1901
        %v1903 = vpop.xlane.xlu0 %1902
        %v1904 = vadd.f32 %v1782, %v1784
        %1905 = vadd.xlane.f32.xlu0 %v1904
        %v1906 = vpop.xlane.xlu0 %1905
        %v1907 = vadd.f32 %v1786, %v1788
        %1908 = vadd.xlane.f32.xlu0 %v1907
        %v1909 = vpop.xlane.xlu0 %1908
        %v1910 = vadd.f32 %v1790, %v1792
        %1911 = vadd.xlane.f32.xlu0 %v1910
        %v1912 = vpop.xlane.xlu0 %1911
        %v1913 = vadd.f32 %v1794, %v1796
        %1914 = vadd.xlane.f32.xlu0 %v1913
        %v1915 = vpop.xlane.xlu0 %1914
        %v1916 = vadd.f32 %v1798, %v1800
        %1917 = vadd.xlane.f32.xlu0 %v1916
        %v1918 = vpop.xlane.xlu0 %1917
        %v1919 = vadd.f32 %v1802, %v1804
        %1920 = vadd.xlane.f32.xlu0 %v1919
        %v1921 = vpop.xlane.xlu0 %1920
        %v1922 = vadd.f32 %v1806, %v1808
        %1923 = vadd.xlane.f32.xlu0 %v1922
        %v1924 = vpop.xlane.xlu0 %1923
        %v1925 = vadd.f32 %v1810, %v1812
        %1926 = vadd.xlane.f32.xlu0 %v1925
        %v1927 = vpop.xlane.xlu0 %1926
        %v1928 = vadd.f32 %v1814, %v1816
        %1929 = vadd.xlane.f32.xlu0 %v1928
        %v1930 = vpop.xlane.xlu0 %1929
        %v1931 = vadd.f32 %v1818, %v1820
        %1932 = vadd.xlane.f32.xlu0 %v1931
        %v1933 = vpop.xlane.xlu0 %1932
        %v1934 = vadd.f32 %v1822, %v1824
        %1935 = vadd.xlane.f32.xlu0 %v1934
        %v1936 = vpop.xlane.xlu0 %1935
        %v1937 = vadd.f32 %v1826, %v1828
        %1938 = vadd.xlane.f32.xlu0 %v1937
        %v1939 = vpop.xlane.xlu0 %1938
        %v1940 = vadd.f32 %v1830, %v1832
        %1941 = vadd.xlane.f32.xlu0 %v1940
        %v1942 = vpop.xlane.xlu0 %1941
        %v1943 = vadd.f32 %v1834, %v1836
        %1944 = vadd.xlane.f32.xlu0 %v1943
        %v1945 = vpop.xlane.xlu0 %1944
        %v1946 = vadd.f32 %v1838, %v1840
        %1947 = vadd.xlane.f32.xlu0 %v1946
        %v1948 = vpop.xlane.xlu0 %1947
        %v1949 = vadd.f32 %v1842, %v1844
        %1950 = vadd.xlane.f32.xlu0 %v1949
        %v1951 = vpop.xlane.xlu0 %1950
        %v1952 = vadd.f32 %v1846, %v1848
        %1953 = vadd.xlane.f32.xlu0 %v1952
        %v1954 = vpop.xlane.xlu0 %1953
        %v1955 = vadd.f32 %v1850, %v1852
        %1956 = vadd.xlane.f32.xlu0 %v1955
        %v1957 = vpop.xlane.xlu0 %1956
        %v1958 = vadd.f32 %v1854, %v1856
        %1959 = vadd.xlane.f32.xlu0 %v1958
        %v1960 = vpop.xlane.xlu0 %1959
        %v1961 = vadd.f32 %v1858, %v1860
        %1962 = vadd.xlane.f32.xlu0 %v1961
        %v1963 = vpop.xlane.xlu0 %1962
        %v1964 = vadd.f32 %v1862, %v1864
        %1965 = vadd.xlane.f32.xlu0 %v1964
        %v1966 = vpop.xlane.xlu0 %1965
        %v1967 = vadd.f32 %v1866, %v1868
        %1968 = vadd.xlane.f32.xlu0 %v1967
        %v1969 = vpop.xlane.xlu0 %1968
        %v1970 = vadd.f32 %v1870, %v1872
        %1971 = vadd.xlane.f32.xlu0 %v1970
        %v1972 = vpop.xlane.xlu0 %1971
        %v1973 = vadd.f32 %v1874, %v1876
        %1974 = vadd.xlane.f32.xlu0 %v1973
        %v1975 = vpop.xlane.xlu0 %1974
        %v1976 = vadd.f32 %v1878, %v1880
        %1977 = vadd.xlane.f32.xlu0 %v1976
        %v1978 = vpop.xlane.xlu0 %1977
        %v1979 = vadd.f32 %v1882, %v1884
        %1980 = vadd.xlane.f32.xlu0 %v1979
        %v1981 = vpop.xlane.xlu0 %1980
        %v1982 = vadd.f32 %v1886, %v1888
        %1983 = vadd.xlane.f32.xlu0 %v1982
        %v1984 = vpop.xlane.xlu0 %1983
        %v1985 = vrcp.pop %v1891
        %v1986 = vrcp.pop %v1894
        %v1987 = vrcp.pop %v1897
        %v1988 = vrcp.pop %v1900
        %v1989 = vrcp.pop %v1903
        %v1990 = vrcp.pop %v1906
        %v1991 = vrcp.pop %v1909
        %v1992 = vrcp.pop %v1912
        %v1993 = vrcp.pop %v1915
        %v1994 = vrcp.pop %v1918
        %v1995 = vrcp.pop %v1921
        %v1996 = vrcp.pop %v1924
        %v1997 = vrcp.pop %v1927
        %v1998 = vrcp.pop %v1930
        %v1999 = vrcp.pop %v1933
        %v2000 = vrcp.pop %v1936
        %v2001 = vrcp.pop %v1939
        %v2002 = vrcp.pop %v1942
        %v2003 = vrcp.pop %v1945
        %v2004 = vrcp.pop %v1948
        %v2005 = vrcp.pop %v1951
        %v2006 = vrcp.pop %v1954
        %v2007 = vrcp.pop %v1957
        %v2008 = vrcp.pop %v1960
        %v2009 = vrcp.pop %v1963
        %v2010 = vrcp.pop %v1966
        %v2011 = vrcp.pop %v1969
        %v2012 = vrcp.pop %v1972
        %v2013 = vrcp.pop %v1975
        %v2014 = vrcp.pop %v1978
        %v2015 = vrcp.pop %v1981
        %v2016 = vrcp.pop %v1984
        %v2017 = vmul.f32 %v1762, %v1985
        %v2018 = vmul.f32 %v1764, %v1985
        %v2019 = vmul.f32 %v1766, %v1986
        %v2020 = vmul.f32 %v1768, %v1986
        %v2021 = vmul.f32 %v1770, %v1987
        %v2022 = vmul.f32 %v1772, %v1987
        %v2023 = vmul.f32 %v1774, %v1988
        %v2024 = vmul.f32 %v1776, %v1988
        %v2025 = vmul.f32 %v1778, %v1989
        %v2026 = vmul.f32 %v1780, %v1989
        %v2027 = vmul.f32 %v1782, %v1990
        %v2028 = vmul.f32 %v1784, %v1990
        %v2029 = vmul.f32 %v1786, %v1991
        %v2030 = vmul.f32 %v1788, %v1991
        %v2031 = vmul.f32 %v1790, %v1992
        %v2032 = vmul.f32 %v1792, %v1992
        %v2033 = vmul.f32 %v1794, %v1993
        %v2034 = vmul.f32 %v1796, %v1993
        %v2035 = vmul.f32 %v1798, %v1994
        %v2036 = vmul.f32 %v1800, %v1994
        %v2037 = vmul.f32 %v1802, %v1995
        %v2038 = vmul.f32 %v1804, %v1995
        %v2039 = vmul.f32 %v1806, %v1996
        %v2040 = vmul.f32 %v1808, %v1996
        %v2041 = vmul.f32 %v1810, %v1997
        %v2042 = vmul.f32 %v1812, %v1997
        %v2043 = vmul.f32 %v1814, %v1998
        %v2044 = vmul.f32 %v1816, %v1998
        %v2045 = vmul.f32 %v1818, %v1999
        %v2046 = vmul.f32 %v1820, %v1999
        %v2047 = vmul.f32 %v1822, %v2000
        %v2048 = vmul.f32 %v1824, %v2000
        %v2049 = vmul.f32 %v1826, %v2001
        %v2050 = vmul.f32 %v1828, %v2001
        %v2051 = vmul.f32 %v1830, %v2002
        %v2052 = vmul.f32 %v1832, %v2002
        %v2053 = vmul.f32 %v1834, %v2003
        %v2054 = vmul.f32 %v1836, %v2003
        %v2055 = vmul.f32 %v1838, %v2004
        %v2056 = vmul.f32 %v1840, %v2004
        %v2057 = vmul.f32 %v1842, %v2005
        %v2058 = vmul.f32 %v1844, %v2005
        %v2059 = vmul.f32 %v1846, %v2006
        %v2060 = vmul.f32 %v1848, %v2006
        %v2061 = vmul.f32 %v1850, %v2007
        %v2062 = vmul.f32 %v1852, %v2007
        %v2063 = vmul.f32 %v1854, %v2008
        %v2064 = vmul.f32 %v1856, %v2008
        %v2065 = vmul.f32 %v1858, %v2009
        %v2066 = vmul.f32 %v1860, %v2009
        %v2067 = vmul.f32 %v1862, %v2010
        %v2068 = vmul.f32 %v1864, %v2010
        %v2069 = vmul.f32 %v1866, %v2011
        %v2070 = vmul.f32 %v1868, %v2011
        %v2071 = vmul.f32 %v1870, %v2012
        %v2072 = vmul.f32 %v1872, %v2012
        %v2073 = vmul.f32 %v1874, %v2013
        %v2074 = vmul.f32 %v1876, %v2013
        %v2075 = vmul.f32 %v1878, %v2014
        %v2076 = vmul.f32 %v1880, %v2014
        %v2077 = vmul.f32 %v1882, %v2015
        %v2078 = vmul.f32 %v1884, %v2015
        %v2079 = vmul.f32 %v1886, %v2016
        %v2080 = vmul.f32 %v1888, %v2016
        %v2081 = vpack.c.bf16 %v2019, %v2017
        %v2082 = vpack.c.bf16 %v2020, %v2018
        %v2083 = vpack.c.bf16 %v2023, %v2021
        %v2084 = vpack.c.bf16 %v2024, %v2022
        %v2085 = vpack.c.bf16 %v2027, %v2025
        %v2086 = vpack.c.bf16 %v2028, %v2026
        %v2087 = vpack.c.bf16 %v2031, %v2029
        %v2088 = vpack.c.bf16 %v2032, %v2030
        %v2089 = vpack.c.bf16 %v2035, %v2033
        %v2090 = vpack.c.bf16 %v2036, %v2034
        %v2091 = vpack.c.bf16 %v2039, %v2037
        %v2092 = vpack.c.bf16 %v2040, %v2038
        %v2093 = vpack.c.bf16 %v2043, %v2041
        %v2094 = vpack.c.bf16 %v2044, %v2042
        %v2095 = vpack.c.bf16 %v2047, %v2045
        %v2096 = vpack.c.bf16 %v2048, %v2046
        %v2097 = vpack.c.bf16 %v2051, %v2049
        %v2098 = vpack.c.bf16 %v2052, %v2050
        %v2099 = vpack.c.bf16 %v2055, %v2053
        %v2100 = vpack.c.bf16 %v2056, %v2054
        %v2101 = vpack.c.bf16 %v2059, %v2057
        %v2102 = vpack.c.bf16 %v2060, %v2058
        %v2103 = vpack.c.bf16 %v2063, %v2061
        %v2104 = vpack.c.bf16 %v2064, %v2062
        %v2105 = vpack.c.bf16 %v2067, %v2065
        %v2106 = vpack.c.bf16 %v2068, %v2066
        %v2107 = vpack.c.bf16 %v2071, %v2069
        %v2108 = vpack.c.bf16 %v2072, %v2070
        %v2109 = vpack.c.bf16 %v2075, %v2073
        %v2110 = vpack.c.bf16 %v2076, %v2074
        %v2111 = vpack.c.bf16 %v2079, %v2077
        %v2112 = vpack.c.bf16 %v2080, %v2078
        %2113 = vmatprep.subr.bf16.mxu0 %v2096
        %2114 = vmatpush1.bf16.xpose.msra.mxu0 %v2095
        %2115 = vmatprep.subr.bf16.mxu0 %v2094
        %2116 = vmatpush1.bf16.xpose.msra.mxu0 %v2093
        %2117 = vmatprep.subr.bf16.mxu0 %v2092
        %2118 = vmatpush1.bf16.xpose.msra.mxu0 %v2091
        %2119 = vmatprep.subr.bf16.mxu0 %v2090
        %2120 = vmatpush1.bf16.xpose.msra.mxu0 %v2089
        %2121 = vmatprep.subr.bf16.mxu0 %v2088
        %2122 = vmatpush1.bf16.xpose.msra.mxu0 %v2087
        %2123 = vmatprep.subr.bf16.mxu0 %v2086
        %2124 = vmatpush1.bf16.xpose.msra.mxu0 %v2085
        %2125 = vmatprep.subr.bf16.mxu0 %v2084
        %2126 = vmatpush1.bf16.xpose.msra.mxu0 %v2083
        %2127 = vmatprep.subr.bf16.mxu0 %v2082
        %2128 = vmatpush1.bf16.xpose.msra.mxu0 %v2081
        %2129 = vmatprep.subr.bf16.mxu0 %v2112
        %2130 = vmatpush2.bf16.xpose.msra.mxu0 %v2111
        %2131 = vmatprep.subr.bf16.mxu0 %v2110
        %2132 = vmatpush2.bf16.xpose.msra.mxu0 %v2109
        %2133 = vmatprep.subr.bf16.mxu0 %v2108
        %2134 = vmatpush2.bf16.xpose.msra.mxu0 %v2107
        %2135 = vmatprep.subr.bf16.mxu0 %v2106
        %2136 = vmatpush2.bf16.xpose.msra.mxu0 %v2105
        %2137 = vmatprep.subr.bf16.mxu0 %v2104
        %2138 = vmatpush2.bf16.xpose.msra.mxu0 %v2103
        %2139 = vmatprep.subr.bf16.mxu0 %v2102
        %2140 = vmatpush2.bf16.xpose.msra.mxu0 %v2101
        %2141 = vmatprep.subr.bf16.mxu0 %v2100
        %2142 = vmatpush2.bf16.xpose.msra.mxu0 %v2099
        %2143 = vmatprep.subr.bf16.mxu0 %v2098
        %2144 = vmatpush2.bf16.xpose.msra.mxu0 %v2097
        %2145 = vmatprep.mubr.bf16.mxu0 %v1326
        %2146 = vmatmul.mubr.bf16.gmra.mxu0 %v1325
        %v2147 = vpop.f32.mrf.mxu0
        %v2148 = vadd.f32 0.0, %v2147
        %v2149 = vpop.f32.mrf.mxu0
        %v2150 = vadd.f32 0.0, %v2149
        %v2151 = vpop.f32.mrf.mxu0
        %v2152 = vadd.f32 0.0, %v2151
        %v2153 = vpop.f32.mrf.mxu0
        %v2154 = vadd.f32 0.0, %v2153
        %2155 = vdwg.mxu0
        %v2156 = vld [vmem:[%s10] sm:$0xf]
        %v2157 = vld [vmem:[%s10 + $0x4] sm:$0xf]
        %v2158 = vld [vmem:[%s10 + $0x8] sm:$0xf]
        %v2159 = vld [vmem:[%s10 + $0xc] sm:$0xf]
        %v2160 = vpack.c.bf16 %v2152, %v2148
        %v2161 = vpack.c.bf16 %v2154, %v2150
        %v2166 = vunpack.c.l.b16 %v2156
        %v2167 = vunpack.c.l.b16 %v2157
        %v2168 = vunpack.c.l.b16 %v2158
        %v2169 = vunpack.c.l.b16 %v2159
        %v2170 = vpack.c.b16 %v2167, %v2166
        %v2171 = vpack.c.b16 %v2169, %v2168
        %v2173 = vsel %vm1359, %v2170, 0
        %v2176 = vsel %vm1359, %v2171, 0
        %2178 = vmatprep.subr.bf16.mxu0 0
        %2179 = vmatpush1.bf16.msra.mxu0 0
        %2180 = vmatprep.subr.bf16.mxu0 0
        %2181 = vmatpush1.bf16.msra.mxu0 0
        %2182 = vmatprep.subr.bf16.mxu0 0
        %2183 = vmatpush1.bf16.msra.mxu0 0
        %2184 = vmatprep.subr.bf16.mxu0 0
        %2185 = vmatpush1.bf16.msra.mxu0 0
        %2186 = vmatprep.subr.bf16.mxu0 0
        %2187 = vmatpush1.bf16.msra.mxu0 0
        %2188 = vmatprep.subr.bf16.mxu0 0
        %2189 = vmatpush1.bf16.msra.mxu0 0
        %2190 = vmatprep.subr.bf16.mxu0 0
        %2191 = vmatpush1.bf16.msra.mxu0 0
        %2192 = vmatprep.subr.bf16.mxu0 %v2161
        %2193 = vmatpush1.bf16.msra.mxu0 %v2160
        %2194 = vmatprep.subr.bf16.mxu0 0
        %2195 = vmatpush2.bf16.msra.mxu0 0
        %2196 = vmatprep.subr.bf16.mxu0 0
        %2197 = vmatpush2.bf16.msra.mxu0 0
        %2198 = vmatprep.subr.bf16.mxu0 0
        %2199 = vmatpush2.bf16.msra.mxu0 0
        %2200 = vmatprep.subr.bf16.mxu0 0
        %2201 = vmatpush2.bf16.msra.mxu0 0
        %2202 = vmatprep.subr.bf16.mxu0 0
        %2203 = vmatpush2.bf16.msra.mxu0 0
        %2204 = vmatprep.subr.bf16.mxu0 0
        %2205 = vmatpush2.bf16.msra.mxu0 0
        %2206 = vmatprep.subr.bf16.mxu0 0
        %2207 = vmatpush2.bf16.msra.mxu0 0
        %2208 = vmatprep.subr.bf16.mxu0 0
        %2209 = vmatpush2.bf16.msra.mxu0 0
        %2210 = vmatprep.mubr.bf16.mxu0 0
        %2211 = vmatmul.mubr.bf16.gmra.mxu0 %v2173
        %v2212 = vpop.f32.mrf.mxu0
        %v2213 = vadd.f32 0.0, %v2212
        %v2214 = vpop.f32.mrf.mxu0
        %v2215 = vadd.f32 0.0, %v2214
        %v2216 = vpop.f32.mrf.mxu0
        %v2217 = vadd.f32 0.0, %v2216
        %v2218 = vpop.f32.mrf.mxu0
        %v2219 = vadd.f32 0.0, %v2218
        %2220 = vmatprep.mubr.bf16.mxu0 0
        %2221 = vmatmul.mubr.bf16.gmra.mxu0 %v2176
        %v2222 = vpop.f32.mrf.mxu0
        %v2223 = vadd.f32 0.0, %v2222
        %v2224 = vpop.f32.mrf.mxu0
        %v2225 = vadd.f32 0.0, %v2224
        %v2226 = vpop.f32.mrf.mxu0
        %v2227 = vadd.f32 0.0, %v2226
        %v2228 = vpop.f32.mrf.mxu0
        %v2229 = vadd.f32 0.0, %v2228
        %2230 = vdwg.mxu0
        %v2231 = vadd.f32 %v1313, %v2213
        %v2232 = vadd.f32 %v1314, %v2215
        %v2233 = vadd.f32 %v1315, %v2217
        %v2234 = vadd.f32 %v1316, %v2219
        %v2235 = vadd.f32 %v1317, %v2223
        %v2236 = vadd.f32 %v1318, %v2225
        %v2237 = vadd.f32 %v1319, %v2227
        %v2238 = vadd.f32 %v1320, %v2229
        %v2239 = vpack.c.bf16 %v1111, %v1107
        %v2240 = vpack.c.bf16 %v1113, %v1109
        %v2241 = vpack.c.bf16 %v1200, %v1196
        %v2242 = vpack.c.bf16 %v1202, %v1198
        %v2243 = vpack.c.bf16 %v1289, %v1285
        %v2244 = vpack.c.bf16 %v1291, %v1287
        %2245 = vxpose.xlu0.c.b16.start [1/8] %v2239, 128
        %2246 = vxpose.xlu0.c.b16.cont [2/8] 0, 128
        %2247 = vxpose.xlu0.c.b16.cont [3/8] 0, 128
        %2248 = vxpose.xlu0.c.b16.cont [4/8] 0, 128
        %2249 = vxpose.xlu0.c.b16.cont [5/8] 0, 128
        %2250 = vxpose.xlu0.c.b16.cont [6/8] 0, 128
        %2251 = vxpose.xlu0.c.b16.cont [7/8] 0, 128
        %2252 = vxpose.xlu0.c.b16.end [8/8] 0, 128
        %v2253 = vpop.trf.xlu0
        %v2254 = vpop.trf.xlu0
        %v2255 = vpop.trf.xlu0
        %v2256 = vpop.trf.xlu0
        %v2257 = vpop.trf.xlu0
        %v2258 = vpop.trf.xlu0
        %v2259 = vpop.trf.xlu0
        %v2260 = vpop.trf.xlu0
        %2261 = vxpose.xlu0.c.b16.start [1/8] %v2240, 128
        %2262 = vxpose.xlu0.c.b16.cont [2/8] 0, 128
        %2263 = vxpose.xlu0.c.b16.cont [3/8] 0, 128
        %2264 = vxpose.xlu0.c.b16.cont [4/8] 0, 128
        %2265 = vxpose.xlu0.c.b16.cont [5/8] 0, 128
        %2266 = vxpose.xlu0.c.b16.cont [6/8] 0, 128
        %2267 = vxpose.xlu0.c.b16.cont [7/8] 0, 128
        %2268 = vxpose.xlu0.c.b16.end [8/8] 0, 128
        %v2269 = vpop.trf.xlu0
        %v2270 = vpop.trf.xlu0
        %v2271 = vpop.trf.xlu0
        %v2272 = vpop.trf.xlu0
        %v2273 = vpop.trf.xlu0
        %v2274 = vpop.trf.xlu0
        %v2275 = vpop.trf.xlu0
        %v2276 = vpop.trf.xlu0
        %v2278 = vsel %vm1359, %v2253, 0
        %v2281 = vsel %vm1359, %v2254, 0
        %v2284 = vsel %vm1359, %v2255, 0
        %v2287 = vsel %vm1359, %v2256, 0
        %v2290 = vsel %vm1359, %v2257, 0
        %v2293 = vsel %vm1359, %v2258, 0
        %v2296 = vsel %vm1359, %v2259, 0
        %v2299 = vsel %vm1359, %v2260, 0
        %v2302 = vsel %vm1359, %v2269, 0
        %v2305 = vsel %vm1359, %v2270, 0
        %v2308 = vsel %vm1359, %v2271, 0
        %v2311 = vsel %vm1359, %v2272, 0
        %v2314 = vsel %vm1359, %v2273, 0
        %v2317 = vsel %vm1359, %v2274, 0
        %v2320 = vsel %vm1359, %v2275, 0
        %v2323 = vsel %vm1359, %v2276, 0
        %2325 = vmatprep.subr.bf16.mxu0 0
        %2326 = vmatpush1.bf16.msra.mxu0 0
        %2327 = vmatprep.subr.bf16.mxu0 0
        %2328 = vmatpush1.bf16.msra.mxu0 0
        %2329 = vmatprep.subr.bf16.mxu0 0
        %2330 = vmatpush1.bf16.msra.mxu0 0
        %2331 = vmatprep.subr.bf16.mxu0 0
        %2332 = vmatpush1.bf16.msra.mxu0 0
        %2333 = vmatprep.subr.bf16.mxu0 0
        %2334 = vmatpush1.bf16.msra.mxu0 0
        %2335 = vmatprep.subr.bf16.mxu0 0
        %2336 = vmatpush1.bf16.msra.mxu0 0
        %2337 = vmatprep.subr.bf16.mxu0 0
        %2338 = vmatpush1.bf16.msra.mxu0 0
        %2339 = vmatprep.subr.bf16.mxu0 %v2242
        %2340 = vmatpush1.bf16.msra.mxu0 %v2241
        %2341 = vmatprep.subr.bf16.mxu0 0
        %2342 = vmatpush2.bf16.msra.mxu0 0
        %2343 = vmatprep.subr.bf16.mxu0 0
        %2344 = vmatpush2.bf16.msra.mxu0 0
        %2345 = vmatprep.subr.bf16.mxu0 0
        %2346 = vmatpush2.bf16.msra.mxu0 0
        %2347 = vmatprep.subr.bf16.mxu0 0
        %2348 = vmatpush2.bf16.msra.mxu0 0
        %2349 = vmatprep.subr.bf16.mxu0 0
        %2350 = vmatpush2.bf16.msra.mxu0 0
        %2351 = vmatprep.subr.bf16.mxu0 0
        %2352 = vmatpush2.bf16.msra.mxu0 0
        %2353 = vmatprep.subr.bf16.mxu0 0
        %2354 = vmatpush2.bf16.msra.mxu0 0
        %2355 = vmatprep.subr.bf16.mxu0 0
        %2356 = vmatpush2.bf16.msra.mxu0 0
        %2357 = vmatprep.mubr.bf16.mxu0 0
        %2358 = vmatmul.mubr.bf16.gmra.mxu0 %v2278
        %v2359 = vpop.f32.mrf.mxu0
        %v2360 = vadd.f32 0.0, %v2359
        %v2361 = vpop.f32.mrf.mxu0
        %v2362 = vadd.f32 0.0, %v2361
        %v2363 = vpop.f32.mrf.mxu0
        %v2364 = vadd.f32 0.0, %v2363
        %v2365 = vpop.f32.mrf.mxu0
        %v2366 = vadd.f32 0.0, %v2365
        %2367 = vmatprep.mubr.bf16.mxu0 0
        %2368 = vmatmul.mubr.bf16.gmra.mxu0 %v2281
        %v2369 = vpop.f32.mrf.mxu0
        %v2370 = vadd.f32 0.0, %v2369
        %v2371 = vpop.f32.mrf.mxu0
        %v2372 = vadd.f32 0.0, %v2371
        %v2373 = vpop.f32.mrf.mxu0
        %v2374 = vadd.f32 0.0, %v2373
        %v2375 = vpop.f32.mrf.mxu0
        %v2376 = vadd.f32 0.0, %v2375
        %2377 = vmatprep.mubr.bf16.mxu0 0
        %2378 = vmatmul.mubr.bf16.gmra.mxu0 %v2284
        %v2379 = vpop.f32.mrf.mxu0
        %v2380 = vadd.f32 0.0, %v2379
        %v2381 = vpop.f32.mrf.mxu0
        %v2382 = vadd.f32 0.0, %v2381
        %v2383 = vpop.f32.mrf.mxu0
        %v2384 = vadd.f32 0.0, %v2383
        %v2385 = vpop.f32.mrf.mxu0
        %v2386 = vadd.f32 0.0, %v2385
        %2387 = vmatprep.mubr.bf16.mxu0 0
        %2388 = vmatmul.mubr.bf16.gmra.mxu0 %v2287
        %v2389 = vpop.f32.mrf.mxu0
        %v2390 = vadd.f32 0.0, %v2389
        %v2391 = vpop.f32.mrf.mxu0
        %v2392 = vadd.f32 0.0, %v2391
        %v2393 = vpop.f32.mrf.mxu0
        %v2394 = vadd.f32 0.0, %v2393
        %v2395 = vpop.f32.mrf.mxu0
        %v2396 = vadd.f32 0.0, %v2395
        %2397 = vmatprep.mubr.bf16.mxu0 0
        %2398 = vmatmul.mubr.bf16.gmra.mxu0 %v2290
        %v2399 = vpop.f32.mrf.mxu0
        %v2400 = vadd.f32 0.0, %v2399
        %v2401 = vpop.f32.mrf.mxu0
        %v2402 = vadd.f32 0.0, %v2401
        %v2403 = vpop.f32.mrf.mxu0
        %v2404 = vadd.f32 0.0, %v2403
        %v2405 = vpop.f32.mrf.mxu0
        %v2406 = vadd.f32 0.0, %v2405
        %2407 = vmatprep.mubr.bf16.mxu0 0
        %2408 = vmatmul.mubr.bf16.gmra.mxu0 %v2293
        %v2409 = vpop.f32.mrf.mxu0
        %v2410 = vadd.f32 0.0, %v2409
        %v2411 = vpop.f32.mrf.mxu0
        %v2412 = vadd.f32 0.0, %v2411
        %v2413 = vpop.f32.mrf.mxu0
        %v2414 = vadd.f32 0.0, %v2413
        %v2415 = vpop.f32.mrf.mxu0
        %v2416 = vadd.f32 0.0, %v2415
        %2417 = vmatprep.mubr.bf16.mxu0 0
        %2418 = vmatmul.mubr.bf16.gmra.mxu0 %v2296
        %v2419 = vpop.f32.mrf.mxu0
        %v2420 = vadd.f32 0.0, %v2419
        %v2421 = vpop.f32.mrf.mxu0
        %v2422 = vadd.f32 0.0, %v2421
        %v2423 = vpop.f32.mrf.mxu0
        %v2424 = vadd.f32 0.0, %v2423
        %v2425 = vpop.f32.mrf.mxu0
        %v2426 = vadd.f32 0.0, %v2425
        %2427 = vmatprep.mubr.bf16.mxu0 0
        %2428 = vmatmul.mubr.bf16.gmra.mxu0 %v2299
        %v2429 = vpop.f32.mrf.mxu0
        %v2430 = vadd.f32 0.0, %v2429
        %v2431 = vpop.f32.mrf.mxu0
        %v2432 = vadd.f32 0.0, %v2431
        %v2433 = vpop.f32.mrf.mxu0
        %v2434 = vadd.f32 0.0, %v2433
        %v2435 = vpop.f32.mrf.mxu0
        %v2436 = vadd.f32 0.0, %v2435
        %2437 = vmatprep.mubr.bf16.mxu0 0
        %2438 = vmatmul.mubr.bf16.gmra.mxu0 %v2302
        %v2439 = vpop.f32.mrf.mxu0
        %v2440 = vadd.f32 0.0, %v2439
        %v2441 = vpop.f32.mrf.mxu0
        %v2442 = vadd.f32 0.0, %v2441
        %v2443 = vpop.f32.mrf.mxu0
        %v2444 = vadd.f32 0.0, %v2443
        %v2445 = vpop.f32.mrf.mxu0
        %v2446 = vadd.f32 0.0, %v2445
        %2447 = vmatprep.mubr.bf16.mxu0 0
        %2448 = vmatmul.mubr.bf16.gmra.mxu0 %v2305
        %v2449 = vpop.f32.mrf.mxu0
        %v2450 = vadd.f32 0.0, %v2449
        %v2451 = vpop.f32.mrf.mxu0
        %v2452 = vadd.f32 0.0, %v2451
        %v2453 = vpop.f32.mrf.mxu0
        %v2454 = vadd.f32 0.0, %v2453
        %v2455 = vpop.f32.mrf.mxu0
        %v2456 = vadd.f32 0.0, %v2455
        %2457 = vmatprep.mubr.bf16.mxu0 0
        %2458 = vmatmul.mubr.bf16.gmra.mxu0 %v2308
        %v2459 = vpop.f32.mrf.mxu0
        %v2460 = vadd.f32 0.0, %v2459
        %v2461 = vpop.f32.mrf.mxu0
        %v2462 = vadd.f32 0.0, %v2461
        %v2463 = vpop.f32.mrf.mxu0
        %v2464 = vadd.f32 0.0, %v2463
        %v2465 = vpop.f32.mrf.mxu0
        %v2466 = vadd.f32 0.0, %v2465
        %2467 = vmatprep.mubr.bf16.mxu0 0
        %2468 = vmatmul.mubr.bf16.gmra.mxu0 %v2311
        %v2469 = vpop.f32.mrf.mxu0
        %v2470 = vadd.f32 0.0, %v2469
        %v2471 = vpop.f32.mrf.mxu0
        %v2472 = vadd.f32 0.0, %v2471
        %v2473 = vpop.f32.mrf.mxu0
        %v2474 = vadd.f32 0.0, %v2473
        %v2475 = vpop.f32.mrf.mxu0
        %v2476 = vadd.f32 0.0, %v2475
        %2477 = vmatprep.mubr.bf16.mxu0 0
        %2478 = vmatmul.mubr.bf16.gmra.mxu0 %v2314
        %v2479 = vpop.f32.mrf.mxu0
        %v2480 = vadd.f32 0.0, %v2479
        %v2481 = vpop.f32.mrf.mxu0
        %v2482 = vadd.f32 0.0, %v2481
        %v2483 = vpop.f32.mrf.mxu0
        %v2484 = vadd.f32 0.0, %v2483
        %v2485 = vpop.f32.mrf.mxu0
        %v2486 = vadd.f32 0.0, %v2485
        %2487 = vmatprep.mubr.bf16.mxu0 0
        %2488 = vmatmul.mubr.bf16.gmra.mxu0 %v2317
        %v2489 = vpop.f32.mrf.mxu0
        %v2490 = vadd.f32 0.0, %v2489
        %v2491 = vpop.f32.mrf.mxu0
        %v2492 = vadd.f32 0.0, %v2491
        %v2493 = vpop.f32.mrf.mxu0
        %v2494 = vadd.f32 0.0, %v2493
        %v2495 = vpop.f32.mrf.mxu0
        %v2496 = vadd.f32 0.0, %v2495
        %2497 = vmatprep.mubr.bf16.mxu0 0
        %2498 = vmatmul.mubr.bf16.gmra.mxu0 %v2320
        %v2499 = vpop.f32.mrf.mxu0
        %v2500 = vadd.f32 0.0, %v2499
        %v2501 = vpop.f32.mrf.mxu0
        %v2502 = vadd.f32 0.0, %v2501
        %v2503 = vpop.f32.mrf.mxu0
        %v2504 = vadd.f32 0.0, %v2503
        %v2505 = vpop.f32.mrf.mxu0
        %v2506 = vadd.f32 0.0, %v2505
        %2507 = vmatprep.mubr.bf16.mxu0 0
        %2508 = vmatmul.mubr.bf16.gmra.mxu0 %v2323
        %v2509 = vpop.f32.mrf.mxu0
        %v2510 = vadd.f32 0.0, %v2509
        %v2511 = vpop.f32.mrf.mxu0
        %v2512 = vadd.f32 0.0, %v2511
        %v2513 = vpop.f32.mrf.mxu0
        %v2514 = vadd.f32 0.0, %v2513
        %v2515 = vpop.f32.mrf.mxu0
        %v2516 = vadd.f32 0.0, %v2515
        %2517 = vdwg.mxu0
        %v2518 = vmax.f32 %v2360, %v2362
        %2519 = vmax.xlane.f32.xlu0 %v2518
        %v2520 = vpop.xlane.xlu0 %2519
        %v2521 = vmax.f32 %v2364, %v2366
        %2522 = vmax.xlane.f32.xlu0 %v2521
        %v2523 = vpop.xlane.xlu0 %2522
        %v2524 = vmax.f32 %v2370, %v2372
        %2525 = vmax.xlane.f32.xlu0 %v2524
        %v2526 = vpop.xlane.xlu0 %2525
        %v2527 = vmax.f32 %v2374, %v2376
        %2528 = vmax.xlane.f32.xlu0 %v2527
        %v2529 = vpop.xlane.xlu0 %2528
        %v2530 = vmax.f32 %v2380, %v2382
        %2531 = vmax.xlane.f32.xlu0 %v2530
        %v2532 = vpop.xlane.xlu0 %2531
        %v2533 = vmax.f32 %v2384, %v2386
        %2534 = vmax.xlane.f32.xlu0 %v2533
        %v2535 = vpop.xlane.xlu0 %2534
        %v2536 = vmax.f32 %v2390, %v2392
        %2537 = vmax.xlane.f32.xlu0 %v2536
        %v2538 = vpop.xlane.xlu0 %2537
        %v2539 = vmax.f32 %v2394, %v2396
        %2540 = vmax.xlane.f32.xlu0 %v2539
        %v2541 = vpop.xlane.xlu0 %2540
        %v2542 = vmax.f32 %v2400, %v2402
        %2543 = vmax.xlane.f32.xlu0 %v2542
        %v2544 = vpop.xlane.xlu0 %2543
        %v2545 = vmax.f32 %v2404, %v2406
        %2546 = vmax.xlane.f32.xlu0 %v2545
        %v2547 = vpop.xlane.xlu0 %2546
        %v2548 = vmax.f32 %v2410, %v2412
        %2549 = vmax.xlane.f32.xlu0 %v2548
        %v2550 = vpop.xlane.xlu0 %2549
        %v2551 = vmax.f32 %v2414, %v2416
        %2552 = vmax.xlane.f32.xlu0 %v2551
        %v2553 = vpop.xlane.xlu0 %2552
        %v2554 = vmax.f32 %v2420, %v2422
        %2555 = vmax.xlane.f32.xlu0 %v2554
        %v2556 = vpop.xlane.xlu0 %2555
        %v2557 = vmax.f32 %v2424, %v2426
        %2558 = vmax.xlane.f32.xlu0 %v2557
        %v2559 = vpop.xlane.xlu0 %2558
        %v2560 = vmax.f32 %v2430, %v2432
        %2561 = vmax.xlane.f32.xlu0 %v2560
        %v2562 = vpop.xlane.xlu0 %2561
        %v2563 = vmax.f32 %v2434, %v2436
        %2564 = vmax.xlane.f32.xlu0 %v2563
        %v2565 = vpop.xlane.xlu0 %2564
        %v2566 = vmax.f32 %v2440, %v2442
        %2567 = vmax.xlane.f32.xlu0 %v2566
        %v2568 = vpop.xlane.xlu0 %2567
        %v2569 = vmax.f32 %v2444, %v2446
        %2570 = vmax.xlane.f32.xlu0 %v2569
        %v2571 = vpop.xlane.xlu0 %2570
        %v2572 = vmax.f32 %v2450, %v2452
        %2573 = vmax.xlane.f32.xlu0 %v2572
        %v2574 = vpop.xlane.xlu0 %2573
        %v2575 = vmax.f32 %v2454, %v2456
        %2576 = vmax.xlane.f32.xlu0 %v2575
        %v2577 = vpop.xlane.xlu0 %2576
        %v2578 = vmax.f32 %v2460, %v2462
        %2579 = vmax.xlane.f32.xlu0 %v2578
        %v2580 = vpop.xlane.xlu0 %2579
        %v2581 = vmax.f32 %v2464, %v2466
        %2582 = vmax.xlane.f32.xlu0 %v2581
        %v2583 = vpop.xlane.xlu0 %2582
        %v2584 = vmax.f32 %v2470, %v2472
        %2585 = vmax.xlane.f32.xlu0 %v2584
        %v2586 = vpop.xlane.xlu0 %2585
        %v2587 = vmax.f32 %v2474, %v2476
        %2588 = vmax.xlane.f32.xlu0 %v2587
        %v2589 = vpop.xlane.xlu0 %2588
        %v2590 = vmax.f32 %v2480, %v2482
        %2591 = vmax.xlane.f32.xlu0 %v2590
        %v2592 = vpop.xlane.xlu0 %2591
        %v2593 = vmax.f32 %v2484, %v2486
        %2594 = vmax.xlane.f32.xlu0 %v2593
        %v2595 = vpop.xlane.xlu0 %2594
        %v2596 = vmax.f32 %v2490, %v2492
        %2597 = vmax.xlane.f32.xlu0 %v2596
        %v2598 = vpop.xlane.xlu0 %2597
        %v2599 = vmax.f32 %v2494, %v2496
        %2600 = vmax.xlane.f32.xlu0 %v2599
        %v2601 = vpop.xlane.xlu0 %2600
        %v2602 = vmax.f32 %v2500, %v2502
        %2603 = vmax.xlane.f32.xlu0 %v2602
        %v2604 = vpop.xlane.xlu0 %2603
        %v2605 = vmax.f32 %v2504, %v2506
        %2606 = vmax.xlane.f32.xlu0 %v2605
        %v2607 = vpop.xlane.xlu0 %2606
        %v2608 = vmax.f32 %v2510, %v2512
        %2609 = vmax.xlane.f32.xlu0 %v2608
        %v2610 = vpop.xlane.xlu0 %2609
        %v2611 = vmax.f32 %v2514, %v2516
        %2612 = vmax.xlane.f32.xlu0 %v2611
        %v2613 = vpop.xlane.xlu0 %2612
        %v2614 = vsub.f32 %v2360, %v2520
        %v2615 = vsub.f32 %v2362, %v2520
        %v2616 = vsub.f32 %v2364, %v2523
        %v2617 = vsub.f32 %v2366, %v2523
        %v2618 = vsub.f32 %v2370, %v2526
        %v2619 = vsub.f32 %v2372, %v2526
        %v2620 = vsub.f32 %v2374, %v2529
        %v2621 = vsub.f32 %v2376, %v2529
        %v2622 = vsub.f32 %v2380, %v2532
        %v2623 = vsub.f32 %v2382, %v2532
        %v2624 = vsub.f32 %v2384, %v2535
        %v2625 = vsub.f32 %v2386, %v2535
        %v2626 = vsub.f32 %v2390, %v2538
        %v2627 = vsub.f32 %v2392, %v2538
        %v2628 = vsub.f32 %v2394, %v2541
        %v2629 = vsub.f32 %v2396, %v2541
        %v2630 = vsub.f32 %v2400, %v2544
        %v2631 = vsub.f32 %v2402, %v2544
        %v2632 = vsub.f32 %v2404, %v2547
        %v2633 = vsub.f32 %v2406, %v2547
        %v2634 = vsub.f32 %v2410, %v2550
        %v2635 = vsub.f32 %v2412, %v2550
        %v2636 = vsub.f32 %v2414, %v2553
        %v2637 = vsub.f32 %v2416, %v2553
        %v2638 = vsub.f32 %v2420, %v2556
        %v2639 = vsub.f32 %v2422, %v2556
        %v2640 = vsub.f32 %v2424, %v2559
        %v2641 = vsub.f32 %v2426, %v2559
        %v2642 = vsub.f32 %v2430, %v2562
        %v2643 = vsub.f32 %v2432, %v2562
        %v2644 = vsub.f32 %v2434, %v2565
        %v2645 = vsub.f32 %v2436, %v2565
        %v2646 = vsub.f32 %v2440, %v2568
        %v2647 = vsub.f32 %v2442, %v2568
        %v2648 = vsub.f32 %v2444, %v2571
        %v2649 = vsub.f32 %v2446, %v2571
        %v2650 = vsub.f32 %v2450, %v2574
        %v2651 = vsub.f32 %v2452, %v2574
        %v2652 = vsub.f32 %v2454, %v2577
        %v2653 = vsub.f32 %v2456, %v2577
        %v2654 = vsub.f32 %v2460, %v2580
        %v2655 = vsub.f32 %v2462, %v2580
        %v2656 = vsub.f32 %v2464, %v2583
        %v2657 = vsub.f32 %v2466, %v2583
        %v2658 = vsub.f32 %v2470, %v2586
        %v2659 = vsub.f32 %v2472, %v2586
        %v2660 = vsub.f32 %v2474, %v2589
        %v2661 = vsub.f32 %v2476, %v2589
        %v2662 = vsub.f32 %v2480, %v2592
        %v2663 = vsub.f32 %v2482, %v2592
        %v2664 = vsub.f32 %v2484, %v2595
        %v2665 = vsub.f32 %v2486, %v2595
        %v2666 = vsub.f32 %v2490, %v2598
        %v2667 = vsub.f32 %v2492, %v2598
        %v2668 = vsub.f32 %v2494, %v2601
        %v2669 = vsub.f32 %v2496, %v2601
        %v2670 = vsub.f32 %v2500, %v2604
        %v2671 = vsub.f32 %v2502, %v2604
        %v2672 = vsub.f32 %v2504, %v2607
        %v2673 = vsub.f32 %v2506, %v2607
        %v2674 = vsub.f32 %v2510, %v2610
        %v2675 = vsub.f32 %v2512, %v2610
        %v2676 = vsub.f32 %v2514, %v2613
        %v2677 = vsub.f32 %v2516, %v2613
        %v2678 = vmul.f32 %v2614, 1.442695
        %v2679 = vpow.pop %v2678
        %v2680 = vmul.f32 %v2615, 1.442695
        %v2681 = vpow.pop %v2680
        %v2682 = vmul.f32 %v2616, 1.442695
        %v2683 = vpow.pop %v2682
        %v2684 = vmul.f32 %v2617, 1.442695
        %v2685 = vpow.pop %v2684
        %v2686 = vmul.f32 %v2618, 1.442695
        %v2687 = vpow.pop %v2686
        %v2688 = vmul.f32 %v2619, 1.442695
        %v2689 = vpow.pop %v2688
        %v2690 = vmul.f32 %v2620, 1.442695
        %v2691 = vpow.pop %v2690
        %v2692 = vmul.f32 %v2621, 1.442695
        %v2693 = vpow.pop %v2692
        %v2694 = vmul.f32 %v2622, 1.442695
        %v2695 = vpow.pop %v2694
        %v2696 = vmul.f32 %v2623, 1.442695
        %v2697 = vpow.pop %v2696
        %v2698 = vmul.f32 %v2624, 1.442695
        %v2699 = vpow.pop %v2698
        %v2700 = vmul.f32 %v2625, 1.442695
        %v2701 = vpow.pop %v2700
        %v2702 = vmul.f32 %v2626, 1.442695
        %v2703 = vpow.pop %v2702
        %v2704 = vmul.f32 %v2627, 1.442695
        %v2705 = vpow.pop %v2704
        %v2706 = vmul.f32 %v2628, 1.442695
        %v2707 = vpow.pop %v2706
        %v2708 = vmul.f32 %v2629, 1.442695
        %v2709 = vpow.pop %v2708
        %v2710 = vmul.f32 %v2630, 1.442695
        %v2711 = vpow.pop %v2710
        %v2712 = vmul.f32 %v2631, 1.442695
        %v2713 = vpow.pop %v2712
        %v2714 = vmul.f32 %v2632, 1.442695
        %v2715 = vpow.pop %v2714
        %v2716 = vmul.f32 %v2633, 1.442695
        %v2717 = vpow.pop %v2716
        %v2718 = vmul.f32 %v2634, 1.442695
        %v2719 = vpow.pop %v2718
        %v2720 = vmul.f32 %v2635, 1.442695
        %v2721 = vpow.pop %v2720
        %v2722 = vmul.f32 %v2636, 1.442695
        %v2723 = vpow.pop %v2722
        %v2724 = vmul.f32 %v2637, 1.442695
        %v2725 = vpow.pop %v2724
        %v2726 = vmul.f32 %v2638, 1.442695
        %v2727 = vpow.pop %v2726
        %v2728 = vmul.f32 %v2639, 1.442695
        %v2729 = vpow.pop %v2728
        %v2730 = vmul.f32 %v2640, 1.442695
        %v2731 = vpow.pop %v2730
        %v2732 = vmul.f32 %v2641, 1.442695
        %v2733 = vpow.pop %v2732
        %v2734 = vmul.f32 %v2642, 1.442695
        %v2735 = vpow.pop %v2734
        %v2736 = vmul.f32 %v2643, 1.442695
        %v2737 = vpow.pop %v2736
        %v2738 = vmul.f32 %v2644, 1.442695
        %v2739 = vpow.pop %v2738
        %v2740 = vmul.f32 %v2645, 1.442695
        %v2741 = vpow.pop %v2740
        %v2742 = vmul.f32 %v2646, 1.442695
        %v2743 = vpow.pop %v2742
        %v2744 = vmul.f32 %v2647, 1.442695
        %v2745 = vpow.pop %v2744
        %v2746 = vmul.f32 %v2648, 1.442695
        %v2747 = vpow.pop %v2746
        %v2748 = vmul.f32 %v2649, 1.442695
        %v2749 = vpow.pop %v2748
        %v2750 = vmul.f32 %v2650, 1.442695
        %v2751 = vpow.pop %v2750
        %v2752 = vmul.f32 %v2651, 1.442695
        %v2753 = vpow.pop %v2752
        %v2754 = vmul.f32 %v2652, 1.442695
        %v2755 = vpow.pop %v2754
        %v2756 = vmul.f32 %v2653, 1.442695
        %v2757 = vpow.pop %v2756
        %v2758 = vmul.f32 %v2654, 1.442695
        %v2759 = vpow.pop %v2758
        %v2760 = vmul.f32 %v2655, 1.442695
        %v2761 = vpow.pop %v2760
        %v2762 = vmul.f32 %v2656, 1.442695
        %v2763 = vpow.pop %v2762
        %v2764 = vmul.f32 %v2657, 1.442695
        %v2765 = vpow.pop %v2764
        %v2766 = vmul.f32 %v2658, 1.442695
        %v2767 = vpow.pop %v2766
        %v2768 = vmul.f32 %v2659, 1.442695
        %v2769 = vpow.pop %v2768
        %v2770 = vmul.f32 %v2660, 1.442695
        %v2771 = vpow.pop %v2770
        %v2772 = vmul.f32 %v2661, 1.442695
        %v2773 = vpow.pop %v2772
        %v2774 = vmul.f32 %v2662, 1.442695
        %v2775 = vpow.pop %v2774
        %v2776 = vmul.f32 %v2663, 1.442695
        %v2777 = vpow.pop %v2776
        %v2778 = vmul.f32 %v2664, 1.442695
        %v2779 = vpow.pop %v2778
        %v2780 = vmul.f32 %v2665, 1.442695
        %v2781 = vpow.pop %v2780
        %v2782 = vmul.f32 %v2666, 1.442695
        %v2783 = vpow.pop %v2782
        %v2784 = vmul.f32 %v2667, 1.442695
        %v2785 = vpow.pop %v2784
        %v2786 = vmul.f32 %v2668, 1.442695
        %v2787 = vpow.pop %v2786
        %v2788 = vmul.f32 %v2669, 1.442695
        %v2789 = vpow.pop %v2788
        %v2790 = vmul.f32 %v2670, 1.442695
        %v2791 = vpow.pop %v2790
        %v2792 = vmul.f32 %v2671, 1.442695
        %v2793 = vpow.pop %v2792
        %v2794 = vmul.f32 %v2672, 1.442695
        %v2795 = vpow.pop %v2794
        %v2796 = vmul.f32 %v2673, 1.442695
        %v2797 = vpow.pop %v2796
        %v2798 = vmul.f32 %v2674, 1.442695
        %v2799 = vpow.pop %v2798
        %v2800 = vmul.f32 %v2675, 1.442695
        %v2801 = vpow.pop %v2800
        %v2802 = vmul.f32 %v2676, 1.442695
        %v2803 = vpow.pop %v2802
        %v2804 = vmul.f32 %v2677, 1.442695
        %v2805 = vpow.pop %v2804
        %v2806 = vadd.f32 %v2679, %v2681
        %2807 = vadd.xlane.f32.xlu0 %v2806
        %v2808 = vpop.xlane.xlu0 %2807
        %v2809 = vadd.f32 %v2683, %v2685
        %2810 = vadd.xlane.f32.xlu0 %v2809
        %v2811 = vpop.xlane.xlu0 %2810
        %v2812 = vadd.f32 %v2687, %v2689
        %2813 = vadd.xlane.f32.xlu0 %v2812
        %v2814 = vpop.xlane.xlu0 %2813
        %v2815 = vadd.f32 %v2691, %v2693
        %2816 = vadd.xlane.f32.xlu0 %v2815
        %v2817 = vpop.xlane.xlu0 %2816
        %v2818 = vadd.f32 %v2695, %v2697
        %2819 = vadd.xlane.f32.xlu0 %v2818
        %v2820 = vpop.xlane.xlu0 %2819
        %v2821 = vadd.f32 %v2699, %v2701
        %2822 = vadd.xlane.f32.xlu0 %v2821
        %v2823 = vpop.xlane.xlu0 %2822
        %v2824 = vadd.f32 %v2703, %v2705
        %2825 = vadd.xlane.f32.xlu0 %v2824
        %v2826 = vpop.xlane.xlu0 %2825
        %v2827 = vadd.f32 %v2707, %v2709
        %2828 = vadd.xlane.f32.xlu0 %v2827
        %v2829 = vpop.xlane.xlu0 %2828
        %v2830 = vadd.f32 %v2711, %v2713
        %2831 = vadd.xlane.f32.xlu0 %v2830
        %v2832 = vpop.xlane.xlu0 %2831
        %v2833 = vadd.f32 %v2715, %v2717
        %2834 = vadd.xlane.f32.xlu0 %v2833
        %v2835 = vpop.xlane.xlu0 %2834
        %v2836 = vadd.f32 %v2719, %v2721
        %2837 = vadd.xlane.f32.xlu0 %v2836
        %v2838 = vpop.xlane.xlu0 %2837
        %v2839 = vadd.f32 %v2723, %v2725
        %2840 = vadd.xlane.f32.xlu0 %v2839
        %v2841 = vpop.xlane.xlu0 %2840
        %v2842 = vadd.f32 %v2727, %v2729
        %2843 = vadd.xlane.f32.xlu0 %v2842
        %v2844 = vpop.xlane.xlu0 %2843
        %v2845 = vadd.f32 %v2731, %v2733
        %2846 = vadd.xlane.f32.xlu0 %v2845
        %v2847 = vpop.xlane.xlu0 %2846
        %v2848 = vadd.f32 %v2735, %v2737
        %2849 = vadd.xlane.f32.xlu0 %v2848
        %v2850 = vpop.xlane.xlu0 %2849
        %v2851 = vadd.f32 %v2739, %v2741
        %2852 = vadd.xlane.f32.xlu0 %v2851
        %v2853 = vpop.xlane.xlu0 %2852
        %v2854 = vadd.f32 %v2743, %v2745
        %2855 = vadd.xlane.f32.xlu0 %v2854
        %v2856 = vpop.xlane.xlu0 %2855
        %v2857 = vadd.f32 %v2747, %v2749
        %2858 = vadd.xlane.f32.xlu0 %v2857
        %v2859 = vpop.xlane.xlu0 %2858
        %v2860 = vadd.f32 %v2751, %v2753
        %2861 = vadd.xlane.f32.xlu0 %v2860
        %v2862 = vpop.xlane.xlu0 %2861
        %v2863 = vadd.f32 %v2755, %v2757
        %2864 = vadd.xlane.f32.xlu0 %v2863
        %v2865 = vpop.xlane.xlu0 %2864
        %v2866 = vadd.f32 %v2759, %v2761
        %2867 = vadd.xlane.f32.xlu0 %v2866
        %v2868 = vpop.xlane.xlu0 %2867
        %v2869 = vadd.f32 %v2763, %v2765
        %2870 = vadd.xlane.f32.xlu0 %v2869
        %v2871 = vpop.xlane.xlu0 %2870
        %v2872 = vadd.f32 %v2767, %v2769
        %2873 = vadd.xlane.f32.xlu0 %v2872
        %v2874 = vpop.xlane.xlu0 %2873
        %v2875 = vadd.f32 %v2771, %v2773
        %2876 = vadd.xlane.f32.xlu0 %v2875
        %v2877 = vpop.xlane.xlu0 %2876
        %v2878 = vadd.f32 %v2775, %v2777
        %2879 = vadd.xlane.f32.xlu0 %v2878
        %v2880 = vpop.xlane.xlu0 %2879
        %v2881 = vadd.f32 %v2779, %v2781
        %2882 = vadd.xlane.f32.xlu0 %v2881
        %v2883 = vpop.xlane.xlu0 %2882
        %v2884 = vadd.f32 %v2783, %v2785
        %2885 = vadd.xlane.f32.xlu0 %v2884
        %v2886 = vpop.xlane.xlu0 %2885
        %v2887 = vadd.f32 %v2787, %v2789
        %2888 = vadd.xlane.f32.xlu0 %v2887
        %v2889 = vpop.xlane.xlu0 %2888
        %v2890 = vadd.f32 %v2791, %v2793
        %2891 = vadd.xlane.f32.xlu0 %v2890
        %v2892 = vpop.xlane.xlu0 %2891
        %v2893 = vadd.f32 %v2795, %v2797
        %2894 = vadd.xlane.f32.xlu0 %v2893
        %v2895 = vpop.xlane.xlu0 %2894
        %v2896 = vadd.f32 %v2799, %v2801
        %2897 = vadd.xlane.f32.xlu0 %v2896
        %v2898 = vpop.xlane.xlu0 %2897
        %v2899 = vadd.f32 %v2803, %v2805
        %2900 = vadd.xlane.f32.xlu0 %v2899
        %v2901 = vpop.xlane.xlu0 %2900
        %v2902 = vrcp.pop %v2808
        %v2903 = vrcp.pop %v2811
        %v2904 = vrcp.pop %v2814
        %v2905 = vrcp.pop %v2817
        %v2906 = vrcp.pop %v2820
        %v2907 = vrcp.pop %v2823
        %v2908 = vrcp.pop %v2826
        %v2909 = vrcp.pop %v2829
        %v2910 = vrcp.pop %v2832
        %v2911 = vrcp.pop %v2835
        %v2912 = vrcp.pop %v2838
        %v2913 = vrcp.pop %v2841
        %v2914 = vrcp.pop %v2844
        %v2915 = vrcp.pop %v2847
        %v2916 = vrcp.pop %v2850
        %v2917 = vrcp.pop %v2853
        %v2918 = vrcp.pop %v2856
        %v2919 = vrcp.pop %v2859
        %v2920 = vrcp.pop %v2862
        %v2921 = vrcp.pop %v2865
        %v2922 = vrcp.pop %v2868
        %v2923 = vrcp.pop %v2871
        %v2924 = vrcp.pop %v2874
        %v2925 = vrcp.pop %v2877
        %v2926 = vrcp.pop %v2880
        %v2927 = vrcp.pop %v2883
        %v2928 = vrcp.pop %v2886
        %v2929 = vrcp.pop %v2889
        %v2930 = vrcp.pop %v2892
        %v2931 = vrcp.pop %v2895
        %v2932 = vrcp.pop %v2898
        %v2933 = vrcp.pop %v2901
        %v2934 = vmul.f32 %v2679, %v2902
        %v2935 = vmul.f32 %v2681, %v2902
        %v2936 = vmul.f32 %v2683, %v2903
        %v2937 = vmul.f32 %v2685, %v2903
        %v2938 = vmul.f32 %v2687, %v2904
        %v2939 = vmul.f32 %v2689, %v2904
        %v2940 = vmul.f32 %v2691, %v2905
        %v2941 = vmul.f32 %v2693, %v2905
        %v2942 = vmul.f32 %v2695, %v2906
        %v2943 = vmul.f32 %v2697, %v2906
        %v2944 = vmul.f32 %v2699, %v2907
        %v2945 = vmul.f32 %v2701, %v2907
        %v2946 = vmul.f32 %v2703, %v2908
        %v2947 = vmul.f32 %v2705, %v2908
        %v2948 = vmul.f32 %v2707, %v2909
        %v2949 = vmul.f32 %v2709, %v2909
        %v2950 = vmul.f32 %v2711, %v2910
        %v2951 = vmul.f32 %v2713, %v2910
        %v2952 = vmul.f32 %v2715, %v2911
        %v2953 = vmul.f32 %v2717, %v2911
        %v2954 = vmul.f32 %v2719, %v2912
        %v2955 = vmul.f32 %v2721, %v2912
        %v2956 = vmul.f32 %v2723, %v2913
        %v2957 = vmul.f32 %v2725, %v2913
        %v2958 = vmul.f32 %v2727, %v2914
        %v2959 = vmul.f32 %v2729, %v2914
        %v2960 = vmul.f32 %v2731, %v2915
        %v2961 = vmul.f32 %v2733, %v2915
        %v2962 = vmul.f32 %v2735, %v2916
        %v2963 = vmul.f32 %v2737, %v2916
        %v2964 = vmul.f32 %v2739, %v2917
        %v2965 = vmul.f32 %v2741, %v2917
        %v2966 = vmul.f32 %v2743, %v2918
        %v2967 = vmul.f32 %v2745, %v2918
        %v2968 = vmul.f32 %v2747, %v2919
        %v2969 = vmul.f32 %v2749, %v2919
        %v2970 = vmul.f32 %v2751, %v2920
        %v2971 = vmul.f32 %v2753, %v2920
        %v2972 = vmul.f32 %v2755, %v2921
        %v2973 = vmul.f32 %v2757, %v2921
        %v2974 = vmul.f32 %v2759, %v2922
        %v2975 = vmul.f32 %v2761, %v2922
        %v2976 = vmul.f32 %v2763, %v2923
        %v2977 = vmul.f32 %v2765, %v2923
        %v2978 = vmul.f32 %v2767, %v2924
        %v2979 = vmul.f32 %v2769, %v2924
        %v2980 = vmul.f32 %v2771, %v2925
        %v2981 = vmul.f32 %v2773, %v2925
        %v2982 = vmul.f32 %v2775, %v2926
        %v2983 = vmul.f32 %v2777, %v2926
        %v2984 = vmul.f32 %v2779, %v2927
        %v2985 = vmul.f32 %v2781, %v2927
        %v2986 = vmul.f32 %v2783, %v2928
        %v2987 = vmul.f32 %v2785, %v2928
        %v2988 = vmul.f32 %v2787, %v2929
        %v2989 = vmul.f32 %v2789, %v2929
        %v2990 = vmul.f32 %v2791, %v2930
        %v2991 = vmul.f32 %v2793, %v2930
        %v2992 = vmul.f32 %v2795, %v2931
        %v2993 = vmul.f32 %v2797, %v2931
        %v2994 = vmul.f32 %v2799, %v2932
        %v2995 = vmul.f32 %v2801, %v2932
        %v2996 = vmul.f32 %v2803, %v2933
        %v2997 = vmul.f32 %v2805, %v2933
        %v2998 = vpack.c.bf16 %v2936, %v2934
        %v2999 = vpack.c.bf16 %v2937, %v2935
        %v3000 = vpack.c.bf16 %v2940, %v2938
        %v3001 = vpack.c.bf16 %v2941, %v2939
        %v3002 = vpack.c.bf16 %v2944, %v2942
        %v3003 = vpack.c.bf16 %v2945, %v2943
        %v3004 = vpack.c.bf16 %v2948, %v2946
        %v3005 = vpack.c.bf16 %v2949, %v2947
        %v3006 = vpack.c.bf16 %v2952, %v2950
        %v3007 = vpack.c.bf16 %v2953, %v2951
        %v3008 = vpack.c.bf16 %v2956, %v2954
        %v3009 = vpack.c.bf16 %v2957, %v2955
        %v3010 = vpack.c.bf16 %v2960, %v2958
        %v3011 = vpack.c.bf16 %v2961, %v2959
        %v3012 = vpack.c.bf16 %v2964, %v2962
        %v3013 = vpack.c.bf16 %v2965, %v2963
        %v3014 = vpack.c.bf16 %v2968, %v2966
        %v3015 = vpack.c.bf16 %v2969, %v2967
        %v3016 = vpack.c.bf16 %v2972, %v2970
        %v3017 = vpack.c.bf16 %v2973, %v2971
        %v3018 = vpack.c.bf16 %v2976, %v2974
        %v3019 = vpack.c.bf16 %v2977, %v2975
        %v3020 = vpack.c.bf16 %v2980, %v2978
        %v3021 = vpack.c.bf16 %v2981, %v2979
        %v3022 = vpack.c.bf16 %v2984, %v2982
        %v3023 = vpack.c.bf16 %v2985, %v2983
        %v3024 = vpack.c.bf16 %v2988, %v2986
        %v3025 = vpack.c.bf16 %v2989, %v2987
        %v3026 = vpack.c.bf16 %v2992, %v2990
        %v3027 = vpack.c.bf16 %v2993, %v2991
        %v3028 = vpack.c.bf16 %v2996, %v2994
        %v3029 = vpack.c.bf16 %v2997, %v2995
        %3030 = vmatprep.subr.bf16.mxu0 %v3013
        %3031 = vmatpush1.bf16.xpose.msra.mxu0 %v3012
        %3032 = vmatprep.subr.bf16.mxu0 %v3011
        %3033 = vmatpush1.bf16.xpose.msra.mxu0 %v3010
        %3034 = vmatprep.subr.bf16.mxu0 %v3009
        %3035 = vmatpush1.bf16.xpose.msra.mxu0 %v3008
        %3036 = vmatprep.subr.bf16.mxu0 %v3007
        %3037 = vmatpush1.bf16.xpose.msra.mxu0 %v3006
        %3038 = vmatprep.subr.bf16.mxu0 %v3005
        %3039 = vmatpush1.bf16.xpose.msra.mxu0 %v3004
        %3040 = vmatprep.subr.bf16.mxu0 %v3003
        %3041 = vmatpush1.bf16.xpose.msra.mxu0 %v3002
        %3042 = vmatprep.subr.bf16.mxu0 %v3001
        %3043 = vmatpush1.bf16.xpose.msra.mxu0 %v3000
        %3044 = vmatprep.subr.bf16.mxu0 %v2999
        %3045 = vmatpush1.bf16.xpose.msra.mxu0 %v2998
        %3046 = vmatprep.subr.bf16.mxu0 %v3029
        %3047 = vmatpush2.bf16.xpose.msra.mxu0 %v3028
        %3048 = vmatprep.subr.bf16.mxu0 %v3027
        %3049 = vmatpush2.bf16.xpose.msra.mxu0 %v3026
        %3050 = vmatprep.subr.bf16.mxu0 %v3025
        %3051 = vmatpush2.bf16.xpose.msra.mxu0 %v3024
        %3052 = vmatprep.subr.bf16.mxu0 %v3023
        %3053 = vmatpush2.bf16.xpose.msra.mxu0 %v3022
        %3054 = vmatprep.subr.bf16.mxu0 %v3021
        %3055 = vmatpush2.bf16.xpose.msra.mxu0 %v3020
        %3056 = vmatprep.subr.bf16.mxu0 %v3019
        %3057 = vmatpush2.bf16.xpose.msra.mxu0 %v3018
        %3058 = vmatprep.subr.bf16.mxu0 %v3017
        %3059 = vmatpush2.bf16.xpose.msra.mxu0 %v3016
        %3060 = vmatprep.subr.bf16.mxu0 %v3015
        %3061 = vmatpush2.bf16.xpose.msra.mxu0 %v3014
        %3062 = vmatprep.mubr.bf16.mxu0 %v2244
        %3063 = vmatmul.mubr.bf16.gmra.mxu0 %v2243
        %v3064 = vpop.f32.mrf.mxu0
        %v3065 = vadd.f32 0.0, %v3064
        %v3066 = vpop.f32.mrf.mxu0
        %v3067 = vadd.f32 0.0, %v3066
        %v3068 = vpop.f32.mrf.mxu0
        %v3069 = vadd.f32 0.0, %v3068
        %v3070 = vpop.f32.mrf.mxu0
        %v3071 = vadd.f32 0.0, %v3070
        %3072 = vdwg.mxu0
        %s3073 = scalar_lea.vmem %s10, 16
        %v3074 = vld [vmem:[%s3073] sm:$0xf]
        %v3075 = vld [vmem:[%s3073 + $0x4] sm:$0xf]
        %v3076 = vld [vmem:[%s3073 + $0x8] sm:$0xf]
        %v3077 = vld [vmem:[%s3073 + $0xc] sm:$0xf]
        %v3078 = vpack.c.bf16 %v3069, %v3065
        %v3079 = vpack.c.bf16 %v3071, %v3067
        %v3084 = vunpack.c.l.b16 %v3074
        %v3085 = vunpack.c.l.b16 %v3075
        %v3086 = vunpack.c.l.b16 %v3076
        %v3087 = vunpack.c.l.b16 %v3077
        %v3088 = vpack.c.b16 %v3085, %v3084
        %v3089 = vpack.c.b16 %v3087, %v3086
        %v3091 = vsel %vm1359, %v3088, 0
        %v3094 = vsel %vm1359, %v3089, 0
        %3096 = vmatprep.subr.bf16.mxu0 0
        %3097 = vmatpush1.bf16.msra.mxu0 0
        %3098 = vmatprep.subr.bf16.mxu0 0
        %3099 = vmatpush1.bf16.msra.mxu0 0
        %3100 = vmatprep.subr.bf16.mxu0 0
        %3101 = vmatpush1.bf16.msra.mxu0 0
        %3102 = vmatprep.subr.bf16.mxu0 0
        %3103 = vmatpush1.bf16.msra.mxu0 0
        %3104 = vmatprep.subr.bf16.mxu0 0
        %3105 = vmatpush1.bf16.msra.mxu0 0
        %3106 = vmatprep.subr.bf16.mxu0 0
        %3107 = vmatpush1.bf16.msra.mxu0 0
        %3108 = vmatprep.subr.bf16.mxu0 0
        %3109 = vmatpush1.bf16.msra.mxu0 0
        %3110 = vmatprep.subr.bf16.mxu0 %v3079
        %3111 = vmatpush1.bf16.msra.mxu0 %v3078
        %3112 = vmatprep.subr.bf16.mxu0 0
        %3113 = vmatpush2.bf16.msra.mxu0 0
        %3114 = vmatprep.subr.bf16.mxu0 0
        %3115 = vmatpush2.bf16.msra.mxu0 0
        %3116 = vmatprep.subr.bf16.mxu0 0
        %3117 = vmatpush2.bf16.msra.mxu0 0
        %3118 = vmatprep.subr.bf16.mxu0 0
        %3119 = vmatpush2.bf16.msra.mxu0 0
        %3120 = vmatprep.subr.bf16.mxu0 0
        %3121 = vmatpush2.bf16.msra.mxu0 0
        %3122 = vmatprep.subr.bf16.mxu0 0
        %3123 = vmatpush2.bf16.msra.mxu0 0
        %3124 = vmatprep.subr.bf16.mxu0 0
        %3125 = vmatpush2.bf16.msra.mxu0 0
        %3126 = vmatprep.subr.bf16.mxu0 0
        %3127 = vmatpush2.bf16.msra.mxu0 0
        %3128 = vmatprep.mubr.bf16.mxu0 0
        %3129 = vmatmul.mubr.bf16.gmra.mxu0 %v3091
        %v3130 = vpop.f32.mrf.mxu0
        %v3131 = vadd.f32 0.0, %v3130
        %v3132 = vpop.f32.mrf.mxu0
        %v3133 = vadd.f32 0.0, %v3132
        %v3134 = vpop.f32.mrf.mxu0
        %v3135 = vadd.f32 0.0, %v3134
        %v3136 = vpop.f32.mrf.mxu0
        %v3137 = vadd.f32 0.0, %v3136
        %3138 = vmatprep.mubr.bf16.mxu0 0
        %3139 = vmatmul.mubr.bf16.gmra.mxu0 %v3094
        %v3140 = vpop.f32.mrf.mxu0
        %v3141 = vadd.f32 0.0, %v3140
        %v3142 = vpop.f32.mrf.mxu0
        %v3143 = vadd.f32 0.0, %v3142
        %v3144 = vpop.f32.mrf.mxu0
        %v3145 = vadd.f32 0.0, %v3144
        %v3146 = vpop.f32.mrf.mxu0
        %v3147 = vadd.f32 0.0, %v3146
        %3148 = vdwg.mxu0
        %v3149 = vadd.f32 %v2231, %v3131
        %v3150 = vadd.f32 %v2232, %v3133
        %v3151 = vadd.f32 %v2233, %v3135
        %v3152 = vadd.f32 %v2234, %v3137
        %v3153 = vadd.f32 %v2235, %v3141
        %v3154 = vadd.f32 %v2236, %v3143
        %v3155 = vadd.f32 %v2237, %v3145
        %v3156 = vadd.f32 %v2238, %v3147
        %v3157 = vadd.f32 %v3149, %v3151
        %v3158 = vadd.f32 %v3157, %v3153
        %v3159 = vadd.f32 %v3158, %v3155
        %v3160 = vrot.slane %v3159, 4
        %v3161 = vadd.f32 %v3159, %v3160
        %v3162 = vrot.slane %v3161, 2
        %v3163 = vadd.f32 %v3161, %v3162
        %v3164 = vrot.slane %v3163, 1
        %v3165 = vadd.f32 %v3163, %v3164
        %v3166 = vadd.f32 %v3150, %v3152
        %v3167 = vadd.f32 %v3166, %v3154
        %v3168 = vadd.f32 %v3167, %v3156
        %v3169 = vrot.slane %v3168, 4
        %v3170 = vadd.f32 %v3168, %v3169
        %v3171 = vrot.slane %v3170, 2
        %v3172 = vadd.f32 %v3170, %v3171
        %v3173 = vrot.slane %v3172, 1
        %v3174 = vadd.f32 %v3172, %v3173
        %v3175 = vrcp.pop 32.0
        %v3176 = vmul.f32 %v3165, %v3175
        %v3177 = vmul.f32 %v3174, %v3175
        %v3178 = vsub.f32 %v3149, %v3176
        %v3179 = vsub.f32 %v3150, %v3177
        %v3180 = vsub.f32 %v3151, %v3176
        %v3181 = vsub.f32 %v3152, %v3177
        %v3182 = vsub.f32 %v3153, %v3176
        %v3183 = vsub.f32 %v3154, %v3177
        %v3184 = vsub.f32 %v3155, %v3176
        %v3185 = vsub.f32 %v3156, %v3177
        %v3186 = vmul.f32 %v3178, %v3178
        %v3187 = vmul.f32 %v3179, %v3179
        %v3188 = vmul.f32 %v3180, %v3180
        %v3189 = vmul.f32 %v3181, %v3181
        %v3190 = vmul.f32 %v3182, %v3182
        %v3191 = vmul.f32 %v3183, %v3183
        %v3192 = vmul.f32 %v3184, %v3184
        %v3193 = vmul.f32 %v3185, %v3185
        %v3194 = vadd.f32 %v3186, %v3188
        %v3195 = vadd.f32 %v3194, %v3190
        %v3196 = vadd.f32 %v3195, %v3192
        %v3197 = vrot.slane %v3196, 4
        %v3198 = vadd.f32 %v3196, %v3197
        %v3199 = vrot.slane %v3198, 2
        %v3200 = vadd.f32 %v3198, %v3199
        %v3201 = vrot.slane %v3200, 1
        %v3202 = vadd.f32 %v3200, %v3201
        %v3203 = vadd.f32 %v3187, %v3189
        %v3204 = vadd.f32 %v3203, %v3191
        %v3205 = vadd.f32 %v3204, %v3193
        %v3206 = vrot.slane %v3205, 4
        %v3207 = vadd.f32 %v3205, %v3206
        %v3208 = vrot.slane %v3207, 2
        %v3209 = vadd.f32 %v3207, %v3208
        %v3210 = vrot.slane %v3209, 1
        %v3211 = vadd.f32 %v3209, %v3210
        %v3212 = vmul.f32 %v3202, %v3175
        %v3213 = vmul.f32 %v3211, %v3175
        %v3214 = vadd.f32 %v3212, 1e-05
        %v3215 = vadd.f32 %v3213, 1e-05
        %v3216 = vrsqrt.pop %v3214
        %v3217 = vrsqrt.pop %v3215
        %v3218 = vmul.f32 %v3178, %v3216
        %v3219 = vmul.f32 %v3179, %v3217
        %v3220 = vmul.f32 %v3180, %v3216
        %v3221 = vmul.f32 %v3181, %v3217
        %v3222 = vmul.f32 %v3182, %v3216
        %v3223 = vmul.f32 %v3183, %v3217
        %v3224 = vmul.f32 %v3184, %v3216
        %v3225 = vmul.f32 %v3185, %v3217
        %3227 = vset.pattern.permute.xlu0 0
        %3228 = vperm.xlu0 %3227, %v615
        %v3229 = vpop.permute.xlu0 %3228
        %3232 = vset.pattern.permute.xlu0 0
        %3233 = vperm.xlu0 %3232, %v616
        %v3234 = vpop.permute.xlu0 %3233
        %3237 = vset.pattern.permute.xlu0 0
        %3238 = vperm.xlu0 %3237, %v617
        %v3239 = vpop.permute.xlu0 %3238
        %3242 = vset.pattern.permute.xlu0 0
        %3243 = vperm.xlu0 %3242, %v618
        %v3244 = vpop.permute.xlu0 %3243
        %v3246 = vmul.f32 %v3218, %v3229
        %v3247 = vmul.f32 %v3219, %v3229
        %v3248 = vmul.f32 %v3220, %v3234
        %v3249 = vmul.f32 %v3221, %v3234
        %v3250 = vmul.f32 %v3222, %v3239
        %v3251 = vmul.f32 %v3223, %v3239
        %v3252 = vmul.f32 %v3224, %v3244
        %v3253 = vmul.f32 %v3225, %v3244
        %3255 = vset.pattern.permute.xlu0 0
        %3256 = vperm.xlu0 %3255, %v619
        %v3257 = vpop.permute.xlu0 %3256
        %3260 = vset.pattern.permute.xlu0 0
        %3261 = vperm.xlu0 %3260, %v620
        %v3262 = vpop.permute.xlu0 %3261
        %3265 = vset.pattern.permute.xlu0 0
        %3266 = vperm.xlu0 %3265, %v621
        %v3267 = vpop.permute.xlu0 %3266
        %3270 = vset.pattern.permute.xlu0 0
        %3271 = vperm.xlu0 %3270, %v622
        %v3272 = vpop.permute.xlu0 %3271
        %v3274 = vadd.f32 %v3246, %v3257
        %v3275 = vadd.f32 %v3247, %v3257
        %v3276 = vadd.f32 %v3248, %v3262
        %v3277 = vadd.f32 %v3249, %v3262
        %v3278 = vadd.f32 %v3250, %v3267
        %v3279 = vadd.f32 %v3251, %v3267
        %v3280 = vadd.f32 %v3252, %v3272
        %v3281 = vadd.f32 %v3253, %v3272
        %v3282 = vpack.c.bf16 %v3276, %v3274
        %v3283 = vpack.c.bf16 %v3277, %v3275
        %v3284 = vpack.c.bf16 %v3280, %v3278
        %v3285 = vpack.c.bf16 %v3281, %v3279
        %3287 = vset.pattern.permute.xlu0 0
        %3288 = vperm.xlu0 %3287, %v655
        %v3289 = vpop.permute.xlu0 %3288
        %3292 = vset.pattern.permute.xlu0 0
        %3293 = vperm.xlu0 %3292, %v656
        %v3294 = vpop.permute.xlu0 %3293
        %3297 = vset.pattern.permute.xlu0 0
        %3298 = vperm.xlu0 %3297, %v657
        %v3299 = vpop.permute.xlu0 %3298
        %3302 = vset.pattern.permute.xlu0 0
        %3303 = vperm.xlu0 %3302, %v658
        %v3304 = vpop.permute.xlu0 %3303
        %3307 = vset.pattern.permute.xlu0 0
        %3308 = vperm.xlu0 %3307, %v659
        %v3309 = vpop.permute.xlu0 %3308
        %3312 = vset.pattern.permute.xlu0 0
        %3313 = vperm.xlu0 %3312, %v660
        %v3314 = vpop.permute.xlu0 %3313
        %3317 = vset.pattern.permute.xlu0 0
        %3318 = vperm.xlu0 %3317, %v661
        %v3319 = vpop.permute.xlu0 %3318
        %3322 = vset.pattern.permute.xlu0 0
        %3323 = vperm.xlu0 %3322, %v662
        %v3324 = vpop.permute.xlu0 %3323
        %3327 = vset.pattern.permute.xlu0 0
        %3328 = vperm.xlu0 %3327, %v663
        %v3329 = vpop.permute.xlu0 %3328
        %3332 = vset.pattern.permute.xlu0 0
        %3333 = vperm.xlu0 %3332, %v664
        %v3334 = vpop.permute.xlu0 %3333
        %3337 = vset.pattern.permute.xlu0 0
        %3338 = vperm.xlu0 %3337, %v665
        %v3339 = vpop.permute.xlu0 %3338
        %3342 = vset.pattern.permute.xlu0 0
        %3343 = vperm.xlu0 %3342, %v666
        %v3344 = vpop.permute.xlu0 %3343
        %3347 = vset.pattern.permute.xlu0 0
        %3348 = vperm.xlu0 %3347, %v667
        %v3349 = vpop.permute.xlu0 %3348
        %3352 = vset.pattern.permute.xlu0 0
        %3353 = vperm.xlu0 %3352, %v668
        %v3354 = vpop.permute.xlu0 %3353
        %3357 = vset.pattern.permute.xlu0 0
        %3358 = vperm.xlu0 %3357, %v669
        %v3359 = vpop.permute.xlu0 %3358
        %3362 = vset.pattern.permute.xlu0 0
        %3363 = vperm.xlu0 %3362, %v670
        %v3364 = vpop.permute.xlu0 %3363
        %3367 = vset.pattern.permute.xlu0 0
        %3368 = vperm.xlu0 %3367, %v671
        %v3369 = vpop.permute.xlu0 %3368
        %3372 = vset.pattern.permute.xlu0 0
        %3373 = vperm.xlu0 %3372, %v672
        %v3374 = vpop.permute.xlu0 %3373
        %3377 = vset.pattern.permute.xlu0 0
        %3378 = vperm.xlu0 %3377, %v673
        %v3379 = vpop.permute.xlu0 %3378
        %3382 = vset.pattern.permute.xlu0 0
        %3383 = vperm.xlu0 %3382, %v674
        %v3384 = vpop.permute.xlu0 %3383
        %3387 = vset.pattern.permute.xlu0 0
        %3388 = vperm.xlu0 %3387, %v675
        %v3389 = vpop.permute.xlu0 %3388
        %3392 = vset.pattern.permute.xlu0 0
        %3393 = vperm.xlu0 %3392, %v676
        %v3394 = vpop.permute.xlu0 %3393
        %3397 = vset.pattern.permute.xlu0 0
        %3398 = vperm.xlu0 %3397, %v677
        %v3399 = vpop.permute.xlu0 %3398
        %3402 = vset.pattern.permute.xlu0 0
        %3403 = vperm.xlu0 %3402, %v678
        %v3404 = vpop.permute.xlu0 %3403
        %3407 = vset.pattern.permute.xlu0 0
        %3408 = vperm.xlu0 %3407, %v679
        %v3409 = vpop.permute.xlu0 %3408
        %3412 = vset.pattern.permute.xlu0 0
        %3413 = vperm.xlu0 %3412, %v680
        %v3414 = vpop.permute.xlu0 %3413
        %3417 = vset.pattern.permute.xlu0 0
        %3418 = vperm.xlu0 %3417, %v681
        %v3419 = vpop.permute.xlu0 %3418
        %3422 = vset.pattern.permute.xlu0 0
        %3423 = vperm.xlu0 %3422, %v682
        %v3424 = vpop.permute.xlu0 %3423
        %3427 = vset.pattern.permute.xlu0 0
        %3428 = vperm.xlu0 %3427, %v683
        %v3429 = vpop.permute.xlu0 %3428
        %3432 = vset.pattern.permute.xlu0 0
        %3433 = vperm.xlu0 %3432, %v684
        %v3434 = vpop.permute.xlu0 %3433
        %3437 = vset.pattern.permute.xlu0 0
        %3438 = vperm.xlu0 %3437, %v685
        %v3439 = vpop.permute.xlu0 %3438
        %3442 = vset.pattern.permute.xlu0 0
        %3443 = vperm.xlu0 %3442, %v686
        %v3444 = vpop.permute.xlu0 %3443
        %v3478 = vunpack.c.l.b16 %v623
        %v3479 = vunpack.c.l.b16 %v624
        %v3480 = vunpack.c.l.b16 %v625
        %v3481 = vunpack.c.l.b16 %v626
        %v3482 = vunpack.c.l.b16 %v627
        %v3483 = vunpack.c.l.b16 %v628
        %v3484 = vunpack.c.l.b16 %v629
        %v3485 = vunpack.c.l.b16 %v630
        %v3486 = vunpack.c.l.b16 %v631
        %v3487 = vunpack.c.l.b16 %v632
        %v3488 = vunpack.c.l.b16 %v633
        %v3489 = vunpack.c.l.b16 %v634
        %v3490 = vunpack.c.l.b16 %v635
        %v3491 = vunpack.c.l.b16 %v636
        %v3492 = vunpack.c.l.b16 %v637
        %v3493 = vunpack.c.l.b16 %v638
        %v3494 = vunpack.c.l.b16 %v639
        %v3495 = vunpack.c.l.b16 %v640
        %v3496 = vunpack.c.l.b16 %v641
        %v3497 = vunpack.c.l.b16 %v642
        %v3498 = vunpack.c.l.b16 %v643
        %v3499 = vunpack.c.l.b16 %v644
        %v3500 = vunpack.c.l.b16 %v645
        %v3501 = vunpack.c.l.b16 %v646
        %v3502 = vunpack.c.l.b16 %v647
        %v3503 = vunpack.c.l.b16 %v648
        %v3504 = vunpack.c.l.b16 %v649
        %v3505 = vunpack.c.l.b16 %v650
        %v3506 = vunpack.c.l.b16 %v651
        %v3507 = vunpack.c.l.b16 %v652
        %v3508 = vunpack.c.l.b16 %v653
        %v3509 = vunpack.c.l.b16 %v654
        %v3510 = vpack.c.b16 %v3479, %v3478
        %v3511 = vpack.c.b16 %v3481, %v3480
        %v3512 = vpack.c.b16 %v3483, %v3482
        %v3513 = vpack.c.b16 %v3485, %v3484
        %v3514 = vpack.c.b16 %v3487, %v3486
        %v3515 = vpack.c.b16 %v3489, %v3488
        %v3516 = vpack.c.b16 %v3491, %v3490
        %v3517 = vpack.c.b16 %v3493, %v3492
        %v3518 = vpack.c.b16 %v3495, %v3494
        %v3519 = vpack.c.b16 %v3497, %v3496
        %v3520 = vpack.c.b16 %v3499, %v3498
        %v3521 = vpack.c.b16 %v3501, %v3500
        %v3522 = vpack.c.b16 %v3503, %v3502
        %v3523 = vpack.c.b16 %v3505, %v3504
        %v3524 = vpack.c.b16 %v3507, %v3506
        %v3525 = vpack.c.b16 %v3509, %v3508
        %v3527 = vsel %vm735, %v3510, 0
        %v3530 = vsel %vm735, %v3511, 0
        %v3533 = vsel %vm735, %v3512, 0
        %v3536 = vsel %vm735, %v3513, 0
        %v3539 = vsel %vm735, %v3514, 0
        %v3542 = vsel %vm735, %v3515, 0
        %v3545 = vsel %vm735, %v3516, 0
        %v3548 = vsel %vm735, %v3517, 0
        %v3551 = vsel %vm735, %v3518, 0
        %v3554 = vsel %vm735, %v3519, 0
        %v3557 = vsel %vm735, %v3520, 0
        %v3560 = vsel %vm735, %v3521, 0
        %v3563 = vsel %vm735, %v3522, 0
        %v3566 = vsel %vm735, %v3523, 0
        %v3569 = vsel %vm735, %v3524, 0
        %v3572 = vsel %vm735, %v3525, 0
        %3574 = vmatprep.subr.bf16.mxu0 0
        %3575 = vmatpush1.bf16.msra.mxu0 0
        %3576 = vmatprep.subr.bf16.mxu0 0
        %3577 = vmatpush1.bf16.msra.mxu0 0
        %3578 = vmatprep.subr.bf16.mxu0 0
        %3579 = vmatpush1.bf16.msra.mxu0 0
        %3580 = vmatprep.subr.bf16.mxu0 0
        %3581 = vmatpush1.bf16.msra.mxu0 0
        %3582 = vmatprep.subr.bf16.mxu0 0
        %3583 = vmatpush1.bf16.msra.mxu0 0
        %3584 = vmatprep.subr.bf16.mxu0 0
        %3585 = vmatpush1.bf16.msra.mxu0 0
        %3586 = vmatprep.subr.bf16.mxu0 %v3285
        %3587 = vmatpush1.bf16.msra.mxu0 %v3284
        %3588 = vmatprep.subr.bf16.mxu0 %v3283
        %3589 = vmatpush1.bf16.msra.mxu0 %v3282
        %3590 = vmatprep.subr.bf16.mxu0 0
        %3591 = vmatpush2.bf16.msra.mxu0 0
        %3592 = vmatprep.subr.bf16.mxu0 0
        %3593 = vmatpush2.bf16.msra.mxu0 0
        %3594 = vmatprep.subr.bf16.mxu0 0
        %3595 = vmatpush2.bf16.msra.mxu0 0
        %3596 = vmatprep.subr.bf16.mxu0 0
        %3597 = vmatpush2.bf16.msra.mxu0 0
        %3598 = vmatprep.subr.bf16.mxu0 0
        %3599 = vmatpush2.bf16.msra.mxu0 0
        %3600 = vmatprep.subr.bf16.mxu0 0
        %3601 = vmatpush2.bf16.msra.mxu0 0
        %3602 = vmatprep.subr.bf16.mxu0 0
        %3603 = vmatpush2.bf16.msra.mxu0 0
        %3604 = vmatprep.subr.bf16.mxu0 0
        %3605 = vmatpush2.bf16.msra.mxu0 0
        %3606 = vmatprep.mubr.bf16.mxu0 0
        %3607 = vmatmul.mubr.bf16.gmra.mxu0 %v3527
        %v3608 = vpop.f32.mrf.mxu0
        %v3609 = vadd.f32 %v3289, %v3608
        %v3610 = vpop.f32.mrf.mxu0
        %v3611 = vadd.f32 %v3289, %v3610
        %v3612 = vpop.f32.mrf.mxu0
        %v3613 = vadd.f32 %v3294, %v3612
        %v3614 = vpop.f32.mrf.mxu0
        %v3615 = vadd.f32 %v3294, %v3614
        %3616 = vmatprep.mubr.bf16.mxu0 0
        %3617 = vmatmul.mubr.bf16.gmra.mxu0 %v3530
        %v3618 = vpop.f32.mrf.mxu0
        %v3619 = vadd.f32 %v3299, %v3618
        %v3620 = vpop.f32.mrf.mxu0
        %v3621 = vadd.f32 %v3299, %v3620
        %v3622 = vpop.f32.mrf.mxu0
        %v3623 = vadd.f32 %v3304, %v3622
        %v3624 = vpop.f32.mrf.mxu0
        %v3625 = vadd.f32 %v3304, %v3624
        %3626 = vmatprep.mubr.bf16.mxu0 0
        %3627 = vmatmul.mubr.bf16.gmra.mxu0 %v3533
        %v3628 = vpop.f32.mrf.mxu0
        %v3629 = vadd.f32 %v3309, %v3628
        %v3630 = vpop.f32.mrf.mxu0
        %v3631 = vadd.f32 %v3309, %v3630
        %v3632 = vpop.f32.mrf.mxu0
        %v3633 = vadd.f32 %v3314, %v3632
        %v3634 = vpop.f32.mrf.mxu0
        %v3635 = vadd.f32 %v3314, %v3634
        %3636 = vmatprep.mubr.bf16.mxu0 0
        %3637 = vmatmul.mubr.bf16.gmra.mxu0 %v3536
        %v3638 = vpop.f32.mrf.mxu0
        %v3639 = vadd.f32 %v3319, %v3638
        %v3640 = vpop.f32.mrf.mxu0
        %v3641 = vadd.f32 %v3319, %v3640
        %v3642 = vpop.f32.mrf.mxu0
        %v3643 = vadd.f32 %v3324, %v3642
        %v3644 = vpop.f32.mrf.mxu0
        %v3645 = vadd.f32 %v3324, %v3644
        %3646 = vmatprep.mubr.bf16.mxu0 0
        %3647 = vmatmul.mubr.bf16.gmra.mxu0 %v3539
        %v3648 = vpop.f32.mrf.mxu0
        %v3649 = vadd.f32 %v3329, %v3648
        %v3650 = vpop.f32.mrf.mxu0
        %v3651 = vadd.f32 %v3329, %v3650
        %v3652 = vpop.f32.mrf.mxu0
        %v3653 = vadd.f32 %v3334, %v3652
        %v3654 = vpop.f32.mrf.mxu0
        %v3655 = vadd.f32 %v3334, %v3654
        %3656 = vmatprep.mubr.bf16.mxu0 0
        %3657 = vmatmul.mubr.bf16.gmra.mxu0 %v3542
        %v3658 = vpop.f32.mrf.mxu0
        %v3659 = vadd.f32 %v3339, %v3658
        %v3660 = vpop.f32.mrf.mxu0
        %v3661 = vadd.f32 %v3339, %v3660
        %v3662 = vpop.f32.mrf.mxu0
        %v3663 = vadd.f32 %v3344, %v3662
        %v3664 = vpop.f32.mrf.mxu0
        %v3665 = vadd.f32 %v3344, %v3664
        %3666 = vmatprep.mubr.bf16.mxu0 0
        %3667 = vmatmul.mubr.bf16.gmra.mxu0 %v3545
        %v3668 = vpop.f32.mrf.mxu0
        %v3669 = vadd.f32 %v3349, %v3668
        %v3670 = vpop.f32.mrf.mxu0
        %v3671 = vadd.f32 %v3349, %v3670
        %v3672 = vpop.f32.mrf.mxu0
        %v3673 = vadd.f32 %v3354, %v3672
        %v3674 = vpop.f32.mrf.mxu0
        %v3675 = vadd.f32 %v3354, %v3674
        %3676 = vmatprep.mubr.bf16.mxu0 0
        %3677 = vmatmul.mubr.bf16.gmra.mxu0 %v3548
        %v3678 = vpop.f32.mrf.mxu0
        %v3679 = vadd.f32 %v3359, %v3678
        %v3680 = vpop.f32.mrf.mxu0
        %v3681 = vadd.f32 %v3359, %v3680
        %v3682 = vpop.f32.mrf.mxu0
        %v3683 = vadd.f32 %v3364, %v3682
        %v3684 = vpop.f32.mrf.mxu0
        %v3685 = vadd.f32 %v3364, %v3684
        %3686 = vmatprep.mubr.bf16.mxu0 0
        %3687 = vmatmul.mubr.bf16.gmra.mxu0 %v3551
        %v3688 = vpop.f32.mrf.mxu0
        %v3689 = vadd.f32 %v3369, %v3688
        %v3690 = vpop.f32.mrf.mxu0
        %v3691 = vadd.f32 %v3369, %v3690
        %v3692 = vpop.f32.mrf.mxu0
        %v3693 = vadd.f32 %v3374, %v3692
        %v3694 = vpop.f32.mrf.mxu0
        %v3695 = vadd.f32 %v3374, %v3694
        %3696 = vmatprep.mubr.bf16.mxu0 0
        %3697 = vmatmul.mubr.bf16.gmra.mxu0 %v3554
        %v3698 = vpop.f32.mrf.mxu0
        %v3699 = vadd.f32 %v3379, %v3698
        %v3700 = vpop.f32.mrf.mxu0
        %v3701 = vadd.f32 %v3379, %v3700
        %v3702 = vpop.f32.mrf.mxu0
        %v3703 = vadd.f32 %v3384, %v3702
        %v3704 = vpop.f32.mrf.mxu0
        %v3705 = vadd.f32 %v3384, %v3704
        %3706 = vmatprep.mubr.bf16.mxu0 0
        %3707 = vmatmul.mubr.bf16.gmra.mxu0 %v3557
        %v3708 = vpop.f32.mrf.mxu0
        %v3709 = vadd.f32 %v3389, %v3708
        %v3710 = vpop.f32.mrf.mxu0
        %v3711 = vadd.f32 %v3389, %v3710
        %v3712 = vpop.f32.mrf.mxu0
        %v3713 = vadd.f32 %v3394, %v3712
        %v3714 = vpop.f32.mrf.mxu0
        %v3715 = vadd.f32 %v3394, %v3714
        %3716 = vmatprep.mubr.bf16.mxu0 0
        %3717 = vmatmul.mubr.bf16.gmra.mxu0 %v3560
        %v3718 = vpop.f32.mrf.mxu0
        %v3719 = vadd.f32 %v3399, %v3718
        %v3720 = vpop.f32.mrf.mxu0
        %v3721 = vadd.f32 %v3399, %v3720
        %v3722 = vpop.f32.mrf.mxu0
        %v3723 = vadd.f32 %v3404, %v3722
        %v3724 = vpop.f32.mrf.mxu0
        %v3725 = vadd.f32 %v3404, %v3724
        %3726 = vmatprep.mubr.bf16.mxu0 0
        %3727 = vmatmul.mubr.bf16.gmra.mxu0 %v3563
        %v3728 = vpop.f32.mrf.mxu0
        %v3729 = vadd.f32 %v3409, %v3728
        %v3730 = vpop.f32.mrf.mxu0
        %v3731 = vadd.f32 %v3409, %v3730
        %v3732 = vpop.f32.mrf.mxu0
        %v3733 = vadd.f32 %v3414, %v3732
        %v3734 = vpop.f32.mrf.mxu0
        %v3735 = vadd.f32 %v3414, %v3734
        %3736 = vmatprep.mubr.bf16.mxu0 0
        %3737 = vmatmul.mubr.bf16.gmra.mxu0 %v3566
        %v3738 = vpop.f32.mrf.mxu0
        %v3739 = vadd.f32 %v3419, %v3738
        %v3740 = vpop.f32.mrf.mxu0
        %v3741 = vadd.f32 %v3419, %v3740
        %v3742 = vpop.f32.mrf.mxu0
        %v3743 = vadd.f32 %v3424, %v3742
        %v3744 = vpop.f32.mrf.mxu0
        %v3745 = vadd.f32 %v3424, %v3744
        %3746 = vmatprep.mubr.bf16.mxu0 0
        %3747 = vmatmul.mubr.bf16.gmra.mxu0 %v3569
        %v3748 = vpop.f32.mrf.mxu0
        %v3749 = vadd.f32 %v3429, %v3748
        %v3750 = vpop.f32.mrf.mxu0
        %v3751 = vadd.f32 %v3429, %v3750
        %v3752 = vpop.f32.mrf.mxu0
        %v3753 = vadd.f32 %v3434, %v3752
        %v3754 = vpop.f32.mrf.mxu0
        %v3755 = vadd.f32 %v3434, %v3754
        %3756 = vmatprep.mubr.bf16.mxu0 0
        %3757 = vmatmul.mubr.bf16.gmra.mxu0 %v3572
        %v3758 = vpop.f32.mrf.mxu0
        %v3759 = vadd.f32 %v3439, %v3758
        %v3760 = vpop.f32.mrf.mxu0
        %v3761 = vadd.f32 %v3439, %v3760
        %v3762 = vpop.f32.mrf.mxu0
        %v3763 = vadd.f32 %v3444, %v3762
        %v3764 = vpop.f32.mrf.mxu0
        %v3765 = vadd.f32 %v3444, %v3764
        %3766 = vdwg.mxu0
        %v3767 = vmul.f32 %v3689, %v3689
        %v3768 = vmul.f32 %v3691, %v3691
        %v3769 = vmul.f32 %v3693, %v3693
        %v3770 = vmul.f32 %v3695, %v3695
        %v3771 = vmul.f32 %v3699, %v3699
        %v3772 = vmul.f32 %v3701, %v3701
        %v3773 = vmul.f32 %v3703, %v3703
        %v3774 = vmul.f32 %v3705, %v3705
        %v3775 = vmul.f32 %v3709, %v3709
        %v3776 = vmul.f32 %v3711, %v3711
        %v3777 = vmul.f32 %v3713, %v3713
        %v3778 = vmul.f32 %v3715, %v3715
        %v3779 = vmul.f32 %v3719, %v3719
        %v3780 = vmul.f32 %v3721, %v3721
        %v3781 = vmul.f32 %v3723, %v3723
        %v3782 = vmul.f32 %v3725, %v3725
        %v3783 = vmul.f32 %v3729, %v3729
        %v3784 = vmul.f32 %v3731, %v3731
        %v3785 = vmul.f32 %v3733, %v3733
        %v3786 = vmul.f32 %v3735, %v3735
        %v3787 = vmul.f32 %v3739, %v3739
        %v3788 = vmul.f32 %v3741, %v3741
        %v3789 = vmul.f32 %v3743, %v3743
        %v3790 = vmul.f32 %v3745, %v3745
        %v3791 = vmul.f32 %v3749, %v3749
        %v3792 = vmul.f32 %v3751, %v3751
        %v3793 = vmul.f32 %v3753, %v3753
        %v3794 = vmul.f32 %v3755, %v3755
        %v3795 = vmul.f32 %v3759, %v3759
        %v3796 = vmul.f32 %v3761, %v3761
        %v3797 = vmul.f32 %v3763, %v3763
        %v3798 = vmul.f32 %v3765, %v3765
        %v3799 = vmul.f32 %v3689, %v3767
        %v3800 = vmul.f32 %v3691, %v3768
        %v3801 = vmul.f32 %v3693, %v3769
        %v3802 = vmul.f32 %v3695, %v3770
        %v3803 = vmul.f32 %v3699, %v3771
        %v3804 = vmul.f32 %v3701, %v3772
        %v3805 = vmul.f32 %v3703, %v3773
        %v3806 = vmul.f32 %v3705, %v3774
        %v3807 = vmul.f32 %v3709, %v3775
        %v3808 = vmul.f32 %v3711, %v3776
        %v3809 = vmul.f32 %v3713, %v3777
        %v3810 = vmul.f32 %v3715, %v3778
        %v3811 = vmul.f32 %v3719, %v3779
        %v3812 = vmul.f32 %v3721, %v3780
        %v3813 = vmul.f32 %v3723, %v3781
        %v3814 = vmul.f32 %v3725, %v3782
        %v3815 = vmul.f32 %v3729, %v3783
        %v3816 = vmul.f32 %v3731, %v3784
        %v3817 = vmul.f32 %v3733, %v3785
        %v3818 = vmul.f32 %v3735, %v3786
        %v3819 = vmul.f32 %v3739, %v3787
        %v3820 = vmul.f32 %v3741, %v3788
        %v3821 = vmul.f32 %v3743, %v3789
        %v3822 = vmul.f32 %v3745, %v3790
        %v3823 = vmul.f32 %v3749, %v3791
        %v3824 = vmul.f32 %v3751, %v3792
        %v3825 = vmul.f32 %v3753, %v3793
        %v3826 = vmul.f32 %v3755, %v3794
        %v3827 = vmul.f32 %v3759, %v3795
        %v3828 = vmul.f32 %v3761, %v3796
        %v3829 = vmul.f32 %v3763, %v3797
        %v3830 = vmul.f32 %v3765, %v3798
        %v3831 = vmul.f32 %v3799, 0.044715
        %v3832 = vmul.f32 %v3800, 0.044715
        %v3833 = vmul.f32 %v3801, 0.044715
        %v3834 = vmul.f32 %v3802, 0.044715
        %v3835 = vmul.f32 %v3803, 0.044715
        %v3836 = vmul.f32 %v3804, 0.044715
        %v3837 = vmul.f32 %v3805, 0.044715
        %v3838 = vmul.f32 %v3806, 0.044715
        %v3839 = vmul.f32 %v3807, 0.044715
        %v3840 = vmul.f32 %v3808, 0.044715
        %v3841 = vmul.f32 %v3809, 0.044715
        %v3842 = vmul.f32 %v3810, 0.044715
        %v3843 = vmul.f32 %v3811, 0.044715
        %v3844 = vmul.f32 %v3812, 0.044715
        %v3845 = vmul.f32 %v3813, 0.044715
        %v3846 = vmul.f32 %v3814, 0.044715
        %v3847 = vmul.f32 %v3815, 0.044715
        %v3848 = vmul.f32 %v3816, 0.044715
        %v3849 = vmul.f32 %v3817, 0.044715
        %v3850 = vmul.f32 %v3818, 0.044715
        %v3851 = vmul.f32 %v3819, 0.044715
        %v3852 = vmul.f32 %v3820, 0.044715
        %v3853 = vmul.f32 %v3821, 0.044715
        %v3854 = vmul.f32 %v3822, 0.044715
        %v3855 = vmul.f32 %v3823, 0.044715
        %v3856 = vmul.f32 %v3824, 0.044715
        %v3857 = vmul.f32 %v3825, 0.044715
        %v3858 = vmul.f32 %v3826, 0.044715
        %v3859 = vmul.f32 %v3827, 0.044715
        %v3860 = vmul.f32 %v3828, 0.044715
        %v3861 = vmul.f32 %v3829, 0.044715
        %v3862 = vmul.f32 %v3830, 0.044715
        %v3863 = vadd.f32 %v3689, %v3831
        %v3864 = vadd.f32 %v3691, %v3832
        %v3865 = vadd.f32 %v3693, %v3833
        %v3866 = vadd.f32 %v3695, %v3834
        %v3867 = vadd.f32 %v3699, %v3835
        %v3868 = vadd.f32 %v3701, %v3836
        %v3869 = vadd.f32 %v3703, %v3837
        %v3870 = vadd.f32 %v3705, %v3838
        %v3871 = vadd.f32 %v3709, %v3839
        %v3872 = vadd.f32 %v3711, %v3840
        %v3873 = vadd.f32 %v3713, %v3841
        %v3874 = vadd.f32 %v3715, %v3842
        %v3875 = vadd.f32 %v3719, %v3843
        %v3876 = vadd.f32 %v3721, %v3844
        %v3877 = vadd.f32 %v3723, %v3845
        %v3878 = vadd.f32 %v3725, %v3846
        %v3879 = vadd.f32 %v3729, %v3847
        %v3880 = vadd.f32 %v3731, %v3848
        %v3881 = vadd.f32 %v3733, %v3849
        %v3882 = vadd.f32 %v3735, %v3850
        %v3883 = vadd.f32 %v3739, %v3851
        %v3884 = vadd.f32 %v3741, %v3852
        %v3885 = vadd.f32 %v3743, %v3853
        %v3886 = vadd.f32 %v3745, %v3854
        %v3887 = vadd.f32 %v3749, %v3855
        %v3888 = vadd.f32 %v3751, %v3856
        %v3889 = vadd.f32 %v3753, %v3857
        %v3890 = vadd.f32 %v3755, %v3858
        %v3891 = vadd.f32 %v3759, %v3859
        %v3892 = vadd.f32 %v3761, %v3860
        %v3893 = vadd.f32 %v3763, %v3861
        %v3894 = vadd.f32 %v3765, %v3862
        %v3895 = vmul.f32 %v3863, 0.7978846
        %v3896 = vmul.f32 %v3864, 0.7978846
        %v3897 = vmul.f32 %v3865, 0.7978846
        %v3898 = vmul.f32 %v3866, 0.7978846
        %v3899 = vmul.f32 %v3867, 0.7978846
        %v3900 = vmul.f32 %v3868, 0.7978846
        %v3901 = vmul.f32 %v3869, 0.7978846
        %v3902 = vmul.f32 %v3870, 0.7978846
        %v3903 = vmul.f32 %v3871, 0.7978846
        %v3904 = vmul.f32 %v3872, 0.7978846
        %v3905 = vmul.f32 %v3873, 0.7978846
        %v3906 = vmul.f32 %v3874, 0.7978846
        %v3907 = vmul.f32 %v3875, 0.7978846
        %v3908 = vmul.f32 %v3876, 0.7978846
        %v3909 = vmul.f32 %v3877, 0.7978846
        %v3910 = vmul.f32 %v3878, 0.7978846
        %v3911 = vmul.f32 %v3879, 0.7978846
        %v3912 = vmul.f32 %v3880, 0.7978846
        %v3913 = vmul.f32 %v3881, 0.7978846
        %v3914 = vmul.f32 %v3882, 0.7978846
        %v3915 = vmul.f32 %v3883, 0.7978846
        %v3916 = vmul.f32 %v3884, 0.7978846
        %v3917 = vmul.f32 %v3885, 0.7978846
        %v3918 = vmul.f32 %v3886, 0.7978846
        %v3919 = vmul.f32 %v3887, 0.7978846
        %v3920 = vmul.f32 %v3888, 0.7978846
        %v3921 = vmul.f32 %v3889, 0.7978846
        %v3922 = vmul.f32 %v3890, 0.7978846
        %v3923 = vmul.f32 %v3891, 0.7978846
        %v3924 = vmul.f32 %v3892, 0.7978846
        %v3925 = vmul.f32 %v3893, 0.7978846
        %v3926 = vmul.f32 %v3894, 0.7978846
        %v3927 = vtanh.pop %v3895
        %v3928 = vtanh.pop %v3896
        %v3929 = vtanh.pop %v3897
        %v3930 = vtanh.pop %v3898
        %v3931 = vtanh.pop %v3899
        %v3932 = vtanh.pop %v3900
        %v3933 = vtanh.pop %v3901
        %v3934 = vtanh.pop %v3902
        %v3935 = vtanh.pop %v3903
        %v3936 = vtanh.pop %v3904
        %v3937 = vtanh.pop %v3905
        %v3938 = vtanh.pop %v3906
        %v3939 = vtanh.pop %v3907
        %v3940 = vtanh.pop %v3908
        %v3941 = vtanh.pop %v3909
        %v3942 = vtanh.pop %v3910
        %v3943 = vtanh.pop %v3911
        %v3944 = vtanh.pop %v3912
        %v3945 = vtanh.pop %v3913
        %v3946 = vtanh.pop %v3914
        %v3947 = vtanh.pop %v3915
        %v3948 = vtanh.pop %v3916
        %v3949 = vtanh.pop %v3917
        %v3950 = vtanh.pop %v3918
        %v3951 = vtanh.pop %v3919
        %v3952 = vtanh.pop %v3920
        %v3953 = vtanh.pop %v3921
        %v3954 = vtanh.pop %v3922
        %v3955 = vtanh.pop %v3923
        %v3956 = vtanh.pop %v3924
        %v3957 = vtanh.pop %v3925
        %v3958 = vtanh.pop %v3926
        %v3959 = vadd.f32 %v3927, 1.0
        %v3960 = vadd.f32 %v3928, 1.0
        %v3961 = vadd.f32 %v3929, 1.0
        %v3962 = vadd.f32 %v3930, 1.0
        %v3963 = vadd.f32 %v3931, 1.0
        %v3964 = vadd.f32 %v3932, 1.0
        %v3965 = vadd.f32 %v3933, 1.0
        %v3966 = vadd.f32 %v3934, 1.0
        %v3967 = vadd.f32 %v3935, 1.0
        %v3968 = vadd.f32 %v3936, 1.0
        %v3969 = vadd.f32 %v3937, 1.0
        %v3970 = vadd.f32 %v3938, 1.0
        %v3971 = vadd.f32 %v3939, 1.0
        %v3972 = vadd.f32 %v3940, 1.0
        %v3973 = vadd.f32 %v3941, 1.0
        %v3974 = vadd.f32 %v3942, 1.0
        %v3975 = vadd.f32 %v3943, 1.0
        %v3976 = vadd.f32 %v3944, 1.0
        %v3977 = vadd.f32 %v3945, 1.0
        %v3978 = vadd.f32 %v3946, 1.0
        %v3979 = vadd.f32 %v3947, 1.0
        %v3980 = vadd.f32 %v3948, 1.0
        %v3981 = vadd.f32 %v3949, 1.0
        %v3982 = vadd.f32 %v3950, 1.0
        %v3983 = vadd.f32 %v3951, 1.0
        %v3984 = vadd.f32 %v3952, 1.0
        %v3985 = vadd.f32 %v3953, 1.0
        %v3986 = vadd.f32 %v3954, 1.0
        %v3987 = vadd.f32 %v3955, 1.0
        %v3988 = vadd.f32 %v3956, 1.0
        %v3989 = vadd.f32 %v3957, 1.0
        %v3990 = vadd.f32 %v3958, 1.0
        %v3991 = vmul.f32 %v3959, 0.5
        %v3992 = vmul.f32 %v3960, 0.5
        %v3993 = vmul.f32 %v3961, 0.5
        %v3994 = vmul.f32 %v3962, 0.5
        %v3995 = vmul.f32 %v3963, 0.5
        %v3996 = vmul.f32 %v3964, 0.5
        %v3997 = vmul.f32 %v3965, 0.5
        %v3998 = vmul.f32 %v3966, 0.5
        %v3999 = vmul.f32 %v3967, 0.5
        %v4000 = vmul.f32 %v3968, 0.5
        %v4001 = vmul.f32 %v3969, 0.5
        %v4002 = vmul.f32 %v3970, 0.5
        %v4003 = vmul.f32 %v3971, 0.5
        %v4004 = vmul.f32 %v3972, 0.5
        %v4005 = vmul.f32 %v3973, 0.5
        %v4006 = vmul.f32 %v3974, 0.5
        %v4007 = vmul.f32 %v3975, 0.5
        %v4008 = vmul.f32 %v3976, 0.5
        %v4009 = vmul.f32 %v3977, 0.5
        %v4010 = vmul.f32 %v3978, 0.5
        %v4011 = vmul.f32 %v3979, 0.5
        %v4012 = vmul.f32 %v3980, 0.5
        %v4013 = vmul.f32 %v3981, 0.5
        %v4014 = vmul.f32 %v3982, 0.5
        %v4015 = vmul.f32 %v3983, 0.5
        %v4016 = vmul.f32 %v3984, 0.5
        %v4017 = vmul.f32 %v3985, 0.5
        %v4018 = vmul.f32 %v3986, 0.5
        %v4019 = vmul.f32 %v3987, 0.5
        %v4020 = vmul.f32 %v3988, 0.5
        %v4021 = vmul.f32 %v3989, 0.5
        %v4022 = vmul.f32 %v3990, 0.5
        %v4023 = vmul.f32 %v3689, %v3991
        %v4024 = vmul.f32 %v3691, %v3992
        %v4025 = vmul.f32 %v3693, %v3993
        %v4026 = vmul.f32 %v3695, %v3994
        %v4027 = vmul.f32 %v3699, %v3995
        %v4028 = vmul.f32 %v3701, %v3996
        %v4029 = vmul.f32 %v3703, %v3997
        %v4030 = vmul.f32 %v3705, %v3998
        %v4031 = vmul.f32 %v3709, %v3999
        %v4032 = vmul.f32 %v3711, %v4000
        %v4033 = vmul.f32 %v3713, %v4001
        %v4034 = vmul.f32 %v3715, %v4002
        %v4035 = vmul.f32 %v3719, %v4003
        %v4036 = vmul.f32 %v3721, %v4004
        %v4037 = vmul.f32 %v3723, %v4005
        %v4038 = vmul.f32 %v3725, %v4006
        %v4039 = vmul.f32 %v3729, %v4007
        %v4040 = vmul.f32 %v3731, %v4008
        %v4041 = vmul.f32 %v3733, %v4009
        %v4042 = vmul.f32 %v3735, %v4010
        %v4043 = vmul.f32 %v3739, %v4011
        %v4044 = vmul.f32 %v3741, %v4012
        %v4045 = vmul.f32 %v3743, %v4013
        %v4046 = vmul.f32 %v3745, %v4014
        %v4047 = vmul.f32 %v3749, %v4015
        %v4048 = vmul.f32 %v3751, %v4016
        %v4049 = vmul.f32 %v3753, %v4017
        %v4050 = vmul.f32 %v3755, %v4018
        %v4051 = vmul.f32 %v3759, %v4019
        %v4052 = vmul.f32 %v3761, %v4020
        %v4053 = vmul.f32 %v3763, %v4021
        %v4054 = vmul.f32 %v3765, %v4022
        %v4055 = vmul.f32 %v3609, %v4023
        %v4056 = vmul.f32 %v3611, %v4024
        %v4057 = vmul.f32 %v3613, %v4025
        %v4058 = vmul.f32 %v3615, %v4026
        %v4059 = vmul.f32 %v3619, %v4027
        %v4060 = vmul.f32 %v3621, %v4028
        %v4061 = vmul.f32 %v3623, %v4029
        %v4062 = vmul.f32 %v3625, %v4030
        %v4063 = vmul.f32 %v3629, %v4031
        %v4064 = vmul.f32 %v3631, %v4032
        %v4065 = vmul.f32 %v3633, %v4033
        %v4066 = vmul.f32 %v3635, %v4034
        %v4067 = vmul.f32 %v3639, %v4035
        %v4068 = vmul.f32 %v3641, %v4036
        %v4069 = vmul.f32 %v3643, %v4037
        %v4070 = vmul.f32 %v3645, %v4038
        %v4071 = vmul.f32 %v3649, %v4039
        %v4072 = vmul.f32 %v3651, %v4040
        %v4073 = vmul.f32 %v3653, %v4041
        %v4074 = vmul.f32 %v3655, %v4042
        %v4075 = vmul.f32 %v3659, %v4043
        %v4076 = vmul.f32 %v3661, %v4044
        %v4077 = vmul.f32 %v3663, %v4045
        %v4078 = vmul.f32 %v3665, %v4046
        %v4079 = vmul.f32 %v3669, %v4047
        %v4080 = vmul.f32 %v3671, %v4048
        %v4081 = vmul.f32 %v3673, %v4049
        %v4082 = vmul.f32 %v3675, %v4050
        %v4083 = vmul.f32 %v3679, %v4051
        %v4084 = vmul.f32 %v3681, %v4052
        %v4085 = vmul.f32 %v3683, %v4053
        %v4086 = vmul.f32 %v3685, %v4054
        %v4087 = vpack.c.bf16 %v4057, %v4055
        %v4088 = vpack.c.bf16 %v4058, %v4056
        %v4089 = vpack.c.bf16 %v4061, %v4059
        %v4090 = vpack.c.bf16 %v4062, %v4060
        %v4091 = vpack.c.bf16 %v4065, %v4063
        %v4092 = vpack.c.bf16 %v4066, %v4064
        %v4093 = vpack.c.bf16 %v4069, %v4067
        %v4094 = vpack.c.bf16 %v4070, %v4068
        %v4095 = vpack.c.bf16 %v4073, %v4071
        %v4096 = vpack.c.bf16 %v4074, %v4072
        %v4097 = vpack.c.bf16 %v4077, %v4075
        %v4098 = vpack.c.bf16 %v4078, %v4076
        %v4099 = vpack.c.bf16 %v4081, %v4079
        %v4100 = vpack.c.bf16 %v4082, %v4080
        %v4101 = vpack.c.bf16 %v4085, %v4083
        %v4102 = vpack.c.bf16 %v4086, %v4084
        %4104 = vset.pattern.permute.xlu0 0
        %4105 = vperm.xlu0 %4104, %v691
        %v4106 = vpop.permute.xlu0 %4105
        %4109 = vset.pattern.permute.xlu0 0
        %4110 = vperm.xlu0 %4109, %v692
        %v4111 = vpop.permute.xlu0 %4110
        %4114 = vset.pattern.permute.xlu0 0
        %4115 = vperm.xlu0 %4114, %v693
        %v4116 = vpop.permute.xlu0 %4115
        %4119 = vset.pattern.permute.xlu0 0
        %4120 = vperm.xlu0 %4119, %v694
        %v4121 = vpop.permute.xlu0 %4120
        %v4127 = vunpack.c.l.b16 %v687
        %v4128 = vunpack.c.l.b16 %v688
        %v4129 = vunpack.c.l.b16 %v689
        %v4130 = vunpack.c.l.b16 %v690
        %v4131 = vpack.c.b16 %v4128, %v4127
        %v4132 = vpack.c.b16 %v4130, %v4129
        %4135 = vmatprep.subr.bf16.mxu0 %v4102
        %4136 = vmatpush1.bf16.msra.mxu0 %v4101
        %4137 = vmatprep.subr.bf16.mxu0 %v4100
        %4138 = vmatpush1.bf16.msra.mxu0 %v4099
        %4139 = vmatprep.subr.bf16.mxu0 %v4098
        %4140 = vmatpush1.bf16.msra.mxu0 %v4097
        %4141 = vmatprep.subr.bf16.mxu0 %v4096
        %4142 = vmatpush1.bf16.msra.mxu0 %v4095
        %4143 = vmatprep.subr.bf16.mxu0 %v4094
        %4144 = vmatpush1.bf16.msra.mxu0 %v4093
        %4145 = vmatprep.subr.bf16.mxu0 %v4092
        %4146 = vmatpush1.bf16.msra.mxu0 %v4091
        %4147 = vmatprep.subr.bf16.mxu0 %v4090
        %4148 = vmatpush1.bf16.msra.mxu0 %v4089
        %4149 = vmatprep.subr.bf16.mxu0 %v4088
        %4150 = vmatpush1.bf16.msra.mxu0 %v4087
        %4151 = vmatprep.subr.bf16.mxu0 0
        %4152 = vmatpush2.bf16.msra.mxu0 0
        %4153 = vmatprep.subr.bf16.mxu0 0
        %4154 = vmatpush2.bf16.msra.mxu0 0
        %4155 = vmatprep.subr.bf16.mxu0 0
        %4156 = vmatpush2.bf16.msra.mxu0 0
        %4157 = vmatprep.subr.bf16.mxu0 0
        %4158 = vmatpush2.bf16.msra.mxu0 0
        %4159 = vmatprep.subr.bf16.mxu0 0
        %4160 = vmatpush2.bf16.msra.mxu0 0
        %4161 = vmatprep.subr.bf16.mxu0 0
        %4162 = vmatpush2.bf16.msra.mxu0 0
        %4163 = vmatprep.subr.bf16.mxu0 0
        %4164 = vmatpush2.bf16.msra.mxu0 0
        %4165 = vmatprep.subr.bf16.mxu0 0
        %4166 = vmatpush2.bf16.msra.mxu0 0
        %4167 = vmatprep.mubr.bf16.mxu0 0
        %4168 = vmatmul.mubr.bf16.gmra.mxu0 %v4131
        %v4169 = vpop.f32.mrf.mxu0
        %v4170 = vadd.f32 %v4106, %v4169
        %v4171 = vpop.f32.mrf.mxu0
        %v4172 = vadd.f32 %v4106, %v4171
        %v4173 = vpop.f32.mrf.mxu0
        %v4174 = vadd.f32 %v4111, %v4173
        %v4175 = vpop.f32.mrf.mxu0
        %v4176 = vadd.f32 %v4111, %v4175
        %4177 = vmatprep.mubr.bf16.mxu0 0
        %4178 = vmatmul.mubr.bf16.gmra.mxu0 %v4132
        %v4179 = vpop.f32.mrf.mxu0
        %v4180 = vadd.f32 %v4116, %v4179
        %v4181 = vpop.f32.mrf.mxu0
        %v4182 = vadd.f32 %v4116, %v4181
        %v4183 = vpop.f32.mrf.mxu0
        %v4184 = vadd.f32 %v4121, %v4183
        %v4185 = vpop.f32.mrf.mxu0
        %v4186 = vadd.f32 %v4121, %v4185
        %4187 = vdwg.mxu0
        %v4188 = vadd.f32 %v4170, %v3149
        %v4189 = vadd.f32 %v4172, %v3150
        %v4190 = vadd.f32 %v4174, %v3151
        %v4191 = vadd.f32 %v4176, %v3152
        %v4192 = vadd.f32 %v4180, %v3153
        %v4193 = vadd.f32 %v4182, %v3154
        %v4194 = vadd.f32 %v4184, %v3155
        %v4195 = vadd.f32 %v4186, %v3156
        %4196 = vst [vmem:[%s568] sm:$0xff] %v4188
        %4197 = vst [vmem:[%s568 + $0x8] sm:$0xff] %v4189
        %4198 = vst [vmem:[%s568 + $0x10] sm:$0xff] %v4190
        %4199 = vst [vmem:[%s568 + $0x18] sm:$0xff] %v4191
        %4200 = vst [vmem:[%s568 + $0x20] sm:$0xff] %v4192
        %4201 = vst [vmem:[%s568 + $0x28] sm:$0xff] %v4193
        %4202 = vst [vmem:[%s568 + $0x30] sm:$0xff] %v4194
        %4203 = vst [vmem:[%s568 + $0x38] sm:$0xff] %v4195
        %s4204 = sand.u32 %s423, 1
        %s4205 = scalar_lea.sflag [#allocation3], %s4204
        %s4206 = sand.u32 %s423, 1
        %s4207 = smul.addr %s4206, 64
        %s4208 = scalar_lea.vmem [#allocation2], %s4207
        // Predicated region
        $region93: #{tpu_custom_call.1} parent=91 // pred_check
          %p4209 = pneg %p433
        $region94: #{tpu_custom_call.1} parent=91 // pred_check_branch
          %4211 = sbr.rel (%p4209) target = $region96
        $region95: #{tpu_custom_call.1} parent=91 // pred_region
          %s4213 = ssub.s32 1024, 1024
          %4214 = vsyncadd %s4205, %s4213
          %s4215 = smul.addr %s32, 8
          %s4216 = smul.addr %s4215, 128
          %s4217 = scalar_lea.hbm %s18, %s4216
          %s4218 = sshll.u32 %s4208, 4
          %s4219 = int_to_ptr.vmem [resolvable:$true] %s4218
          %4224 = dma.vmem_to_hbm [thread:$0]  %s4219, 1024, %s4217, %s4205, 256, 256, 16
        $region96: #{tpu_custom_call.1} parent=91 // pred_fallthru
          _
      $region92: #{tpu_custom_call.1} parent=5 // pred_fallthru
        _
      %p4225 = scmp.le.s32.totalorder 2, %s27
      // Predicated region
      $region97: #{tpu_custom_call.1} parent=5 // pred_check
        %p4226 = pneg %p4225
      $region98: #{tpu_custom_call.1} parent=5 // pred_check_branch
        %4228 = sbr.rel (%p4226) target = $region100
      $region99: #{tpu_custom_call.1} parent=5 // pred_region
        %s4229 = ssub.s32 %s27, 2
        // Predicated region
        $region101: #{tpu_custom_call.1} parent=99 // pred_check
          %p4230 = pneg %p439
        $region102: #{tpu_custom_call.1} parent=99 // pred_check_branch
          %4232 = sbr.rel (%p4230) target = $region104
        $region103: #{tpu_custom_call.1} parent=99 // pred_region
          %s4233 = sand.u32 %s424, 1
          %s4234 = scalar_lea.sflag [#allocation3], %s4233
          %s4235 = sand.u32 %s424, 1
          %s4236 = smul.addr %s4235, 64
          %s4237 = scalar_lea.vmem [#allocation2], %s4236
          %4238 = dma.done %s4234, 1024
        $region104: #{tpu_custom_call.1} parent=99 // pred_fallthru
          _
      $region100: #{tpu_custom_call.1} parent=5 // pred_fallthru
        _
    $region6: #{tpu_custom_call.1} parent=1 // loop_footer
      %s31 = sadd.s32 1, %s27
    $region7: #{tpu_custom_call.1} parent=1 // loop_footer_branch
      %26 = sbr.rel target = $region3
    $region8: #{tpu_custom_call.1} parent=1 // loop_exit
      _
    %4239 = vsyncpa [#allocation3], 1
    %s4240 = scalar_lea.sflag [#allocation3], 1
    %4241 = vsyncpa %s4240, 1

</llo_original>
